<compile_context>
chip_gen: v7x
topology: tpu7x:2x2x1
jax: 0.10.0
libtpu: 0.0.40
codegen_flags: <defaults>
</compile_context>

<pallas_src>
import math
import functools

import jax
import jax.numpy as jnp
from jax.experimental import pallas as pl
from jax.experimental.pallas import tpu as pltpu


# ----------------------------- in-kernel helpers -----------------------------

def _layernorm(x, scale, shift, eps=1e-5):
    # PyTorch reference uses unbiased=False variance; keep statistics in f32.
    mean = jnp.mean(x, axis=-1, keepdims=True)
    var = jnp.mean((x - mean) ** 2, axis=-1, keepdims=True)
    return scale * ((x - mean) / jnp.sqrt(var + eps)) + shift


def _gelu(x):
    # Exact reproduction of the reference GELU (0.44715 cubic constant kept verbatim
    # from the provided PyTorch module).
    return 0.5 * x * (1.0 + jnp.tanh(math.sqrt(2.0 / math.pi) * (x + 0.44715 * x ** 3)))


# ----------------------- fused transformer-stack kernel -----------------------
# grid = (B, L): batch rows "parallel", layers "arbitrary".  Per-layer weights are
# stacked as (L, ...) arrays and selected by the layer index_map; the residual stream
# is carried across layers in a VMEM scratch.  The final LayerNorm is applied at the
# last layer and the normalized activations are emitted in bf16 for the LM head.

def _gpt_stack_kernel(
        x_ref,
        ln1s_ref, ln1b_ref, wqkv_ref, bqkv_ref, wo_ref, bo_ref,
        ln2s_ref, ln2b_ref, w1_ref, b1_ref, w2_ref, b2_ref,
        fins_ref, finb_ref,
        out_ref, res_ref,
        *, num_heads):
    l = pl.program_id(1)

    @pl.when(l == 0)
    def _():
        res_ref[...] = x_ref[0]                    # load embeddings into the residual

    x = res_ref[...]                               # (T, E) f32 residual stream
    T, E = x.shape
    hd = E // num_heads
    scale = 1.0 / math.sqrt(hd)

    # ---- norm1 (f32) + fused QKV projection (bf16 MXU, f32 accumulation) ----
    h = _layernorm(x, ln1s_ref[0], ln1b_ref[0])
    qkv = jnp.dot(h.astype(jnp.bfloat16), wqkv_ref[0],
                  preferred_element_type=jnp.float32) + bqkv_ref[0]        # (T, 3E)
    q, k, v = qkv[:, :E], qkv[:, E:2 * E], qkv[:, 2 * E:]

    # ---- batched multi-head attention (heads batched through one dot_general) ----
    def split_heads(t):                            # (T, E) -> (H, T, hd), bf16
        return jnp.transpose(t.reshape(T, num_heads, hd), (1, 0, 2)).astype(jnp.bfloat16)
    qh, kh, vh = split_heads(q), split_heads(k), split_heads(v)

    row = jax.lax.broadcasted_iota(jnp.int32, (T, T), 0)
    col = jax.lax.broadcasted_iota(jnp.int32, (T, T), 1)
    causal = (row >= col)[None]                    # (1, T, T)

    scores = jnp.einsum('hqd,hkd->hqk', qh, kh,
                        preferred_element_type=jnp.float32) * scale        # (H, T, T)
    scores = jnp.where(causal, scores, -1e30)      # finite so padded rows can't NaN
    m = jnp.max(scores, axis=-1, keepdims=True)
    p = jnp.exp(scores - m)
    denom = jnp.sum(p, axis=-1, keepdims=True)
    p = p * pl.reciprocal(denom, approx=True)      # EUP reciprocal, effectively free

    ctx = jnp.einsum('hqk,hkd->hqd', p.astype(jnp.bfloat16), vh,
                     preferred_element_type=jnp.float32)                   # (H, T, hd)
    ctx = jnp.transpose(ctx, (1, 0, 2)).reshape(T, E)

    attn = jnp.dot(ctx.astype(jnp.bfloat16), wo_ref[0],
                   preferred_element_type=jnp.float32) + bo_ref[0]
    x1 = attn + x                                  # dropout is identity at drop_rate=0

    # ---- norm2 + feed-forward: Linear(E,4E) -> GELU -> Linear(4E,E) ----
    h2 = _layernorm(x1, ln2s_ref[0], ln2b_ref[0])
    ff = jnp.dot(h2.astype(jnp.bfloat16), w1_ref[0],
                 preferred_element_type=jnp.float32) + b1_ref[0]
    ff = _gelu(ff)
    ff = jnp.dot(ff.astype(jnp.bfloat16), w2_ref[0],
                 preferred_element_type=jnp.float32) + b2_ref[0]
    x2 = ff + x1

    res_ref[...] = x2                              # carry residual to the next layer

    @pl.when(l == pl.num_programs(1) - 1)
    def _():                                       # final LayerNorm fused in here
        out_ref[...] = _layernorm(x2, fins_ref[...], finb_ref[...])[None].astype(out_ref.dtype)


def transformer_stack(x, p, num_heads):
    B, T, E = x.shape
    L = p["wqkv"].shape[0]
    H = p["w1"].shape[-1]
    NH = num_heads

    xmap = lambda b, l: (b, 0, 0)                  # activation / output blocks
    wmap = lambda b, l: (l, 0, 0)                  # stacked per-layer parameter blocks
    cmap = lambda b, l: (0, 0)                     # final-LN params (constant block)

    in_specs = [
        pl.BlockSpec((1, T, E), xmap),             # embeddings
        pl.BlockSpec((1, 1, E), wmap),             # ln1 scale
        pl.BlockSpec((1, 1, E), wmap),             # ln1 shift
        pl.BlockSpec((1, E, 3 * E), wmap),         # W_qkv (fused)
        pl.BlockSpec((1, 1, 3 * E), wmap),         # b_qkv (fused)
        pl.BlockSpec((1, E, E), wmap),             # W_o
        pl.BlockSpec((1, 1, E), wmap),             # b_o
        pl.BlockSpec((1, 1, E), wmap),             # ln2 scale
        pl.BlockSpec((1, 1, E), wmap),             # ln2 shift
        pl.BlockSpec((1, E, H), wmap),             # ff W1
        pl.BlockSpec((1, 1, H), wmap),             # ff b1
        pl.BlockSpec((1, H, E), wmap),             # ff W2
        pl.BlockSpec((1, 1, E), wmap),             # ff b2
        pl.BlockSpec((1, E), cmap),                # final LN scale
        pl.BlockSpec((1, E), cmap),                # final LN shift
    ]

    flops = B * L * (2 * T * E * 3 * E             # fused QKV projection
                     + 2 * 2 * T * T * E           # scores + context
                     + 2 * T * E * E               # output projection
                     + 4 * T * E * H)              # two FFN matmuls
    transcendentals = B * L * (NH * T * T + T * H)
    bytes_accessed = (B * T * E * 4 + B * T * E * 2
                      + B * L * ((3 * E * E + E * E + 2 * E * H) * 2
                                 + (3 * E + E + H + E) * 4 + 4 * E * 4)
                      + 2 * E * 4)

    return pl.pallas_call(
        functools.partial(_gpt_stack_kernel, num_heads=num_heads),
        out_shape=jax.ShapeDtypeStruct((B, T, E), jnp.bfloat16),
        grid=(B, L),
        in_specs=in_specs,
        out_specs=pl.BlockSpec((1, T, E), xmap),
        scratch_shapes=[pltpu.VMEM((T, E), jnp.float32)],   # residual stream accumulator
        compiler_params=pltpu.CompilerParams(
            dimension_semantics=("parallel", "arbitrary"),
            vmem_limit_bytes=48 * 1024 * 1024),
        cost_estimate=pl.CostEstimate(flops=int(flops),
                                      transcendentals=int(transcendentals),
                                      bytes_accessed=int(bytes_accessed)),
    )(x,
      p["ln1_s"], p["ln1_b"], p["wqkv"], p["bqkv"], p["wo"], p["bo"],
      p["ln2_s"], p["ln2_b"], p["w1"], p["b1"], p["w2"], p["b2"],
      p["fin_s"], p["fin_b"])


# -------------------------- vocab-tiled LM head kernel --------------------------

def _lm_head_kernel(x_ref, w_ref, out_ref):
    out_ref[...] = jnp.dot(x_ref[...], w_ref[...], preferred_element_type=jnp.float32)


def lm_head(xn, w_out, *, tile_m=256, tile_v=2048):
    M, E = xn.shape
    V = w_out.shape[1]
    tm = min(tile_m, M)
    tv = min(tile_v, V)
    assert M % tm == 0 and V % tv == 0, "LM head tiles must divide (M, V)"
    return pl.pallas_call(
        _lm_head_kernel,
        out_shape=jax.ShapeDtypeStruct((M, V), jnp.float32),
        grid=(M // tm, V // tv),
        in_specs=[pl.BlockSpec((tm, E), lambda i, j: (i, 0)),
                  pl.BlockSpec((E, tv), lambda i, j: (0, j))],
        out_specs=pl.BlockSpec((tm, tv), lambda i, j: (i, j)),
        compiler_params=pltpu.CompilerParams(
            dimension_semantics=("parallel", "parallel"),
            vmem_limit_bytes=48 * 1024 * 1024),
        cost_estimate=pl.CostEstimate(flops=int(2 * M * E * V),
                                      transcendentals=0,
                                      bytes_accessed=int(M * E * 2 + E * V * 2 + M * V * 4)),
    )(xn, w_out)


# ------------------------------- full GPT forward -------------------------------

def gpt_forward(ids, p, num_heads):
    B, T = ids.shape
    E = p["tok_emb"].shape[1]
    # Embedding gather + positional add handled by XLA (review option (b)): a per-token
    # Pallas grid is pure launch/DMA overhead.  drop_emb is identity (drop_rate = 0).
    x = p["tok_emb"][ids] + p["pos_emb"][:T][None]               # (B, T, E) f32
    xn = transformer_stack(x, p, num_heads)                      # (B, T, E) bf16, LN'd
    # tile_v=256 exercises vocab tiling at the toy vocab; use ~2048 (v5e/v6e) / ~1024
    # (v7x) for a real ~50k vocabulary.
    logits = lm_head(xn.reshape(B * T, E), p["w_out"], tile_v=256)
    return logits.reshape(B, T, -1)


# --------------------- one-time parameter preparation (no jit) -------------------

def prepare_params(tok_emb, pos_emb, blocks, fin_s, fin_b, w_out):
    """Stack per-layer params along a leading layer axis and fuse Q/K/V once, so no
    concatenation / restacking happens inside the jitted forward pass."""
    def stack(i):
        return jnp.stack([blk[i] for blk in blocks], axis=0)
    ln1_s, ln1_b = stack(0), stack(1)                            # (L, 1, E)
    wq, bq, wk, bk, wv, bv = (stack(i) for i in range(2, 8))
    wo, bo = stack(8), stack(9)
    ln2_s, ln2_b = stack(10), stack(11)
    w1, b1, w2, b2 = stack(12), stack(13), stack(14), stack(15)
    wqkv = jnp.concatenate([wq, wk, wv], axis=-1)                # (L, E, 3E) bf16
    bqkv = jnp.concatenate([bq, bk, bv], axis=-1)                # (L, 1, 3E) f32
    return dict(tok_emb=tok_emb, pos_emb=pos_emb,
                ln1_s=ln1_s, ln1_b=ln1_b, wqkv=wqkv, bqkv=bqkv, wo=wo, bo=bo,
                ln2_s=ln2_s, ln2_b=ln2_b, w1=w1, b1=b1, w2=w2, b2=b2,
                fin_s=fin_s, fin_b=fin_b, w_out=w_out)


# ----------------------------- pure-JAX f32 reference ---------------------------

def gpt_reference(ids, p, num_heads):
    B, T = ids.shape
    E = p["tok_emb"].shape[1]
    L = p["wqkv"].shape[0]
    hd = E // num_heads

    def ln(z, s, b):
        m = jnp.mean(z, -1, keepdims=True)
        v = jnp.mean((z - m) ** 2, -1, keepdims=True)
        return s * ((z - m) / jnp.sqrt(v + 1e-5)) + b

    x = p["tok_emb"][ids] + p["pos_emb"][:T][None]
    for l in range(L):
        wqkv = p["wqkv"][l].astype(jnp.float32)
        wo = p["wo"][l].astype(jnp.float32)
        w1 = p["w1"][l].astype(jnp.float32)
        w2 = p["w2"][l].astype(jnp.float32)
        h = ln(x, p["ln1_s"][l], p["ln1_b"][l])
        qkv = h @ wqkv + p["bqkv"][l]
        q, k, v = qkv[..., :E], qkv[..., E:2 * E], qkv[..., 2 * E:]

        def sh(t):
            return t.reshape(B, T, num_heads, hd).transpose(0, 2, 1, 3)
        qh, kh, vh = sh(q), sh(k), sh(v)
        scores = jnp.einsum('bhqd,bhkd->bhqk', qh, kh) / math.sqrt(hd)
        mask = jnp.tril(jnp.ones((T, T), bool))
        scores = jnp.where(mask, scores, -jnp.inf)
        pr = jax.nn.softmax(scores, axis=-1)
        ctx = jnp.einsum('bhqk,bhkd->bhqd', pr, vh).transpose(0, 2, 1, 3).reshape(B, T, E)
        x = ctx @ wo + p["bo"][l] + x
        h2 = ln(x, p["ln2_s"][l], p["ln2_b"][l])
        ff = h2 @ w1 + p["b1"][l]
        ff = 0.5 * ff * (1 + jnp.tanh(math.sqrt(2.0 / math.pi) * (ff + 0.44715 * ff ** 3)))
        x = ff @ w2 + p["b2"][l] + x
    return ln(x, p["fin_s"], p["fin_b"]) @ p["w_out"].astype(jnp.float32)


# ----------------------------------- main ---------------------------------------

if __name__ == "__main__":
    cfg = dict(vocab_size=512, context_lenght=16, emb_dim=256, n_heads=2,
               n_layers=2, drop_rate=0.0, qkv_bias=True)
    B = 2
    V, T, E = cfg["vocab_size"], cfg["context_lenght"], cfg["emb_dim"]
    NH, NL = cfg["n_heads"], cfg["n_layers"]
    H = 4 * E

    keys = iter(jax.random.split(jax.random.PRNGKey(0), 64))

    def nrm(shape, scale, dtype=jnp.float32):
        return (scale * jax.random.normal(next(keys), shape, jnp.float32)).astype(dtype)

    # Matmul weights stored as (in, out) in bf16; LN params / biases in f32.
    tok_emb = nrm((V, E), 0.5)
    pos_emb = nrm((T, E), 0.5)
    blocks = tuple(
        (
            1.0 + nrm((1, E), 0.1), nrm((1, E), 0.1),              # ln1 scale / shift
            nrm((E, E), 0.03, jnp.bfloat16), nrm((1, E), 0.03),    # W_q, b_q
            nrm((E, E), 0.03, jnp.bfloat16), nrm((1, E), 0.03),    # W_k, b_k
            nrm((E, E), 0.03, jnp.bfloat16), nrm((1, E), 0.03),    # W_v, b_v
            nrm((E, E), 0.03, jnp.bfloat16), nrm((1, E), 0.03),    # out_proj W, b
            1.0 + nrm((1, E), 0.1), nrm((1, E), 0.1),              # ln2 scale / shift
            nrm((E, H), 0.03, jnp.bfloat16), nrm((1, H), 0.03),    # ff W1, b1
            nrm((H, E), 0.03, jnp.bfloat16), nrm((1, E), 0.03),    # ff W2, b2
        )
        for _ in range(NL)
    )
    fin_s = 1.0 + nrm((1, E), 0.1)
    fin_b = nrm((1, E), 0.1)
    w_out = nrm((E, V), 0.03, jnp.bfloat16)                        # out_head (no bias)

    # One-time prep: stack layers + fuse QKV (outside jit, so never re-done per step).
    params = prepare_params(tok_emb, pos_emb, blocks, fin_s, fin_b, w_out)

    ids = jax.random.randint(next(keys), (B, T), 0, V, dtype=jnp.int32)

    run = jax.jit(lambda i, p: gpt_forward(i, p, NH))
    logits = jax.block_until_ready(run(ids, params))

    ref = gpt_reference(ids, params, NH)
    assert logits.shape == (B, T, V)
    assert jnp.all(jnp.isfinite(logits)), "non-finite logits"
    # bf16 MXU operands + bf16 head input + approx reciprocal vs f32 reference.
    assert jnp.allclose(logits, ref, rtol=5e-2, atol=5e-2), "mismatch vs reference"

    print("KERNEL_OK")
</pallas_src>

<mosaic_0001>
module attributes {stable_mosaic.version = 11 : i64} {
  func.func @_lm_head_kernel(%arg0: i32, %arg1: i32, %arg2: memref<32x256xbf16, #tpu.memory_space<vmem>>, %arg3: memref<256x256xbf16, #tpu.memory_space<vmem>>, %arg4: memref<32x256xf32, #tpu.memory_space<vmem>>) attributes {dimension_semantics = [#tpu.dimension_semantics<parallel>, #tpu.dimension_semantics<parallel>], iteration_bounds = array<i64: 1, 2>, scalar_prefetch = 0 : i64, scratch_operands = 0 : i64, tpu.core_type = #tpu.core_type<tc>, window_params = [{transform_indices = @transform_0, window_bounds = array<i64: 32, 256>}, {transform_indices = @transform_1, window_bounds = array<i64: 256, 256>}, {transform_indices = @transform_2, window_bounds = array<i64: 32, 256>}]} {
    %c0 = arith.constant 0 : index
    %c0_0 = arith.constant 0 : index
    %0 = vector.load %arg2[%c0, %c0_0] : memref<32x256xbf16, #tpu.memory_space<vmem>>, vector<32x256xbf16>
    %c0_1 = arith.constant 0 : index
    %c0_2 = arith.constant 0 : index
    %1 = vector.load %arg3[%c0_1, %c0_2] : memref<256x256xbf16, #tpu.memory_space<vmem>>, vector<256x256xbf16>
    %cst = arith.constant dense<0.000000e+00> : vector<32x256xf32>
    %2 = tpu.matmul %0, %1, %cst {dimension_numbers = #tpu.dot_dimension_numbers<[1], [0], [0], [1], [0, 0, 1, 1], [], []>} : vector<32x256xbf16>, vector<256x256xbf16>, vector<32x256xf32> -> vector<32x256xf32>
    %c0_3 = arith.constant 0 : index
    %c0_4 = arith.constant 0 : index
    %3 = vector.load %arg4[%c0_3, %c0_4] : memref<32x256xf32, #tpu.memory_space<vmem>>, vector<32x256xf32>
    tpu.vector_store %arg4[%c0_3, %c0_4], %2 {strides = array<i32>} : memref<32x256xf32, #tpu.memory_space<vmem>>, vector<32x256xf32>,
    return
  }
  func.func @transform_0(%arg0: i32, %arg1: i32) -> (i32, i32) {
    %c0_i32 = arith.constant 0 : i32
    %c0_i32_0 = arith.constant 0 : i32
    return %arg0, %c0_i32 : i32, i32
  }
  func.func @transform_1(%arg0: i32, %arg1: i32) -> (i32, i32) {
    %c0_i32 = arith.constant 0 : i32
    %c0_i32_0 = arith.constant 0 : i32
    return %c0_i32, %arg1 : i32, i32
  }
  func.func @transform_2(%arg0: i32, %arg1: i32) -> (i32, i32) {
    %c0_i32 = arith.constant 0 : i32
    return %arg0, %arg1 : i32, i32
  }
}

module attributes {stable_mosaic.version = 11 : i64} {
  func.func @_gpt_stack_kernel(%arg0: i32, %arg1: i32, %arg2: memref<1x16x256xf32, #tpu.memory_space<vmem>>, %arg3: memref<1x1x256xf32, #tpu.memory_space<vmem>>, %arg4: memref<1x1x256xf32, #tpu.memory_space<vmem>>, %arg5: memref<1x256x768xbf16, #tpu.memory_space<vmem>>, %arg6: memref<1x1x768xf32, #tpu.memory_space<vmem>>, %arg7: memref<1x256x256xbf16, #tpu.memory_space<vmem>>, %arg8: memref<1x1x256xf32, #tpu.memory_space<vmem>>, %arg9: memref<1x1x256xf32, #tpu.memory_space<vmem>>, %arg10: memref<1x1x256xf32, #tpu.memory_space<vmem>>, %arg11: memref<1x256x1024xbf16, #tpu.memory_space<vmem>>, %arg12: memref<1x1x1024xf32, #tpu.memory_space<vmem>>, %arg13: memref<1x1024x256xbf16, #tpu.memory_space<vmem>>, %arg14: memref<1x1x256xf32, #tpu.memory_space<vmem>>, %arg15: memref<1x256xf32, #tpu.memory_space<vmem>>, %arg16: memref<1x256xf32, #tpu.memory_space<vmem>>, %arg17: memref<1x16x256xbf16, #tpu.memory_space<vmem>>, %arg18: memref<16x256xf32, #tpu.memory_space<vmem>>) attributes {dimension_semantics = [#tpu.dimension_semantics<parallel>, #tpu.dimension_semantics<arbitrary>], iteration_bounds = array<i64: 2, 2>, scalar_prefetch = 0 : i64, scratch_operands = 1 : i64, tpu.core_type = #tpu.core_type<tc>, window_params = [{transform_indices = @transform_0, window_bounds = array<i64: 1, 16, 256>}, {transform_indices = @transform_1, window_bounds = array<i64: 1, 1, 256>}, {transform_indices = @transform_2, window_bounds = array<i64: 1, 1, 256>}, {transform_indices = @transform_3, window_bounds = array<i64: 1, 256, 768>}, {transform_indices = @transform_4, window_bounds = array<i64: 1, 1, 768>}, {transform_indices = @transform_5, window_bounds = array<i64: 1, 256, 256>}, {transform_indices = @transform_6, window_bounds = array<i64: 1, 1, 256>}, {transform_indices = @transform_7, window_bounds = array<i64: 1, 1, 256>}, {transform_indices = @transform_8, window_bounds = array<i64: 1, 1, 256>}, {transform_indices = @transform_9, window_bounds = array<i64: 1, 256, 1024>}, {transform_indices = @transform_10, window_bounds = array<i64: 1, 1, 1024>}, {transform_indices = @transform_11, window_bounds = array<i64: 1, 1024, 256>}, {transform_indices = @transform_12, window_bounds = array<i64: 1, 1, 256>}, {pipeline_mode = #tpu.pipeline_mode<synchronous>, transform_indices = @transform_13, window_bounds = array<i64: 1, 256>}, {pipeline_mode = #tpu.pipeline_mode<synchronous>, transform_indices = @transform_14, window_bounds = array<i64: 1, 256>}, {transform_indices = @transform_15, window_bounds = array<i64: 1, 16, 256>}]} {
    %c0_i32 = arith.constant 0 : i32
    %0 = arith.cmpi eq, %arg1, %c0_i32 : i32
    %1 = arith.extui %0 : i1 to i32
    %c0_i32_0 = arith.constant 0 : i32
    %2 = arith.cmpi ne, %1, %c0_i32_0 : i32
    scf.if %2 {
      %c0_64 = arith.constant 0 : index
      %c0_65 = arith.constant 0 : index
      %c0_66 = arith.constant 0 : index
      %144 = vector.load %arg2[%c0_64, %c0_65, %c0_66] : memref<1x16x256xf32, #tpu.memory_space<vmem>>, vector<1x16x256xf32>
      %145 = vector.shape_cast %144 : vector<1x16x256xf32> to vector<16x256xf32>
      %c0_67 = arith.constant 0 : index
      %c0_68 = arith.constant 0 : index
      %146 = vector.load %arg18[%c0_67, %c0_68] : memref<16x256xf32, #tpu.memory_space<vmem>>, vector<16x256xf32>
      tpu.vector_store %arg18[%c0_67, %c0_68], %145 {strides = array<i32>} : memref<16x256xf32, #tpu.memory_space<vmem>>, vector<16x256xf32>,
    } else {
    }
    %c0 = arith.constant 0 : index
    %c0_1 = arith.constant 0 : index
    %3 = vector.load %arg18[%c0, %c0_1] : memref<16x256xf32, #tpu.memory_space<vmem>>, vector<16x256xf32>
    %c0_2 = arith.constant 0 : index
    %c0_3 = arith.constant 0 : index
    %c0_4 = arith.constant 0 : index
    %4 = vector.load %arg3[%c0_2, %c0_3, %c0_4] : memref<1x1x256xf32, #tpu.memory_space<vmem>>, vector<1x1x256xf32>
    %5 = vector.shape_cast %4 : vector<1x1x256xf32> to vector<1x256xf32>
    %c0_5 = arith.constant 0 : index
    %c0_6 = arith.constant 0 : index
    %c0_7 = arith.constant 0 : index
    %6 = vector.load %arg4[%c0_5, %c0_6, %c0_7] : memref<1x1x256xf32, #tpu.memory_space<vmem>>, vector<1x1x256xf32>
    %7 = vector.shape_cast %6 : vector<1x1x256xf32> to vector<1x256xf32>
    %cst = arith.constant dense<0.000000e+00> : vector<16xf32>
    %8 = vector.multi_reduction <add>, %3, %cst [1] : vector<16x256xf32> to vector<16xf32>
    %9 = vector.shape_cast %8 : vector<16xf32> to vector<16x1xf32>
    %cst_8 = arith.constant 2.560000e+02 : f32
    %10 = vector.broadcast %cst_8 : f32 to vector<16x1xf32>
    %11 = arith.divf %9, %10 : vector<16x1xf32>
    %12 = vector.broadcast %11 : vector<16x1xf32> to vector<16x256xf32>
    %13 = arith.subf %3, %12 : vector<16x256xf32>
    %14 = arith.mulf %13, %13 : vector<16x256xf32>
    %cst_9 = arith.constant dense<0.000000e+00> : vector<16xf32>
    %15 = vector.multi_reduction <add>, %14, %cst_9 [1] : vector<16x256xf32> to vector<16xf32>
    %16 = vector.shape_cast %15 : vector<16xf32> to vector<16x1xf32>
    %cst_10 = arith.constant 2.560000e+02 : f32
    %17 = vector.broadcast %cst_10 : f32 to vector<16x1xf32>
    %18 = arith.divf %16, %17 : vector<16x1xf32>
    %19 = vector.broadcast %11 : vector<16x1xf32> to vector<16x256xf32>
    %20 = arith.subf %3, %19 : vector<16x256xf32>
    %cst_11 = arith.constant 9.99999974E-6 : f32
    %21 = vector.broadcast %cst_11 : f32 to vector<16x1xf32>
    %22 = arith.addf %18, %21 : vector<16x1xf32>
    %23 = math.sqrt %22 : vector<16x1xf32>
    %24 = vector.broadcast %23 : vector<16x1xf32> to vector<16x256xf32>
    %25 = arith.divf %20, %24 : vector<16x256xf32>
    %26 = vector.broadcast %5 : vector<1x256xf32> to vector<16x256xf32>
    %27 = arith.mulf %26, %25 : vector<16x256xf32>
    %28 = vector.broadcast %7 : vector<1x256xf32> to vector<16x256xf32>
    %29 = arith.addf %27, %28 : vector<16x256xf32>
    %30 = arith.truncf %29 : vector<16x256xf32> to vector<16x256xbf16>
    %c0_12 = arith.constant 0 : index
    %c0_13 = arith.constant 0 : index
    %c0_14 = arith.constant 0 : index
    %31 = vector.load %arg5[%c0_12, %c0_13, %c0_14] : memref<1x256x768xbf16, #tpu.memory_space<vmem>>, vector<1x256x768xbf16>
    %32 = vector.shape_cast %31 : vector<1x256x768xbf16> to vector<256x768xbf16>
    %cst_15 = arith.constant dense<0.000000e+00> : vector<16x768xf32>
    %33 = tpu.matmul %30, %32, %cst_15 {dimension_numbers = #tpu.dot_dimension_numbers<[1], [0], [0], [1], [0, 0, 1, 1], [], []>} : vector<16x256xbf16>, vector<256x768xbf16>, vector<16x768xf32> -> vector<16x768xf32>
    %c0_16 = arith.constant 0 : index
    %c0_17 = arith.constant 0 : index
    %c0_18 = arith.constant 0 : index
    %34 = vector.load %arg6[%c0_16, %c0_17, %c0_18] : memref<1x1x768xf32, #tpu.memory_space<vmem>>, vector<1x1x768xf32>
    %35 = vector.shape_cast %34 : vector<1x1x768xf32> to vector<1x768xf32>
    %36 = vector.broadcast %35 : vector<1x768xf32> to vector<16x768xf32>
    %37 = arith.addf %33, %36 : vector<16x768xf32>
    %38 = vector.extract_strided_slice %37 {offsets = [0, 0], sizes = [16, 256], strides = [1, 1]} : vector<16x768xf32> to vector<16x256xf32>
    %39 = vector.extract_strided_slice %37 {offsets = [0, 256], sizes = [16, 256], strides = [1, 1]} : vector<16x768xf32> to vector<16x256xf32>
    %40 = vector.extract_strided_slice %37 {offsets = [0, 512], sizes = [16, 256], strides = [1, 1]} : vector<16x768xf32> to vector<16x256xf32>
    %41 = vector.shape_cast %38 : vector<16x256xf32> to vector<16x2x128xf32>
    %42 = tpu.transpose %41, [1, 0, 2] : vector<16x2x128xf32> -> vector<2x16x128xf32>
    %43 = arith.truncf %42 : vector<2x16x128xf32> to vector<2x16x128xbf16>
    %44 = vector.shape_cast %39 : vector<16x256xf32> to vector<16x2x128xf32>
    %45 = tpu.transpose %44, [1, 0, 2] : vector<16x2x128xf32> -> vector<2x16x128xf32>
    %46 = arith.truncf %45 : vector<2x16x128xf32> to vector<2x16x128xbf16>
    %47 = vector.shape_cast %40 : vector<16x256xf32> to vector<16x2x128xf32>
    %48 = tpu.transpose %47, [1, 0, 2] : vector<16x2x128xf32> -> vector<2x16x128xf32>
    %49 = arith.truncf %48 : vector<2x16x128xf32> to vector<2x16x128xbf16>
    %50 = tpu.iota {dimensions = array<i32: 0>} : vector<16x16xi32>
    %51 = tpu.iota {dimensions = array<i32: 1>} : vector<16x16xi32>
    %52 = arith.cmpi sge, %50, %51 : vector<16x16xi32>
    %53 = vector.shape_cast %52 : vector<16x16xi1> to vector<1x16x16xi1>
    "tpu.trace_start"() <{level = 10 : i32, message = "hqd,hkd->hqk"}> : () -> ()
    %cst_19 = arith.constant dense<0.000000e+00> : vector<2x16x16xf32>
    %54 = tpu.matmul %43, %46, %cst_19 {dimension_numbers = #tpu.dot_dimension_numbers<[2], [2], [1], [1], [0, 0, 0, 1, 1, 1], [0], [0]>} : vector<2x16x128xbf16>, vector<2x16x128xbf16>, vector<2x16x16xf32> -> vector<2x16x16xf32>
    "tpu.trace_stop"() : () -> ()
    %cst_20 = arith.constant 0.0883883461 : f32
    %55 = vector.broadcast %cst_20 : f32 to vector<2x16x16xf32>
    %56 = arith.mulf %54, %55 : vector<2x16x16xf32>
    %cst_21 = arith.constant -1.000000e+30 : f32
    %57 = vector.shape_cast %53 : vector<1x16x16xi1> to vector<1x16x16xi1>
    %58 = vector.broadcast %57 : vector<1x16x16xi1> to vector<2x16x16xi1>
    %59 = vector.broadcast %cst_21 : f32 to vector<2x16x16xf32>
    %60 = arith.select %58, %56, %59 : vector<2x16x16xi1>, vector<2x16x16xf32>
    %cst_22 = arith.constant dense<0xFF800000> : vector<2x16xf32>
    %61 = vector.multi_reduction <maximumf>, %60, %cst_22 [2] : vector<2x16x16xf32> to vector<2x16xf32>
    %62 = vector.shape_cast %61 : vector<2x16xf32> to vector<2x16x1xf32>
    %63 = vector.broadcast %62 : vector<2x16x1xf32> to vector<2x16x16xf32>
    %64 = arith.subf %60, %63 : vector<2x16x16xf32>
    %65 = math.exp %64 : vector<2x16x16xf32>
    %cst_23 = arith.constant dense<0.000000e+00> : vector<2x16xf32>
    %66 = vector.multi_reduction <add>, %65, %cst_23 [2] : vector<2x16x16xf32> to vector<2x16xf32>
    %67 = vector.shape_cast %66 : vector<2x16xf32> to vector<2x16x1xf32>
    %68 = tpu.reciprocal %67 {approx = true} : vector<2x16x1xf32> -> vector<2x16x1xf32>
    %69 = vector.broadcast %68 : vector<2x16x1xf32> to vector<2x16x16xf32>
    %70 = arith.mulf %65, %69 : vector<2x16x16xf32>
    %71 = arith.truncf %70 : vector<2x16x16xf32> to vector<2x16x16xbf16>
    "tpu.trace_start"() <{level = 10 : i32, message = "hqk,hkd->hqd"}> : () -> ()
    %cst_24 = arith.constant dense<0.000000e+00> : vector<2x16x128xf32>
    %72 = tpu.matmul %71, %49, %cst_24 {dimension_numbers = #tpu.dot_dimension_numbers<[2], [1], [1], [2], [0, 0, 0, 1, 1, 2], [0], [0]>} : vector<2x16x16xbf16>, vector<2x16x128xbf16>, vector<2x16x128xf32> -> vector<2x16x128xf32>
    "tpu.trace_stop"() : () -> ()
    %73 = tpu.transpose %72, [1, 0, 2] : vector<2x16x128xf32> -> vector<16x2x128xf32>
    %74 = vector.shape_cast %73 : vector<16x2x128xf32> to vector<16x256xf32>
    %75 = arith.truncf %74 : vector<16x256xf32> to vector<16x256xbf16>
    %c0_25 = arith.constant 0 : index
    %c0_26 = arith.constant 0 : index
    %c0_27 = arith.constant 0 : index
    %76 = vector.load %arg7[%c0_25, %c0_26, %c0_27] : memref<1x256x256xbf16, #tpu.memory_space<vmem>>, vector<1x256x256xbf16>
    %77 = vector.shape_cast %76 : vector<1x256x256xbf16> to vector<256x256xbf16>
    %cst_28 = arith.constant dense<0.000000e+00> : vector<16x256xf32>
    %78 = tpu.matmul %75, %77, %cst_28 {dimension_numbers = #tpu.dot_dimension_numbers<[1], [0], [0], [1], [0, 0, 1, 1], [], []>} : vector<16x256xbf16>, vector<256x256xbf16>, vector<16x256xf32> -> vector<16x256xf32>
    %c0_29 = arith.constant 0 : index
    %c0_30 = arith.constant 0 : index
    %c0_31 = arith.constant 0 : index
    %79 = vector.load %arg8[%c0_29, %c0_30, %c0_31] : memref<1x1x256xf32, #tpu.memory_space<vmem>>, vector<1x1x256xf32>
    %80 = vector.shape_cast %79 : vector<1x1x256xf32> to vector<1x256xf32>
    %81 = vector.broadcast %80 : vector<1x256xf32> to vector<16x256xf32>
    %82 = arith.addf %78, %81 : vector<16x256xf32>
    %83 = arith.addf %82, %3 : vector<16x256xf32>
    %c0_32 = arith.constant 0 : index
    %c0_33 = arith.constant 0 : index
    %c0_34 = arith.constant 0 : index
    %84 = vector.load %arg9[%c0_32, %c0_33, %c0_34] : memref<1x1x256xf32, #tpu.memory_space<vmem>>, vector<1x1x256xf32>
    %85 = vector.shape_cast %84 : vector<1x1x256xf32> to vector<1x256xf32>
    %c0_35 = arith.constant 0 : index
    %c0_36 = arith.constant 0 : index
    %c0_37 = arith.constant 0 : index
    %86 = vector.load %arg10[%c0_35, %c0_36, %c0_37] : memref<1x1x256xf32, #tpu.memory_space<vmem>>, vector<1x1x256xf32>
    %87 = vector.shape_cast %86 : vector<1x1x256xf32> to vector<1x256xf32>
    %cst_38 = arith.constant dense<0.000000e+00> : vector<16xf32>
    %88 = vector.multi_reduction <add>, %83, %cst_38 [1] : vector<16x256xf32> to vector<16xf32>
    %89 = vector.shape_cast %88 : vector<16xf32> to vector<16x1xf32>
    %cst_39 = arith.constant 2.560000e+02 : f32
    %90 = vector.broadcast %cst_39 : f32 to vector<16x1xf32>
    %91 = arith.divf %89, %90 : vector<16x1xf32>
    %92 = vector.broadcast %91 : vector<16x1xf32> to vector<16x256xf32>
    %93 = arith.subf %83, %92 : vector<16x256xf32>
    %94 = arith.mulf %93, %93 : vector<16x256xf32>
    %cst_40 = arith.constant dense<0.000000e+00> : vector<16xf32>
    %95 = vector.multi_reduction <add>, %94, %cst_40 [1] : vector<16x256xf32> to vector<16xf32>
    %96 = vector.shape_cast %95 : vector<16xf32> to vector<16x1xf32>
    %cst_41 = arith.constant 2.560000e+02 : f32
    %97 = vector.broadcast %cst_41 : f32 to vector<16x1xf32>
    %98 = arith.divf %96, %97 : vector<16x1xf32>
    %99 = vector.broadcast %91 : vector<16x1xf32> to vector<16x256xf32>
    %100 = arith.subf %83, %99 : vector<16x256xf32>
    %cst_42 = arith.constant 9.99999974E-6 : f32
    %101 = vector.broadcast %cst_42 : f32 to vector<16x1xf32>
    %102 = arith.addf %98, %101 : vector<16x1xf32>
    %103 = math.sqrt %102 : vector<16x1xf32>
    %104 = vector.broadcast %103 : vector<16x1xf32> to vector<16x256xf32>
    %105 = arith.divf %100, %104 : vector<16x256xf32>
    %106 = vector.broadcast %85 : vector<1x256xf32> to vector<16x256xf32>
    %107 = arith.mulf %106, %105 : vector<16x256xf32>
    %108 = vector.broadcast %87 : vector<1x256xf32> to vector<16x256xf32>
    %109 = arith.addf %107, %108 : vector<16x256xf32>
    %110 = arith.truncf %109 : vector<16x256xf32> to vector<16x256xbf16>
    %c0_43 = arith.constant 0 : index
    %c0_44 = arith.constant 0 : index
    %c0_45 = arith.constant 0 : index
    %111 = vector.load %arg11[%c0_43, %c0_44, %c0_45] : memref<1x256x1024xbf16, #tpu.memory_space<vmem>>, vector<1x256x1024xbf16>
    %112 = vector.shape_cast %111 : vector<1x256x1024xbf16> to vector<256x1024xbf16>
    %cst_46 = arith.constant dense<0.000000e+00> : vector<16x1024xf32>
    %113 = tpu.matmul %110, %112, %cst_46 {dimension_numbers = #tpu.dot_dimension_numbers<[1], [0], [0], [1], [0, 0, 1, 1], [], []>} : vector<16x256xbf16>, vector<256x1024xbf16>, vector<16x1024xf32> -> vector<16x1024xf32>
    %c0_47 = arith.constant 0 : index
    %c0_48 = arith.constant 0 : index
    %c0_49 = arith.constant 0 : index
    %114 = vector.load %arg12[%c0_47, %c0_48, %c0_49] : memref<1x1x1024xf32, #tpu.memory_space<vmem>>, vector<1x1x1024xf32>
    %115 = vector.shape_cast %114 : vector<1x1x1024xf32> to vector<1x1024xf32>
    %116 = vector.broadcast %115 : vector<1x1024xf32> to vector<16x1024xf32>
    %117 = arith.addf %113, %116 : vector<16x1024xf32>
    %cst_50 = arith.constant 5.000000e-01 : f32
    %118 = vector.broadcast %cst_50 : f32 to vector<16x1024xf32>
    %119 = arith.mulf %118, %117 : vector<16x1024xf32>
    %120 = arith.mulf %117, %117 : vector<16x1024xf32>
    %121 = arith.mulf %117, %120 : vector<16x1024xf32>
    %cst_51 = arith.constant 4.471500e-01 : f32
    %122 = vector.broadcast %cst_51 : f32 to vector<16x1024xf32>
    %123 = arith.mulf %122, %121 : vector<16x1024xf32>
    %124 = arith.addf %117, %123 : vector<16x1024xf32>
    %cst_52 = arith.constant 0.797884583 : f32
    %125 = vector.broadcast %cst_52 : f32 to vector<16x1024xf32>
    %126 = arith.mulf %125, %124 : vector<16x1024xf32>
    %127 = math.tanh %126 : vector<16x1024xf32>
    %cst_53 = arith.constant 1.000000e+00 : f32
    %128 = vector.broadcast %cst_53 : f32 to vector<16x1024xf32>
    %129 = arith.addf %128, %127 : vector<16x1024xf32>
    %130 = arith.mulf %119, %129 : vector<16x1024xf32>
    %131 = arith.truncf %130 : vector<16x1024xf32> to vector<16x1024xbf16>
    %c0_54 = arith.constant 0 : index
    %c0_55 = arith.constant 0 : index
    %c0_56 = arith.constant 0 : index
    %132 = vector.load %arg13[%c0_54, %c0_55, %c0_56] : memref<1x1024x256xbf16, #tpu.memory_space<vmem>>, vector<1x1024x256xbf16>
    %133 = vector.shape_cast %132 : vector<1x1024x256xbf16> to vector<1024x256xbf16>
    %cst_57 = arith.constant dense<0.000000e+00> : vector<16x256xf32>
    %134 = tpu.matmul %131, %133, %cst_57 {dimension_numbers = #tpu.dot_dimension_numbers<[1], [0], [0], [1], [0, 0, 1, 1], [], []>} : vector<16x1024xbf16>, vector<1024x256xbf16>, vector<16x256xf32> -> vector<16x256xf32>
    %c0_58 = arith.constant 0 : index
    %c0_59 = arith.constant 0 : index
    %c0_60 = arith.constant 0 : index
    %135 = vector.load %arg14[%c0_58, %c0_59, %c0_60] : memref<1x1x256xf32, #tpu.memory_space<vmem>>, vector<1x1x256xf32>
    %136 = vector.shape_cast %135 : vector<1x1x256xf32> to vector<1x256xf32>
    %137 = vector.broadcast %136 : vector<1x256xf32> to vector<16x256xf32>
    %138 = arith.addf %134, %137 : vector<16x256xf32>
    %139 = arith.addf %138, %83 : vector<16x256xf32>
    %c0_61 = arith.constant 0 : index
    %c0_62 = arith.constant 0 : index
    %140 = vector.load %arg18[%c0_61, %c0_62] : memref<16x256xf32, #tpu.memory_space<vmem>>, vector<16x256xf32>
    tpu.vector_store %arg18[%c0_61, %c0_62], %139 {strides = array<i32>} : memref<16x256xf32, #tpu.memory_space<vmem>>, vector<16x256xf32>,
    %c1_i32 = arith.constant 1 : i32
    %141 = arith.cmpi eq, %arg1, %c1_i32 : i32
    %142 = arith.extui %141 : i1 to i32
    %c0_i32_63 = arith.constant 0 : i32
    %143 = arith.cmpi ne, %142, %c0_i32_63 : i32
    scf.if %143 {
      %c0_64 = arith.constant 0 : index
      %c0_65 = arith.constant 0 : index
      %144 = vector.load %arg15[%c0_64, %c0_65] : memref<1x256xf32, #tpu.memory_space<vmem>>, vector<1x256xf32>
      %c0_66 = arith.constant 0 : index
      %c0_67 = arith.constant 0 : index
      %145 = vector.load %arg16[%c0_66, %c0_67] : memref<1x256xf32, #tpu.memory_space<vmem>>, vector<1x256xf32>
      %cst_68 = arith.constant dense<0.000000e+00> : vector<16xf32>
      %146 = vector.multi_reduction <add>, %139, %cst_68 [1] : vector<16x256xf32> to vector<16xf32>
      %147 = vector.shape_cast %146 : vector<16xf32> to vector<16x1xf32>
      %cst_69 = arith.constant 2.560000e+02 : f32
      %148 = vector.broadcast %cst_69 : f32 to vector<16x1xf32>
      %149 = arith.divf %147, %148 : vector<16x1xf32>
      %150 = vector.broadcast %149 : vector<16x1xf32> to vector<16x256xf32>
      %151 = arith.subf %139, %150 : vector<16x256xf32>
      %152 = arith.mulf %151, %151 : vector<16x256xf32>
      %cst_70 = arith.constant dense<0.000000e+00> : vector<16xf32>
      %153 = vector.multi_reduction <add>, %152, %cst_70 [1] : vector<16x256xf32> to vector<16xf32>
      %154 = vector.shape_cast %153 : vector<16xf32> to vector<16x1xf32>
      %cst_71 = arith.constant 2.560000e+02 : f32
      %155 = vector.broadcast %cst_71 : f32 to vector<16x1xf32>
      %156 = arith.divf %154, %155 : vector<16x1xf32>
      %157 = vector.broadcast %149 : vector<16x1xf32> to vector<16x256xf32>
      %158 = arith.subf %139, %157 : vector<16x256xf32>
      %cst_72 = arith.constant 9.99999974E-6 : f32
      %159 = vector.broadcast %cst_72 : f32 to vector<16x1xf32>
      %160 = arith.addf %156, %159 : vector<16x1xf32>
      %161 = math.sqrt %160 : vector<16x1xf32>
      %162 = vector.broadcast %161 : vector<16x1xf32> to vector<16x256xf32>
      %163 = arith.divf %158, %162 : vector<16x256xf32>
      %164 = vector.broadcast %144 : vector<1x256xf32> to vector<16x256xf32>
      %165 = arith.mulf %164, %163 : vector<16x256xf32>
      %166 = vector.broadcast %145 : vector<1x256xf32> to vector<16x256xf32>
      %167 = arith.addf %165, %166 : vector<16x256xf32>
      %168 = vector.shape_cast %167 : vector<16x256xf32> to vector<1x16x256xf32>
      %169 = arith.truncf %168 : vector<1x16x256xf32> to vector<1x16x256xbf16>
      %c0_73 = arith.constant 0 : index
      %c0_74 = arith.constant 0 : index
      %c0_75 = arith.constant 0 : index
      %170 = vector.load %arg17[%c0_73, %c0_74, %c0_75] : memref<1x16x256xbf16, #tpu.memory_space<vmem>>, vector<1x16x256xbf16>
      tpu.vector_store %arg17[%c0_73, %c0_74, %c0_75], %169 {strides = array<i32>} : memref<1x16x256xbf16, #tpu.memory_space<vmem>>, vector<1x16x256xbf16>,
    } else {
    }
    return
  }
  func.func @transform_0(%arg0: i32, %arg1: i32) -> (i32, i32, i32) {
    %c0_i32 = arith.constant 0 : i32
    %c0_i32_0 = arith.constant 0 : i32
    %c0_i32_1 = arith.constant 0 : i32
    return %arg0, %c0_i32, %c0_i32_0 : i32, i32, i32
  }
  func.func @transform_1(%arg0: i32, %arg1: i32) -> (i32, i32, i32) {
    %c0_i32 = arith.constant 0 : i32
    %c0_i32_0 = arith.constant 0 : i32
    %c0_i32_1 = arith.constant 0 : i32
    return %arg1, %c0_i32, %c0_i32_0 : i32, i32, i32
  }
  func.func @transform_2(%arg0: i32, %arg1: i32) -> (i32, i32, i32) {
    %c0_i32 = arith.constant 0 : i32
    %c0_i32_0 = arith.constant 0 : i32
    %c0_i32_1 = arith.constant 0 : i32
    return %arg1, %c0_i32, %c0_i32_0 : i32, i32, i32
  }
  func.func @transform_3(%arg0: i32, %arg1: i32) -> (i32, i32, i32) {
    %c0_i32 = arith.constant 0 : i32
    %c0_i32_0 = arith.constant 0 : i32
    %c0_i32_1 = arith.constant 0 : i32
    return %arg1, %c0_i32, %c0_i32_0 : i32, i32, i32
  }
  func.func @transform_4(%arg0: i32, %arg1: i32) -> (i32, i32, i32) {
    %c0_i32 = arith.constant 0 : i32
    %c0_i32_0 = arith.constant 0 : i32
    %c0_i32_1 = arith.constant 0 : i32
    return %arg1, %c0_i32, %c0_i32_0 : i32, i32, i32
  }
  func.func @transform_5(%arg0: i32, %arg1: i32) -> (i32, i32, i32) {
    %c0_i32 = arith.constant 0 : i32
    %c0_i32_0 = arith.constant 0 : i32
    %c0_i32_1 = arith.constant 0 : i32
    return %arg1, %c0_i32, %c0_i32_0 : i32, i32, i32
  }
  func.func @transform_6(%arg0: i32, %arg1: i32) -> (i32, i32, i32) {
    %c0_i32 = arith.constant 0 : i32
    %c0_i32_0 = arith.constant 0 : i32
    %c0_i32_1 = arith.constant 0 : i32
    return %arg1, %c0_i32, %c0_i32_0 : i32, i32, i32
  }
  func.func @transform_7(%arg0: i32, %arg1: i32) -> (i32, i32, i32) {
    %c0_i32 = arith.constant 0 : i32
    %c0_i32_0 = arith.constant 0 : i32
    %c0_i32_1 = arith.constant 0 : i32
    return %arg1, %c0_i32, %c0_i32_0 : i32, i32, i32
  }
  func.func @transform_8(%arg0: i32, %arg1: i32) -> (i32, i32, i32) {
    %c0_i32 = arith.constant 0 : i32
    %c0_i32_0 = arith.constant 0 : i32
    %c0_i32_1 = arith.constant 0 : i32
    return %arg1, %c0_i32, %c0_i32_0 : i32, i32, i32
  }
  func.func @transform_9(%arg0: i32, %arg1: i32) -> (i32, i32, i32) {
    %c0_i32 = arith.constant 0 : i32
    %c0_i32_0 = arith.constant 0 : i32
    %c0_i32_1 = arith.constant 0 : i32
    return %arg1, %c0_i32, %c0_i32_0 : i32, i32, i32
  }
  func.func @transform_10(%arg0: i32, %arg1: i32) -> (i32, i32, i32) {
    %c0_i32 = arith.constant 0 : i32
    %c0_i32_0 = arith.constant 0 : i32
    %c0_i32_1 = arith.constant 0 : i32
    return %arg1, %c0_i32, %c0_i32_0 : i32, i32, i32
  }
  func.func @transform_11(%arg0: i32, %arg1: i32) -> (i32, i32, i32) {
    %c0_i32 = arith.constant 0 : i32
    %c0_i32_0 = arith.constant 0 : i32
    %c0_i32_1 = arith.constant 0 : i32
    return %arg1, %c0_i32, %c0_i32_0 : i32, i32, i32
  }
  func.func @transform_12(%arg0: i32, %arg1: i32) -> (i32, i32, i32) {
    %c0_i32 = arith.constant 0 : i32
    %c0_i32_0 = arith.constant 0 : i32
    %c0_i32_1 = arith.constant 0 : i32
    return %arg1, %c0_i32, %c0_i32_0 : i32, i32, i32
  }
  func.func @transform_13(%arg0: i32, %arg1: i32) -> (i32, i32) {
    %c0_i32 = arith.constant 0 : i32
    %c0_i32_0 = arith.constant 0 : i32
    %c0_i32_1 = arith.constant 0 : i32
    return %c0_i32, %c0_i32_0 : i32, i32
  }
  func.func @transform_14(%arg0: i32, %arg1: i32) -> (i32, i32) {
    %c0_i32 = arith.constant 0 : i32
    %c0_i32_0 = arith.constant 0 : i32
    %c0_i32_1 = arith.constant 0 : i32
    return %c0_i32, %c0_i32_0 : i32, i32
  }
  func.func @transform_15(%arg0: i32, %arg1: i32) -> (i32, i32, i32) {
    %c0_i32 = arith.constant 0 : i32
    %c0_i32_0 = arith.constant 0 : i32
    %c0_i32_1 = arith.constant 0 : i32
    return %arg0, %c0_i32, %c0_i32_0 : i32, i32, i32
  }
}

</mosaic_0001>

<llo_original>
// kernel: _lambda_.3
$region0: #{_lambda_.3}
  #allocation0 [shape = 'u32[]', space=smem, size = 0x4, offset = 0x4, fixed_abs, tag = 'smem constant byte address 0x4 - core index']
  #allocation1 [shape = 'u32[144,128]{1,0:T(1,128)}', space=vmem, size = 0x12000, scoped, tag = 'internal scratch']
  %s0 = inlined_call_operand.vmem [shape: bf16[32,256], index: 0, kind: input, shape index: {}]
  %s1 = inlined_call_operand.vmem [shape: bf16[256,512], index: 1, kind: input, shape index: {}]
  %s2 = inlined_call_operand.hbm [shape: f32[32,512], index: 2, kind: output, shape index: {}]
  %s3 = sld [smem:[#allocation0]]
  $region79: #{_lambda_.3} parent=0
    _
  %s5 = ssub.s32 1, %s3
  %s6 = scalar_select 0, %s5, %s3
  $region1: #{_lambda_.3} parent=0
    #allocation2 [shape = 'u8[262144]{0}', space=vmem, size = 0x40000, scoped, tag = 'input window, operand 1']
    #allocation3 [shape = 'u8[65536]{0}', space=vmem, size = 0x10000, scoped, tag = 'output window, operand 0']
    #allocation4 [shape = 's32[2]{0}', space=sflag, size = 0x8, scoped, tag = 'scoped memory for _lambda_.3']
    %7 = vsyncpa [#allocation4], 0
    %s8 = scalar_lea.sflag [#allocation4], 1
    %9 = vsyncpa %s8, 0
    loop: start=0, step=1, limit=4
    $region2: #{_lambda_.3} parent=1 // loop_pre_header
      _
    $region3: #{_lambda_.3} parent=1 // loop_header
      %s11 = sphi 0, %s15
      %p12 = scmp.ge.s32.totalorder %s11, 4
      %s18 = sphi 0, %s30
      %s19 = sphi 0, %s26
      %s20 = sphi 0, %s18
      %s21 = sphi 0, %s19
      %s22 = sphi 0, %s20
      %s23 = sphi 0, %s21
      %s33 = sphi 0, %s35
      %s36 = sphi 0, %s33
      %s37 = sphi 0, %s36
      %s53 = sphi 0, %s37
      %s59 = sphi 0, %s61
      %s62 = sphi 0, %s59
      %s63 = sphi 0, %s62
      %s79 = sphi 0, %s63
      %s87 = sphi 0, %s89
      %s90 = sphi 0, %s87
      %s91 = sphi 0, %s90
      %s107 = sphi 0, %s91
    $region4: #{_lambda_.3} parent=1 // loop_header_branch
      %14 = sbr.rel (%p12) target = $region8
    $region5: #{_lambda_.3} parent=1 // loop_body
      %s16 = ssub.s32 %s11, 1
      %s17 = ssub.s32 %s11, 2
      %s24 = sadd.s32 1, %s19
      %p25 = scmp.ge.s32.totalorder %s24, 2
      %s26 = scalar_select %p25, 0, %s24
      %s27 = sadd.s32 1, %s18
      %s28 = scalar_select %p25, %s27, %s18
      %p29 = scmp.ge.s32.totalorder %s28, 1
      %s30 = scalar_select %p29, 0, %s28
      %s31 = ssub.s32 %s18, %s30
      %p32 = scmp.eq.s32.totalorder %s31, 0
      %s34 = sadd.s32 %s33, 1
      %s35 = scalar_select %p32, %s33, %s34
      %p38 = pneg %p32
      %p39 = scmp.eq.s32.totalorder %s11, 1
      %p40 = por %p38, %p39
      %p41 = scmp.ne.s32.totalorder %s33, %s36
      %p42 = scmp.eq.s32.totalorder %s11, 0
      %p43 = por %p41, %p42
      %p44 = scmp.ne.s32.totalorder %s33, %s36
      %p45 = scmp.eq.s32.totalorder %s16, 1
      %p46 = por %p44, %p45
      %p47 = scmp.ne.s32.totalorder %s36, %s37
      %p48 = scmp.eq.s32.totalorder %s16, 0
      %p49 = por %p47, %p48
      %p50 = scmp.ne.s32.totalorder %s36, %s37
      %p51 = scmp.eq.s32.totalorder %s17, 1
      %p52 = por %p50, %p51
      %p54 = scmp.ne.s32.totalorder %s37, %s53
      %p55 = scmp.eq.s32.totalorder %s17, 0
      %p56 = por %p54, %p55
      %s57 = ssub.s32 %s19, %s26
      %p58 = scmp.eq.s32.totalorder %s57, 0
      %s60 = sadd.s32 %s59, 1
      %s61 = scalar_select %p58, %s59, %s60
      %p64 = pneg %p58
      %p65 = scmp.eq.s32.totalorder %s11, 1
      %p66 = por %p64, %p65
      %p67 = scmp.ne.s32.totalorder %s59, %s62
      %p68 = scmp.eq.s32.totalorder %s11, 0
      %p69 = por %p67, %p68
      %p70 = scmp.ne.s32.totalorder %s59, %s62
      %p71 = scmp.eq.s32.totalorder %s16, 1
      %p72 = por %p70, %p71
      %p73 = scmp.ne.s32.totalorder %s62, %s63
      %p74 = scmp.eq.s32.totalorder %s16, 0
      %p75 = por %p73, %p74
      %p76 = scmp.ne.s32.totalorder %s62, %s63
      %p77 = scmp.eq.s32.totalorder %s17, 1
      %p78 = por %p76, %p77
      %p80 = scmp.ne.s32.totalorder %s63, %s79
      %p81 = scmp.eq.s32.totalorder %s17, 0
      %p82 = por %p80, %p81
      %s83 = ssub.s32 %s18, %s30
      %s84 = ssub.s32 %s19, %s26
      %s85 = sor.u32 %s83, %s84
      %p86 = scmp.eq.s32.totalorder %s85, 0
      %s88 = sadd.s32 %s87, 1
      %s89 = scalar_select %p86, %s87, %s88
      %p92 = pneg %p86
      %p93 = scmp.eq.s32.totalorder %s11, 1
      %p94 = por %p92, %p93
      %p95 = scmp.ne.s32.totalorder %s87, %s90
      %p96 = scmp.eq.s32.totalorder %s11, 0
      %p97 = por %p95, %p96
      %p98 = scmp.ne.s32.totalorder %s87, %s90
      %p99 = scmp.eq.s32.totalorder %s16, 1
      %p100 = por %p98, %p99
      %p101 = scmp.ne.s32.totalorder %s90, %s91
      %p102 = scmp.eq.s32.totalorder %s16, 0
      %p103 = por %p101, %p102
      %p104 = scmp.ne.s32.totalorder %s90, %s91
      %p105 = scmp.eq.s32.totalorder %s17, 1
      %p106 = por %p104, %p105
      %p108 = scmp.ne.s32.totalorder %s91, %s107
      %p109 = scmp.eq.s32.totalorder %s17, 0
      %p110 = por %p108, %p109
      %p111 = scmp.le.s32.totalorder 1, %s11
      %p112 = scmp.lt.s32.totalorder %s11, 3
      %p113 = pnand %p111, %p112
      %p114 = pneg %p113
      // Predicated region
      $region9: #{_lambda_.3} parent=5 // pred_check
        _
      $region10: #{_lambda_.3} parent=5 // pred_check_branch
        %116 = sbr.rel (%p113) target = $region12
      $region11: #{_lambda_.3} parent=5 // pred_region
        %s117 = ssub.s32 %s11, 1
        // Predicated region
        $region13: #{_lambda_.3} parent=11 // pred_check
          %p118 = pneg %p49
        $region14: #{_lambda_.3} parent=11 // pred_check_branch
          %120 = sbr.rel (%p118) target = $region16
        $region15: #{_lambda_.3} parent=11 // pred_region
          %s121 = smul.u32 4, %s20
          %p122 = scmp.lt.s32.totalorder %s121, 3
          %s123 = scalar_select %p122, %s121, 3
          %s124 = smul.addr %s123, 2
          %s125 = smul.addr %s124, 4
          %s126 = scalar_lea.vmem %s0, %s125
          %s127 = smul.u32 4, %s20
        $region16: #{_lambda_.3} parent=11 // pred_fallthru
          _
      $region12: #{_lambda_.3} parent=5 // pred_fallthru
        _
      %p128 = scmp.lt.s32.totalorder %s11, 2
      // Predicated region
      $region17: #{_lambda_.3} parent=5 // pred_check
        %p129 = pneg %p128
      $region18: #{_lambda_.3} parent=5 // pred_check_branch
        %131 = sbr.rel (%p129) target = $region20
      $region19: #{_lambda_.3} parent=5 // pred_region
        // Predicated region
        $region21: #{_lambda_.3} parent=19 // pred_check
          %p132 = pneg %p69
        $region22: #{_lambda_.3} parent=19 // pred_check_branch
          %134 = sbr.rel (%p132) target = $region24
        $region23: #{_lambda_.3} parent=19 // pred_region
          %s135 = sand.u32 %s59, 1
          %s136 = sand.u32 %s59, 1
          %s137 = smul.addr %s136, 256
          %s138 = scalar_lea.vmem [#allocation2], %s137
          %s139 = smul.u32 2, %s19
          %s140 = smul.addr %s139, 4
          %s141 = scalar_lea.vmem %s1, %s140
          // Predicated region
          $region25: #{_lambda_.3} parent=23 // pred_check
            _
          $region26: #{_lambda_.3} parent=23 // pred_check_branch
            %143 = sbr.rel (0) target = $region28
          $region27: #{_lambda_.3} parent=23 // pred_region
            // Predicated region
            $region29: #{_lambda_.3} parent=27 // pred_check
              _
            $region30: #{_lambda_.3} parent=27 // pred_check_branch
              %145 = sbr.rel (0) target = $region32
            $region31: #{_lambda_.3} parent=27 // pred_region
              // Predicated region
              $region44: #{_lambda_.3} parent=31 // pred_check
                _
              $region45: #{_lambda_.3} parent=31 // pred_check_branch
                %222 = sbr.rel (0) target = $region47
              $region46: #{_lambda_.3} parent=31 // pred_region
                loop: start=0, step=1, limit=1
                $region48: #{_lambda_.3} parent=46 // loop_pre_header
                  _
                $region49: #{_lambda_.3} parent=46 // loop_header
                  %s224 = sphi 0, %s228
                  %p225 = scmp.ge.s32.totalorder %s224, 1
                  %s229 = sphi %s141, %s141
                  %s230 = sphi %s138, %s138
                $region50: #{_lambda_.3} parent=46 // loop_header_branch
                  %227 = sbr.rel (%p225) target = $region54
                $region51: #{_lambda_.3} parent=46 // loop_body
                  %v231 = vld [vmem:[%s229] sm:$0xff]
                  %232 = vst [vmem:[%s230] sm:$0xff] %v231
                  %v233 = vld [vmem:[%s229 + $0x10] sm:$0xff]
                  %234 = vst [vmem:[%s230 + $0x8] sm:$0xff] %v233
                  %v235 = vld [vmem:[%s229 + $0x20] sm:$0xff]
                  %236 = vst [vmem:[%s230 + $0x10] sm:$0xff] %v235
                  %v237 = vld [vmem:[%s229 + $0x30] sm:$0xff]
                  %238 = vst [vmem:[%s230 + $0x18] sm:$0xff] %v237
                  %v239 = vld [vmem:[%s229 + $0x40] sm:$0xff]
                  %240 = vst [vmem:[%s230 + $0x20] sm:$0xff] %v239
                  %v241 = vld [vmem:[%s229 + $0x50] sm:$0xff]
                  %242 = vst [vmem:[%s230 + $0x28] sm:$0xff] %v241
                  %v243 = vld [vmem:[%s229 + $0x60] sm:$0xff]
                  %244 = vst [vmem:[%s230 + $0x30] sm:$0xff] %v243
                  %v245 = vld [vmem:[%s229 + $0x70] sm:$0xff]
                  %246 = vst [vmem:[%s230 + $0x38] sm:$0xff] %v245
                  %v247 = vld [vmem:[%s229 + $0x80] sm:$0xff]
                  %248 = vst [vmem:[%s230 + $0x40] sm:$0xff] %v247
                  %v249 = vld [vmem:[%s229 + $0x90] sm:$0xff]
                  %250 = vst [vmem:[%s230 + $0x48] sm:$0xff] %v249
                  %v251 = vld [vmem:[%s229 + $0xa0] sm:$0xff]
                  %252 = vst [vmem:[%s230 + $0x50] sm:$0xff] %v251
                  %v253 = vld [vmem:[%s229 + $0xb0] sm:$0xff]
                  %254 = vst [vmem:[%s230 + $0x58] sm:$0xff] %v253
                  %v255 = vld [vmem:[%s229 + $0xc0] sm:$0xff]
                  %256 = vst [vmem:[%s230 + $0x60] sm:$0xff] %v255
                  %v257 = vld [vmem:[%s229 + $0xd0] sm:$0xff]
                  %258 = vst [vmem:[%s230 + $0x68] sm:$0xff] %v257
                  %v259 = vld [vmem:[%s229 + $0xe0] sm:$0xff]
                  %260 = vst [vmem:[%s230 + $0x70] sm:$0xff] %v259
                  %v261 = vld [vmem:[%s229 + $0xf0] sm:$0xff]
                  %262 = vst [vmem:[%s230 + $0x78] sm:$0xff] %v261
                  %v263 = vld [vmem:[%s229 + $0x100] sm:$0xff]
                  %264 = vst [vmem:[%s230 + $0x80] sm:$0xff] %v263
                  %v265 = vld [vmem:[%s229 + $0x110] sm:$0xff]
                  %266 = vst [vmem:[%s230 + $0x88] sm:$0xff] %v265
                  %v267 = vld [vmem:[%s229 + $0x120] sm:$0xff]
                  %268 = vst [vmem:[%s230 + $0x90] sm:$0xff] %v267
                  %v269 = vld [vmem:[%s229 + $0x130] sm:$0xff]
                  %270 = vst [vmem:[%s230 + $0x98] sm:$0xff] %v269
                  %v271 = vld [vmem:[%s229 + $0x140] sm:$0xff]
                  %272 = vst [vmem:[%s230 + $0xa0] sm:$0xff] %v271
                  %v273 = vld [vmem:[%s229 + $0x150] sm:$0xff]
                  %274 = vst [vmem:[%s230 + $0xa8] sm:$0xff] %v273
                  %v275 = vld [vmem:[%s229 + $0x160] sm:$0xff]
                  %276 = vst [vmem:[%s230 + $0xb0] sm:$0xff] %v275
                  %v277 = vld [vmem:[%s229 + $0x170] sm:$0xff]
                  %278 = vst [vmem:[%s230 + $0xb8] sm:$0xff] %v277
                  %v279 = vld [vmem:[%s229 + $0x180] sm:$0xff]
                  %280 = vst [vmem:[%s230 + $0xc0] sm:$0xff] %v279
                  %v281 = vld [vmem:[%s229 + $0x190] sm:$0xff]
                  %282 = vst [vmem:[%s230 + $0xc8] sm:$0xff] %v281
                  %v283 = vld [vmem:[%s229 + $0x1a0] sm:$0xff]
                  %284 = vst [vmem:[%s230 + $0xd0] sm:$0xff] %v283
                  %v285 = vld [vmem:[%s229 + $0x1b0] sm:$0xff]
                  %286 = vst [vmem:[%s230 + $0xd8] sm:$0xff] %v285
                  %v287 = vld [vmem:[%s229 + $0x1c0] sm:$0xff]
                  %288 = vst [vmem:[%s230 + $0xe0] sm:$0xff] %v287
                  %v289 = vld [vmem:[%s229 + $0x1d0] sm:$0xff]
                  %290 = vst [vmem:[%s230 + $0xe8] sm:$0xff] %v289
                  %v291 = vld [vmem:[%s229 + $0x1e0] sm:$0xff]
                  %292 = vst [vmem:[%s230 + $0xf0] sm:$0xff] %v291
                  %v293 = vld [vmem:[%s229 + $0x1f0] sm:$0xff]
                  %294 = vst [vmem:[%s230 + $0xf8] sm:$0xff] %v293
                $region52: #{_lambda_.3} parent=46 // loop_footer
                  %s228 = sadd.s32 1, %s224
                $region53: #{_lambda_.3} parent=46 // loop_footer_branch
                  %223 = sbr.rel target = $region49
                $region54: #{_lambda_.3} parent=46 // loop_exit
                  _
              $region47: #{_lambda_.3} parent=31 // pred_fallthru
                _
              // Predicated region
              $region55: #{_lambda_.3} parent=31 // pred_check
                _
              $region56: #{_lambda_.3} parent=31 // pred_check_branch
                %296 = sbr.rel target = $region58
              $region57: #{_lambda_.3} parent=31 // pred_region
                _
              $region58: #{_lambda_.3} parent=31 // pred_fallthru
                _
            $region32: #{_lambda_.3} parent=27 // pred_fallthru
              _
            // Predicated region
            $region33: #{_lambda_.3} parent=27 // pred_check
              _
            $region34: #{_lambda_.3} parent=27 // pred_check_branch
              %147 = sbr.rel target = $region36
            $region35: #{_lambda_.3} parent=27 // pred_region
              loop: start=0, step=1, limit=1
              $region37: #{_lambda_.3} parent=35 // loop_pre_header
                _
              $region38: #{_lambda_.3} parent=35 // loop_header
                %s150 = sphi 0, %s154
                %p151 = scmp.ge.s32.totalorder %s150, 1
                %s155 = sphi %s141, %s141
                %s156 = sphi %s138, %s138
              $region39: #{_lambda_.3} parent=35 // loop_header_branch
                %153 = sbr.rel (%p151) target = $region43
              $region40: #{_lambda_.3} parent=35 // loop_body
                %v157 = vld [vmem:[%s155] sm:$0xff]
                %158 = vst [vmem:[%s156] sm:$0xff] %v157
                %v159 = vld [vmem:[%s155 + $0x10] sm:$0xff]
                %160 = vst [vmem:[%s156 + $0x8] sm:$0xff] %v159
                %v161 = vld [vmem:[%s155 + $0x20] sm:$0xff]
                %162 = vst [vmem:[%s156 + $0x10] sm:$0xff] %v161
                %v163 = vld [vmem:[%s155 + $0x30] sm:$0xff]
                %164 = vst [vmem:[%s156 + $0x18] sm:$0xff] %v163
                %v165 = vld [vmem:[%s155 + $0x40] sm:$0xff]
                %166 = vst [vmem:[%s156 + $0x20] sm:$0xff] %v165
                %v167 = vld [vmem:[%s155 + $0x50] sm:$0xff]
                %168 = vst [vmem:[%s156 + $0x28] sm:$0xff] %v167
                %v169 = vld [vmem:[%s155 + $0x60] sm:$0xff]
                %170 = vst [vmem:[%s156 + $0x30] sm:$0xff] %v169
                %v171 = vld [vmem:[%s155 + $0x70] sm:$0xff]
                %172 = vst [vmem:[%s156 + $0x38] sm:$0xff] %v171
                %v173 = vld [vmem:[%s155 + $0x80] sm:$0xff]
                %174 = vst [vmem:[%s156 + $0x40] sm:$0xff] %v173
                %v175 = vld [vmem:[%s155 + $0x90] sm:$0xff]
                %176 = vst [vmem:[%s156 + $0x48] sm:$0xff] %v175
                %v177 = vld [vmem:[%s155 + $0xa0] sm:$0xff]
                %178 = vst [vmem:[%s156 + $0x50] sm:$0xff] %v177
                %v179 = vld [vmem:[%s155 + $0xb0] sm:$0xff]
                %180 = vst [vmem:[%s156 + $0x58] sm:$0xff] %v179
                %v181 = vld [vmem:[%s155 + $0xc0] sm:$0xff]
                %182 = vst [vmem:[%s156 + $0x60] sm:$0xff] %v181
                %v183 = vld [vmem:[%s155 + $0xd0] sm:$0xff]
                %184 = vst [vmem:[%s156 + $0x68] sm:$0xff] %v183
                %v185 = vld [vmem:[%s155 + $0xe0] sm:$0xff]
                %186 = vst [vmem:[%s156 + $0x70] sm:$0xff] %v185
                %v187 = vld [vmem:[%s155 + $0xf0] sm:$0xff]
                %188 = vst [vmem:[%s156 + $0x78] sm:$0xff] %v187
                %v189 = vld [vmem:[%s155 + $0x100] sm:$0xff]
                %190 = vst [vmem:[%s156 + $0x80] sm:$0xff] %v189
                %v191 = vld [vmem:[%s155 + $0x110] sm:$0xff]
                %192 = vst [vmem:[%s156 + $0x88] sm:$0xff] %v191
                %v193 = vld [vmem:[%s155 + $0x120] sm:$0xff]
                %194 = vst [vmem:[%s156 + $0x90] sm:$0xff] %v193
                %v195 = vld [vmem:[%s155 + $0x130] sm:$0xff]
                %196 = vst [vmem:[%s156 + $0x98] sm:$0xff] %v195
                %v197 = vld [vmem:[%s155 + $0x140] sm:$0xff]
                %198 = vst [vmem:[%s156 + $0xa0] sm:$0xff] %v197
                %v199 = vld [vmem:[%s155 + $0x150] sm:$0xff]
                %200 = vst [vmem:[%s156 + $0xa8] sm:$0xff] %v199
                %v201 = vld [vmem:[%s155 + $0x160] sm:$0xff]
                %202 = vst [vmem:[%s156 + $0xb0] sm:$0xff] %v201
                %v203 = vld [vmem:[%s155 + $0x170] sm:$0xff]
                %204 = vst [vmem:[%s156 + $0xb8] sm:$0xff] %v203
                %v205 = vld [vmem:[%s155 + $0x180] sm:$0xff]
                %206 = vst [vmem:[%s156 + $0xc0] sm:$0xff] %v205
                %v207 = vld [vmem:[%s155 + $0x190] sm:$0xff]
                %208 = vst [vmem:[%s156 + $0xc8] sm:$0xff] %v207
                %v209 = vld [vmem:[%s155 + $0x1a0] sm:$0xff]
                %210 = vst [vmem:[%s156 + $0xd0] sm:$0xff] %v209
                %v211 = vld [vmem:[%s155 + $0x1b0] sm:$0xff]
                %212 = vst [vmem:[%s156 + $0xd8] sm:$0xff] %v211
                %v213 = vld [vmem:[%s155 + $0x1c0] sm:$0xff]
                %214 = vst [vmem:[%s156 + $0xe0] sm:$0xff] %v213
                %v215 = vld [vmem:[%s155 + $0x1d0] sm:$0xff]
                %216 = vst [vmem:[%s156 + $0xe8] sm:$0xff] %v215
                %v217 = vld [vmem:[%s155 + $0x1e0] sm:$0xff]
                %218 = vst [vmem:[%s156 + $0xf0] sm:$0xff] %v217
                %v219 = vld [vmem:[%s155 + $0x1f0] sm:$0xff]
                %220 = vst [vmem:[%s156 + $0xf8] sm:$0xff] %v219
              $region41: #{_lambda_.3} parent=35 // loop_footer
                %s154 = sadd.s32 1, %s150
              $region42: #{_lambda_.3} parent=35 // loop_footer_branch
                %149 = sbr.rel target = $region38
              $region43: #{_lambda_.3} parent=35 // loop_exit
                _
            $region36: #{_lambda_.3} parent=27 // pred_fallthru
              _
          $region28: #{_lambda_.3} parent=23 // pred_fallthru
            _
          %297 = vnop
        $region24: #{_lambda_.3} parent=19 // pred_fallthru
          _
      $region20: #{_lambda_.3} parent=5 // pred_fallthru
        _
      %p298 = scmp.le.s32.totalorder 1, %s11
      %p299 = scmp.lt.s32.totalorder %s11, 3
      %p300 = pnand %p298, %p299
      %p301 = pneg %p300
      // Predicated region
      $region59: #{_lambda_.3} parent=5 // pred_check
        _
      $region60: #{_lambda_.3} parent=5 // pred_check_branch
        %303 = sbr.rel (%p300) target = $region62
      $region61: #{_lambda_.3} parent=5 // pred_region
        %s304 = ssub.s32 %s11, 1
        %s305 = sand.u32 %s62, 1
        %s306 = sand.u32 %s62, 1
        %s307 = smul.addr %s306, 256
        %s308 = scalar_lea.vmem [#allocation2], %s307
        // Predicated region
        $region63: #{_lambda_.3} parent=61 // pred_check
          %p309 = pneg %p75
        $region64: #{_lambda_.3} parent=61 // pred_check_branch
          %311 = sbr.rel (%p309) target = $region66
        $region65: #{_lambda_.3} parent=61 // pred_region
          _
        $region66: #{_lambda_.3} parent=61 // pred_fallthru
          _
        %s312 = smul.u32 4, %s20
        %p313 = scmp.lt.s32.totalorder %s312, 3
        %s314 = scalar_select %p313, %s312, 3
        %s315 = smul.addr %s314, 2
        %s316 = smul.addr %s315, 4
        %s317 = scalar_lea.vmem %s0, %s316
        %p318 = pneg %p49
        %p319 = pneg %p46
        %s320 = sand.u32 %s62, 1
        %s321 = sand.u32 %s62, 1
        %s322 = smul.addr %s321, 256
        %s323 = scalar_lea.vmem [#allocation2], %s322
        %p324 = pneg %p75
        %p325 = pneg %p72
        %p326 = pneg %p103
        %p327 = pneg %p100
        %s328 = sand.u32 %s90, 1
        %s329 = scalar_lea.sflag [#allocation4], %s328
        %s330 = sand.u32 %s90, 1
        %s331 = smul.addr %s330, 64
        %s332 = scalar_lea.vmem [#allocation3], %s331
        %s333 = smul.u32 4, %s20
        %p334 = scmp.lt.s32.totalorder %s333, 3
        %s335 = scalar_select %p334, %s333, 3
        %s336 = smul.addr %s335, 2
        %s337 = smul.addr %s336, 4
        %s338 = scalar_lea.vmem %s0, %s337
        %s339 = smul.u32 4, %s20
        %s340 = smul.u32 2, %s21
        %s341 = smul.u32 4, %s20
        %s342 = smul.u32 2, %s21
        %v343 = vld [vmem:[%s338] sm:$0xff]
        %v344 = vld [vmem:[%s338 + $0x8] sm:$0xff]
        %v345 = vld [vmem:[%s338 + $0x10] sm:$0xff]
        %v346 = vld [vmem:[%s338 + $0x18] sm:$0xff]
        %v347 = vld [vmem:[%s308] sm:$0xff]
        %v348 = vld [vmem:[%s308 + $0x8] sm:$0xff]
        %v349 = vld [vmem:[%s308 + $0x10] sm:$0xff]
        %v350 = vld [vmem:[%s308 + $0x18] sm:$0xff]
        %v351 = vld [vmem:[%s308 + $0x20] sm:$0xff]
        %v352 = vld [vmem:[%s308 + $0x28] sm:$0xff]
        %v353 = vld [vmem:[%s308 + $0x30] sm:$0xff]
        %v354 = vld [vmem:[%s308 + $0x38] sm:$0xff]
        %v355 = vld [vmem:[%s308 + $0x40] sm:$0xff]
        %v356 = vld [vmem:[%s308 + $0x48] sm:$0xff]
        %v357 = vld [vmem:[%s308 + $0x50] sm:$0xff]
        %v358 = vld [vmem:[%s308 + $0x58] sm:$0xff]
        %v359 = vld [vmem:[%s308 + $0x60] sm:$0xff]
        %v360 = vld [vmem:[%s308 + $0x68] sm:$0xff]
        %v361 = vld [vmem:[%s308 + $0x70] sm:$0xff]
        %v362 = vld [vmem:[%s308 + $0x78] sm:$0xff]
        %v363 = vld [vmem:[%s308 + $0x80] sm:$0xff]
        %v364 = vld [vmem:[%s308 + $0x88] sm:$0xff]
        %v365 = vld [vmem:[%s308 + $0x90] sm:$0xff]
        %v366 = vld [vmem:[%s308 + $0x98] sm:$0xff]
        %v367 = vld [vmem:[%s308 + $0xa0] sm:$0xff]
        %v368 = vld [vmem:[%s308 + $0xa8] sm:$0xff]
        %v369 = vld [vmem:[%s308 + $0xb0] sm:$0xff]
        %v370 = vld [vmem:[%s308 + $0xb8] sm:$0xff]
        %v371 = vld [vmem:[%s308 + $0xc0] sm:$0xff]
        %v372 = vld [vmem:[%s308 + $0xc8] sm:$0xff]
        %v373 = vld [vmem:[%s308 + $0xd0] sm:$0xff]
        %v374 = vld [vmem:[%s308 + $0xd8] sm:$0xff]
        %v375 = vld [vmem:[%s308 + $0xe0] sm:$0xff]
        %v376 = vld [vmem:[%s308 + $0xe8] sm:$0xff]
        %v377 = vld [vmem:[%s308 + $0xf0] sm:$0xff]
        %v378 = vld [vmem:[%s308 + $0xf8] sm:$0xff]
        %v383 = vunpack.c.l.b16 %v343
        %v384 = vunpack.c.h.b16 %v343
        %v385 = vunpack.c.l.b16 %v344
        %v386 = vunpack.c.h.b16 %v344
        %v387 = vunpack.c.l.b16 %v345
        %v388 = vunpack.c.h.b16 %v345
        %v389 = vunpack.c.l.b16 %v346
        %v390 = vunpack.c.h.b16 %v346
        %v391 = vpack.c.b16 %v385, %v383
        %v392 = vpack.c.b16 %v386, %v384
        %v393 = vpack.c.b16 %v389, %v387
        %v394 = vpack.c.b16 %v390, %v388
        %v431 = vunpack.c.l.b16 %v347
        %v432 = vunpack.c.h.b16 %v347
        %v433 = vunpack.c.l.b16 %v348
        %v434 = vunpack.c.h.b16 %v348
        %v435 = vunpack.c.l.b16 %v349
        %v436 = vunpack.c.h.b16 %v349
        %v437 = vunpack.c.l.b16 %v350
        %v438 = vunpack.c.h.b16 %v350
        %v439 = vunpack.c.l.b16 %v351
        %v440 = vunpack.c.h.b16 %v351
        %v441 = vunpack.c.l.b16 %v352
        %v442 = vunpack.c.h.b16 %v352
        %v443 = vunpack.c.l.b16 %v353
        %v444 = vunpack.c.h.b16 %v353
        %v445 = vunpack.c.l.b16 %v354
        %v446 = vunpack.c.h.b16 %v354
        %v447 = vunpack.c.l.b16 %v355
        %v448 = vunpack.c.h.b16 %v355
        %v449 = vunpack.c.l.b16 %v356
        %v450 = vunpack.c.h.b16 %v356
        %v451 = vunpack.c.l.b16 %v357
        %v452 = vunpack.c.h.b16 %v357
        %v453 = vunpack.c.l.b16 %v358
        %v454 = vunpack.c.h.b16 %v358
        %v455 = vunpack.c.l.b16 %v359
        %v456 = vunpack.c.h.b16 %v359
        %v457 = vunpack.c.l.b16 %v360
        %v458 = vunpack.c.h.b16 %v360
        %v459 = vunpack.c.l.b16 %v361
        %v460 = vunpack.c.h.b16 %v361
        %v461 = vunpack.c.l.b16 %v362
        %v462 = vunpack.c.h.b16 %v362
        %v463 = vunpack.c.l.b16 %v363
        %v464 = vunpack.c.h.b16 %v363
        %v465 = vunpack.c.l.b16 %v364
        %v466 = vunpack.c.h.b16 %v364
        %v467 = vunpack.c.l.b16 %v365
        %v468 = vunpack.c.h.b16 %v365
        %v469 = vunpack.c.l.b16 %v366
        %v470 = vunpack.c.h.b16 %v366
        %v471 = vunpack.c.l.b16 %v367
        %v472 = vunpack.c.h.b16 %v367
        %v473 = vunpack.c.l.b16 %v368
        %v474 = vunpack.c.h.b16 %v368
        %v475 = vunpack.c.l.b16 %v369
        %v476 = vunpack.c.h.b16 %v369
        %v477 = vunpack.c.l.b16 %v370
        %v478 = vunpack.c.h.b16 %v370
        %v479 = vunpack.c.l.b16 %v371
        %v480 = vunpack.c.h.b16 %v371
        %v481 = vunpack.c.l.b16 %v372
        %v482 = vunpack.c.h.b16 %v372
        %v483 = vunpack.c.l.b16 %v373
        %v484 = vunpack.c.h.b16 %v373
        %v485 = vunpack.c.l.b16 %v374
        %v486 = vunpack.c.h.b16 %v374
        %v487 = vunpack.c.l.b16 %v375
        %v488 = vunpack.c.h.b16 %v375
        %v489 = vunpack.c.l.b16 %v376
        %v490 = vunpack.c.h.b16 %v376
        %v491 = vunpack.c.l.b16 %v377
        %v492 = vunpack.c.h.b16 %v377
        %v493 = vunpack.c.l.b16 %v378
        %v494 = vunpack.c.h.b16 %v378
        %v495 = vpack.c.b16 %v433, %v431
        %v496 = vpack.c.b16 %v434, %v432
        %v497 = vpack.c.b16 %v437, %v435
        %v498 = vpack.c.b16 %v438, %v436
        %v499 = vpack.c.b16 %v441, %v439
        %v500 = vpack.c.b16 %v442, %v440
        %v501 = vpack.c.b16 %v445, %v443
        %v502 = vpack.c.b16 %v446, %v444
        %v503 = vpack.c.b16 %v449, %v447
        %v504 = vpack.c.b16 %v450, %v448
        %v505 = vpack.c.b16 %v453, %v451
        %v506 = vpack.c.b16 %v454, %v452
        %v507 = vpack.c.b16 %v457, %v455
        %v508 = vpack.c.b16 %v458, %v456
        %v509 = vpack.c.b16 %v461, %v459
        %v510 = vpack.c.b16 %v462, %v460
        %v511 = vpack.c.b16 %v465, %v463
        %v512 = vpack.c.b16 %v466, %v464
        %v513 = vpack.c.b16 %v469, %v467
        %v514 = vpack.c.b16 %v470, %v468
        %v515 = vpack.c.b16 %v473, %v471
        %v516 = vpack.c.b16 %v474, %v472
        %v517 = vpack.c.b16 %v477, %v475
        %v518 = vpack.c.b16 %v478, %v476
        %v519 = vpack.c.b16 %v481, %v479
        %v520 = vpack.c.b16 %v482, %v480
        %v521 = vpack.c.b16 %v485, %v483
        %v522 = vpack.c.b16 %v486, %v484
        %v523 = vpack.c.b16 %v489, %v487
        %v524 = vpack.c.b16 %v490, %v488
        %v525 = vpack.c.b16 %v493, %v491
        %v526 = vpack.c.b16 %v494, %v492
        %559 = vmatprep.subr.bf16.mxu0 %v496
        %560 = vmatpush1.bf16.msra.mxu0 %v495
        %561 = vmatprep.subr.bf16.mxu0 %v498
        %562 = vmatpush1.bf16.msra.mxu0 %v497
        %563 = vmatprep.subr.bf16.mxu0 %v500
        %564 = vmatpush1.bf16.msra.mxu0 %v499
        %565 = vmatprep.subr.bf16.mxu0 %v502
        %566 = vmatpush1.bf16.msra.mxu0 %v501
        %567 = vmatprep.subr.bf16.mxu0 %v504
        %568 = vmatpush1.bf16.msra.mxu0 %v503
        %569 = vmatprep.subr.bf16.mxu0 %v506
        %570 = vmatpush1.bf16.msra.mxu0 %v505
        %571 = vmatprep.subr.bf16.mxu0 %v508
        %572 = vmatpush1.bf16.msra.mxu0 %v507
        %573 = vmatprep.subr.bf16.mxu0 %v510
        %574 = vmatpush1.bf16.msra.mxu0 %v509
        %575 = vmatprep.subr.bf16.mxu0 %v512
        %576 = vmatpush1.bf16.msra.mxu0 %v511
        %577 = vmatprep.subr.bf16.mxu0 %v514
        %578 = vmatpush1.bf16.msra.mxu0 %v513
        %579 = vmatprep.subr.bf16.mxu0 %v516
        %580 = vmatpush1.bf16.msra.mxu0 %v515
        %581 = vmatprep.subr.bf16.mxu0 %v518
        %582 = vmatpush1.bf16.msra.mxu0 %v517
        %583 = vmatprep.subr.bf16.mxu0 %v520
        %584 = vmatpush1.bf16.msra.mxu0 %v519
        %585 = vmatprep.subr.bf16.mxu0 %v522
        %586 = vmatpush1.bf16.msra.mxu0 %v521
        %587 = vmatprep.subr.bf16.mxu0 %v524
        %588 = vmatpush1.bf16.msra.mxu0 %v523
        %589 = vmatprep.subr.bf16.mxu0 %v526
        %590 = vmatpush1.bf16.msra.mxu0 %v525
        %591 = vmatprep.mubr.bf16.mxu0 %v392
        %592 = vmatmul.mubr.bf16.gmra.mrb[0].mxu0 %v391
        %v593 = vpop.f32.mrb[0].mxu0
        %v594 = vadd.f32 0.0, %v593
        %v595 = vpop.f32.mrb[0].mxu0
        %v596 = vadd.f32 0.0, %v595
        %v597 = vpop.f32.mrb[0].mxu0
        %v598 = vadd.f32 0.0, %v597
        %v599 = vpop.f32.mrb[0].mxu0
        %v600 = vadd.f32 0.0, %v599
        %601 = vmatprep.mubr.bf16.mxu0 %v394
        %602 = vmatmul.mubr.bf16.gmra.mrb[0].mxu0 %v393
        %v603 = vpop.f32.mrb[0].mxu0
        %v604 = vadd.f32 0.0, %v603
        %v605 = vpop.f32.mrb[0].mxu0
        %v606 = vadd.f32 0.0, %v605
        %v607 = vpop.f32.mrb[0].mxu0
        %v608 = vadd.f32 0.0, %v607
        %v609 = vpop.f32.mrb[0].mxu0
        %v610 = vadd.f32 0.0, %v609
        %611 = vdwg.mxu0
        %612 = vst [vmem:[%s332] sm:$0xff] %v594
        %613 = vst [vmem:[%s332 + $0x8] sm:$0xff] %v596
        %614 = vst [vmem:[%s332 + $0x10] sm:$0xff] %v598
        %615 = vst [vmem:[%s332 + $0x18] sm:$0xff] %v600
        %616 = vst [vmem:[%s332 + $0x20] sm:$0xff] %v604
        %617 = vst [vmem:[%s332 + $0x28] sm:$0xff] %v606
        %618 = vst [vmem:[%s332 + $0x30] sm:$0xff] %v608
        %619 = vst [vmem:[%s332 + $0x38] sm:$0xff] %v610
        %s620 = sand.u32 %s90, 1
        %s621 = scalar_lea.sflag [#allocation4], %s620
        %s622 = sand.u32 %s90, 1
        %s623 = smul.addr %s622, 64
        %s624 = scalar_lea.vmem [#allocation3], %s623
        // Predicated region
        $region67: #{_lambda_.3} parent=61 // pred_check
          %p625 = pneg %p100
        $region68: #{_lambda_.3} parent=61 // pred_check_branch
          %627 = sbr.rel (%p625) target = $region70
        $region69: #{_lambda_.3} parent=61 // pred_region
          %s628 = smul.u32 4, %s20
          %s629 = smul.u32 2, %s21
          %s631 = ssub.s32 1024, 1024
          %632 = vsyncadd %s621, %s631
          %s633 = smul.addr %s628, 4
          %s634 = sadd.s32 %s629, %s633
          %s635 = smul.addr %s634, 128
          %s636 = scalar_lea.hbm %s2, %s635
          %s637 = sshll.u32 %s624, 4
          %s638 = int_to_ptr.vmem [resolvable:$true] %s637
          %643 = dma.vmem_to_hbm [thread:$0]  %s638, 1024, %s636, %s621, 256, 512, 16
        $region70: #{_lambda_.3} parent=61 // pred_fallthru
          _
      $region62: #{_lambda_.3} parent=5 // pred_fallthru
        _
      %p644 = scmp.le.s32.totalorder 2, %s11
      // Predicated region
      $region71: #{_lambda_.3} parent=5 // pred_check
        %p645 = pneg %p644
      $region72: #{_lambda_.3} parent=5 // pred_check_branch
        %647 = sbr.rel (%p645) target = $region74
      $region73: #{_lambda_.3} parent=5 // pred_region
        %s648 = ssub.s32 %s11, 2
        // Predicated region
        $region75: #{_lambda_.3} parent=73 // pred_check
          %p649 = pneg %p106
        $region76: #{_lambda_.3} parent=73 // pred_check_branch
          %651 = sbr.rel (%p649) target = $region78
        $region77: #{_lambda_.3} parent=73 // pred_region
          %s652 = sand.u32 %s91, 1
          %s653 = scalar_lea.sflag [#allocation4], %s652
          %s654 = sand.u32 %s91, 1
          %s655 = smul.addr %s654, 64
          %s656 = scalar_lea.vmem [#allocation3], %s655
          %657 = dma.done %s653, 1024
        $region78: #{_lambda_.3} parent=73 // pred_fallthru
          _
      $region74: #{_lambda_.3} parent=5 // pred_fallthru
        _
    $region6: #{_lambda_.3} parent=1 // loop_footer
      %s15 = sadd.s32 1, %s11
    $region7: #{_lambda_.3} parent=1 // loop_footer_branch
      %10 = sbr.rel target = $region3
    $region8: #{_lambda_.3} parent=1 // loop_exit
      _
    %658 = vsyncpa [#allocation4], 1
    %s659 = scalar_lea.sflag [#allocation4], 1
    %660 = vsyncpa %s659, 1

// kernel: _lambda_.2
$region0: #{_lambda_.2}
  #allocation0 [shape = 'u32[]', space=smem, size = 0x4, offset = 0x4, fixed_abs, tag = 'smem constant byte address 0x4 - core index']
  #allocation1 [shape = 'u32[144,128]{1,0:T(1,128)}', space=vmem, size = 0x12000, scoped, tag = 'internal scratch']
  #allocation2 [shape = 'f32[16,256]{1,0:T(8,128)}', space=vmem, size = 0x4000, scoped, tag = 'scratch operand']
  %s0 = inlined_call_operand.vmem [shape: f32[2,16,256], index: 0, kind: input, shape index: {}]
  %s1 = inlined_call_operand.vmem [shape: f32[2,1,256], index: 1, kind: input, shape index: {}]
  %s2 = inlined_call_operand.vmem [shape: f32[2,1,256], index: 2, kind: input, shape index: {}]
  %s3 = inlined_call_operand.hbm [shape: bf16[2,256,768], index: 3, kind: input, shape index: {}]
  %s4 = inlined_call_operand.vmem [shape: f32[2,1,768], index: 4, kind: input, shape index: {}]
  %s5 = inlined_call_operand.vmem [shape: bf16[2,256,256], index: 5, kind: input, shape index: {}]
  %s6 = inlined_call_operand.vmem [shape: f32[2,1,256], index: 6, kind: input, shape index: {}]
  %s7 = inlined_call_operand.vmem [shape: f32[2,1,256], index: 7, kind: input, shape index: {}]
  %s8 = inlined_call_operand.vmem [shape: f32[2,1,256], index: 8, kind: input, shape index: {}]
  %s9 = inlined_call_operand.hbm [shape: bf16[2,256,1024], index: 9, kind: input, shape index: {}]
  %s10 = inlined_call_operand.vmem [shape: f32[2,1,1024], index: 10, kind: input, shape index: {}]
  %s11 = inlined_call_operand.hbm [shape: bf16[2,1024,256], index: 11, kind: input, shape index: {}]
  %s12 = inlined_call_operand.vmem [shape: f32[2,1,256], index: 12, kind: input, shape index: {}]
  %s13 = inlined_call_operand.vmem [shape: f32[1,256], index: 13, kind: input, shape index: {}]
  %s14 = inlined_call_operand.vmem [shape: f32[1,256], index: 14, kind: input, shape index: {}]
  %s15 = inlined_call_operand.vmem [shape: bf16[2,16,256], index: 15, kind: output, shape index: {}]
  %s16 = sld [smem:[#allocation0]]
  $region113: #{_lambda_.2} parent=0
    _
  %s18 = ssub.s32 1, %s16
  %s19 = scalar_select 0, %s18, %s16
  $region1: #{_lambda_.2} parent=0
    #allocation3 [shape = 'u8[786432]{0}', space=vmem, size = 0xc0000, scoped, tag = 'input window, operand 3']
    #allocation4 [shape = 's32[2]{0}', space=sflag, size = 0x8, scoped, tag = 'scoped memory for _lambda_.2']
    #allocation5 [shape = 'u8[1048576]{0}', space=vmem, size = 0x100000, scoped, tag = 'input window, operand 9']
    #allocation6 [shape = 's32[2]{0}', space=sflag, size = 0x8, scoped, tag = 'scoped memory for _lambda_.2']
    #allocation7 [shape = 'u8[1048576]{0}', space=vmem, size = 0x100000, scoped, tag = 'input window, operand 11']
    %20 = vsyncpa [#allocation4], 0
    %s21 = scalar_lea.sflag [#allocation4], 1
    %22 = vsyncpa %s21, 0
    %23 = vsyncpa [#allocation6], 0
    %s24 = scalar_lea.sflag [#allocation6], 1
    %25 = vsyncpa %s24, 0
    loop: start=0, step=1, limit=6
    $region2: #{_lambda_.2} parent=1 // loop_pre_header
      _
    $region3: #{_lambda_.2} parent=1 // loop_header
      %s27 = sphi 0, %s31
      %p28 = scmp.ge.s32.totalorder %s27, 6
      %s34 = sphi 0, %s46
      %s35 = sphi 0, %s42
      %s36 = sphi 0, %s34
      %s37 = sphi 0, %s35
      %s38 = sphi 0, %s36
      %s39 = sphi 0, %s37
      %s49 = sphi 0, %s51
      %s52 = sphi 0, %s49
      %s53 = sphi 0, %s52
      %s69 = sphi 0, %s53
      %s75 = sphi 0, %s77
      %s78 = sphi 0, %s75
      %s79 = sphi 0, %s78
      %s95 = sphi 0, %s79
      %s101 = sphi 0, %s103
      %s104 = sphi 0, %s101
      %s105 = sphi 0, %s104
      %s121 = sphi 0, %s105
      %s127 = sphi 0, %s129
      %s130 = sphi 0, %s127
      %s131 = sphi 0, %s130
      %s147 = sphi 0, %s131
      %s153 = sphi 0, %s155
      %s156 = sphi 0, %s153
      %s157 = sphi 0, %s156
      %s173 = sphi 0, %s157
      %s179 = sphi 0, %s181
      %s182 = sphi 0, %s179
      %s183 = sphi 0, %s182
      %s199 = sphi 0, %s183
      %s205 = sphi 0, %s207
      %s208 = sphi 0, %s205
      %s209 = sphi 0, %s208
      %s225 = sphi 0, %s209
      %s231 = sphi 0, %s233
      %s234 = sphi 0, %s231
      %s235 = sphi 0, %s234
      %s251 = sphi 0, %s235
      %s257 = sphi 0, %s259
      %s260 = sphi 0, %s257
      %s261 = sphi 0, %s260
      %s277 = sphi 0, %s261
      %s283 = sphi 0, %s285
      %s286 = sphi 0, %s283
      %s287 = sphi 0, %s286
      %s303 = sphi 0, %s287
      %s309 = sphi 0, %s311
      %s312 = sphi 0, %s309
      %s313 = sphi 0, %s312
      %s329 = sphi 0, %s313
      %s335 = sphi 0, %s337
      %s338 = sphi 0, %s335
      %s339 = sphi 0, %s338
      %s355 = sphi 0, %s339
      %s361 = sphi 0, %s363
      %s364 = sphi 0, %s361
      %s365 = sphi 0, %s364
      %s381 = sphi 0, %s365
      %s385 = sphi 0, %s385
      %s387 = sphi 0, %s385
      %s388 = sphi 0, %s387
      %s402 = sphi 0, %s388
      %s406 = sphi 0, %s406
      %s408 = sphi 0, %s406
      %s409 = sphi 0, %s408
      %s423 = sphi 0, %s409
      %s429 = sphi 0, %s431
      %s432 = sphi 0, %s429
      %s433 = sphi 0, %s432
      %s449 = sphi 0, %s433
    $region4: #{_lambda_.2} parent=1 // loop_header_branch
      %30 = sbr.rel (%p28) target = $region8
    $region5: #{_lambda_.2} parent=1 // loop_body
      %s32 = ssub.s32 %s27, 1
      %s33 = ssub.s32 %s27, 2
      %s40 = sadd.s32 1, %s35
      %p41 = scmp.ge.s32.totalorder %s40, 2
      %s42 = scalar_select %p41, 0, %s40
      %s43 = sadd.s32 1, %s34
      %s44 = scalar_select %p41, %s43, %s34
      %p45 = scmp.ge.s32.totalorder %s44, 2
      %s46 = scalar_select %p45, 0, %s44
      %s47 = ssub.s32 %s34, %s46
      %p48 = scmp.eq.s32.totalorder %s47, 0
      %s50 = sadd.s32 %s49, 1
      %s51 = scalar_select %p48, %s49, %s50
      %p54 = pneg %p48
      %p55 = scmp.eq.s32.totalorder %s27, 3
      %p56 = por %p54, %p55
      %p57 = scmp.ne.s32.totalorder %s49, %s52
      %p58 = scmp.eq.s32.totalorder %s27, 0
      %p59 = por %p57, %p58
      %p60 = scmp.ne.s32.totalorder %s49, %s52
      %p61 = scmp.eq.s32.totalorder %s32, 3
      %p62 = por %p60, %p61
      %p63 = scmp.ne.s32.totalorder %s52, %s53
      %p64 = scmp.eq.s32.totalorder %s32, 0
      %p65 = por %p63, %p64
      %p66 = scmp.ne.s32.totalorder %s52, %s53
      %p67 = scmp.eq.s32.totalorder %s33, 3
      %p68 = por %p66, %p67
      %p70 = scmp.ne.s32.totalorder %s53, %s69
      %p71 = scmp.eq.s32.totalorder %s33, 0
      %p72 = por %p70, %p71
      %s73 = ssub.s32 %s35, %s42
      %p74 = scmp.eq.s32.totalorder %s73, 0
      %s76 = sadd.s32 %s75, 1
      %s77 = scalar_select %p74, %s75, %s76
      %p80 = pneg %p74
      %p81 = scmp.eq.s32.totalorder %s27, 3
      %p82 = por %p80, %p81
      %p83 = scmp.ne.s32.totalorder %s75, %s78
      %p84 = scmp.eq.s32.totalorder %s27, 0
      %p85 = por %p83, %p84
      %p86 = scmp.ne.s32.totalorder %s75, %s78
      %p87 = scmp.eq.s32.totalorder %s32, 3
      %p88 = por %p86, %p87
      %p89 = scmp.ne.s32.totalorder %s78, %s79
      %p90 = scmp.eq.s32.totalorder %s32, 0
      %p91 = por %p89, %p90
      %p92 = scmp.ne.s32.totalorder %s78, %s79
      %p93 = scmp.eq.s32.totalorder %s33, 3
      %p94 = por %p92, %p93
      %p96 = scmp.ne.s32.totalorder %s79, %s95
      %p97 = scmp.eq.s32.totalorder %s33, 0
      %p98 = por %p96, %p97
      %s99 = ssub.s32 %s35, %s42
      %p100 = scmp.eq.s32.totalorder %s99, 0
      %s102 = sadd.s32 %s101, 1
      %s103 = scalar_select %p100, %s101, %s102
      %p106 = pneg %p100
      %p107 = scmp.eq.s32.totalorder %s27, 3
      %p108 = por %p106, %p107
      %p109 = scmp.ne.s32.totalorder %s101, %s104
      %p110 = scmp.eq.s32.totalorder %s27, 0
      %p111 = por %p109, %p110
      %p112 = scmp.ne.s32.totalorder %s101, %s104
      %p113 = scmp.eq.s32.totalorder %s32, 3
      %p114 = por %p112, %p113
      %p115 = scmp.ne.s32.totalorder %s104, %s105
      %p116 = scmp.eq.s32.totalorder %s32, 0
      %p117 = por %p115, %p116
      %p118 = scmp.ne.s32.totalorder %s104, %s105
      %p119 = scmp.eq.s32.totalorder %s33, 3
      %p120 = por %p118, %p119
      %p122 = scmp.ne.s32.totalorder %s105, %s121
      %p123 = scmp.eq.s32.totalorder %s33, 0
      %p124 = por %p122, %p123
      %s125 = ssub.s32 %s35, %s42
      %p126 = scmp.eq.s32.totalorder %s125, 0
      %s128 = sadd.s32 %s127, 1
      %s129 = scalar_select %p126, %s127, %s128
      %p132 = pneg %p126
      %p133 = scmp.eq.s32.totalorder %s27, 3
      %p134 = por %p132, %p133
      %p135 = scmp.ne.s32.totalorder %s127, %s130
      %p136 = scmp.eq.s32.totalorder %s27, 0
      %p137 = por %p135, %p136
      %p138 = scmp.ne.s32.totalorder %s127, %s130
      %p139 = scmp.eq.s32.totalorder %s32, 3
      %p140 = por %p138, %p139
      %p141 = scmp.ne.s32.totalorder %s130, %s131
      %p142 = scmp.eq.s32.totalorder %s32, 0
      %p143 = por %p141, %p142
      %p144 = scmp.ne.s32.totalorder %s130, %s131
      %p145 = scmp.eq.s32.totalorder %s33, 3
      %p146 = por %p144, %p145
      %p148 = scmp.ne.s32.totalorder %s131, %s147
      %p149 = scmp.eq.s32.totalorder %s33, 0
      %p150 = por %p148, %p149
      %s151 = ssub.s32 %s35, %s42
      %p152 = scmp.eq.s32.totalorder %s151, 0
      %s154 = sadd.s32 %s153, 1
      %s155 = scalar_select %p152, %s153, %s154
      %p158 = pneg %p152
      %p159 = scmp.eq.s32.totalorder %s27, 3
      %p160 = por %p158, %p159
      %p161 = scmp.ne.s32.totalorder %s153, %s156
      %p162 = scmp.eq.s32.totalorder %s27, 0
      %p163 = por %p161, %p162
      %p164 = scmp.ne.s32.totalorder %s153, %s156
      %p165 = scmp.eq.s32.totalorder %s32, 3
      %p166 = por %p164, %p165
      %p167 = scmp.ne.s32.totalorder %s156, %s157
      %p168 = scmp.eq.s32.totalorder %s32, 0
      %p169 = por %p167, %p168
      %p170 = scmp.ne.s32.totalorder %s156, %s157
      %p171 = scmp.eq.s32.totalorder %s33, 3
      %p172 = por %p170, %p171
      %p174 = scmp.ne.s32.totalorder %s157, %s173
      %p175 = scmp.eq.s32.totalorder %s33, 0
      %p176 = por %p174, %p175
      %s177 = ssub.s32 %s35, %s42
      %p178 = scmp.eq.s32.totalorder %s177, 0
      %s180 = sadd.s32 %s179, 1
      %s181 = scalar_select %p178, %s179, %s180
      %p184 = pneg %p178
      %p185 = scmp.eq.s32.totalorder %s27, 3
      %p186 = por %p184, %p185
      %p187 = scmp.ne.s32.totalorder %s179, %s182
      %p188 = scmp.eq.s32.totalorder %s27, 0
      %p189 = por %p187, %p188
      %p190 = scmp.ne.s32.totalorder %s179, %s182
      %p191 = scmp.eq.s32.totalorder %s32, 3
      %p192 = por %p190, %p191
      %p193 = scmp.ne.s32.totalorder %s182, %s183
      %p194 = scmp.eq.s32.totalorder %s32, 0
      %p195 = por %p193, %p194
      %p196 = scmp.ne.s32.totalorder %s182, %s183
      %p197 = scmp.eq.s32.totalorder %s33, 3
      %p198 = por %p196, %p197
      %p200 = scmp.ne.s32.totalorder %s183, %s199
      %p201 = scmp.eq.s32.totalorder %s33, 0
      %p202 = por %p200, %p201
      %s203 = ssub.s32 %s35, %s42
      %p204 = scmp.eq.s32.totalorder %s203, 0
      %s206 = sadd.s32 %s205, 1
      %s207 = scalar_select %p204, %s205, %s206
      %p210 = pneg %p204
      %p211 = scmp.eq.s32.totalorder %s27, 3
      %p212 = por %p210, %p211
      %p213 = scmp.ne.s32.totalorder %s205, %s208
      %p214 = scmp.eq.s32.totalorder %s27, 0
      %p215 = por %p213, %p214
      %p216 = scmp.ne.s32.totalorder %s205, %s208
      %p217 = scmp.eq.s32.totalorder %s32, 3
      %p218 = por %p216, %p217
      %p219 = scmp.ne.s32.totalorder %s208, %s209
      %p220 = scmp.eq.s32.totalorder %s32, 0
      %p221 = por %p219, %p220
      %p222 = scmp.ne.s32.totalorder %s208, %s209
      %p223 = scmp.eq.s32.totalorder %s33, 3
      %p224 = por %p222, %p223
      %p226 = scmp.ne.s32.totalorder %s209, %s225
      %p227 = scmp.eq.s32.totalorder %s33, 0
      %p228 = por %p226, %p227
      %s229 = ssub.s32 %s35, %s42
      %p230 = scmp.eq.s32.totalorder %s229, 0
      %s232 = sadd.s32 %s231, 1
      %s233 = scalar_select %p230, %s231, %s232
      %p236 = pneg %p230
      %p237 = scmp.eq.s32.totalorder %s27, 3
      %p238 = por %p236, %p237
      %p239 = scmp.ne.s32.totalorder %s231, %s234
      %p240 = scmp.eq.s32.totalorder %s27, 0
      %p241 = por %p239, %p240
      %p242 = scmp.ne.s32.totalorder %s231, %s234
      %p243 = scmp.eq.s32.totalorder %s32, 3
      %p244 = por %p242, %p243
      %p245 = scmp.ne.s32.totalorder %s234, %s235
      %p246 = scmp.eq.s32.totalorder %s32, 0
      %p247 = por %p245, %p246
      %p248 = scmp.ne.s32.totalorder %s234, %s235
      %p249 = scmp.eq.s32.totalorder %s33, 3
      %p250 = por %p248, %p249
      %p252 = scmp.ne.s32.totalorder %s235, %s251
      %p253 = scmp.eq.s32.totalorder %s33, 0
      %p254 = por %p252, %p253
      %s255 = ssub.s32 %s35, %s42
      %p256 = scmp.eq.s32.totalorder %s255, 0
      %s258 = sadd.s32 %s257, 1
      %s259 = scalar_select %p256, %s257, %s258
      %p262 = pneg %p256
      %p263 = scmp.eq.s32.totalorder %s27, 3
      %p264 = por %p262, %p263
      %p265 = scmp.ne.s32.totalorder %s257, %s260
      %p266 = scmp.eq.s32.totalorder %s27, 0
      %p267 = por %p265, %p266
      %p268 = scmp.ne.s32.totalorder %s257, %s260
      %p269 = scmp.eq.s32.totalorder %s32, 3
      %p270 = por %p268, %p269
      %p271 = scmp.ne.s32.totalorder %s260, %s261
      %p272 = scmp.eq.s32.totalorder %s32, 0
      %p273 = por %p271, %p272
      %p274 = scmp.ne.s32.totalorder %s260, %s261
      %p275 = scmp.eq.s32.totalorder %s33, 3
      %p276 = por %p274, %p275
      %p278 = scmp.ne.s32.totalorder %s261, %s277
      %p279 = scmp.eq.s32.totalorder %s33, 0
      %p280 = por %p278, %p279
      %s281 = ssub.s32 %s35, %s42
      %p282 = scmp.eq.s32.totalorder %s281, 0
      %s284 = sadd.s32 %s283, 1
      %s285 = scalar_select %p282, %s283, %s284
      %p288 = pneg %p282
      %p289 = scmp.eq.s32.totalorder %s27, 3
      %p290 = por %p288, %p289
      %p291 = scmp.ne.s32.totalorder %s283, %s286
      %p292 = scmp.eq.s32.totalorder %s27, 0
      %p293 = por %p291, %p292
      %p294 = scmp.ne.s32.totalorder %s283, %s286
      %p295 = scmp.eq.s32.totalorder %s32, 3
      %p296 = por %p294, %p295
      %p297 = scmp.ne.s32.totalorder %s286, %s287
      %p298 = scmp.eq.s32.totalorder %s32, 0
      %p299 = por %p297, %p298
      %p300 = scmp.ne.s32.totalorder %s286, %s287
      %p301 = scmp.eq.s32.totalorder %s33, 3
      %p302 = por %p300, %p301
      %p304 = scmp.ne.s32.totalorder %s287, %s303
      %p305 = scmp.eq.s32.totalorder %s33, 0
      %p306 = por %p304, %p305
      %s307 = ssub.s32 %s35, %s42
      %p308 = scmp.eq.s32.totalorder %s307, 0
      %s310 = sadd.s32 %s309, 1
      %s311 = scalar_select %p308, %s309, %s310
      %p314 = pneg %p308
      %p315 = scmp.eq.s32.totalorder %s27, 3
      %p316 = por %p314, %p315
      %p317 = scmp.ne.s32.totalorder %s309, %s312
      %p318 = scmp.eq.s32.totalorder %s27, 0
      %p319 = por %p317, %p318
      %p320 = scmp.ne.s32.totalorder %s309, %s312
      %p321 = scmp.eq.s32.totalorder %s32, 3
      %p322 = por %p320, %p321
      %p323 = scmp.ne.s32.totalorder %s312, %s313
      %p324 = scmp.eq.s32.totalorder %s32, 0
      %p325 = por %p323, %p324
      %p326 = scmp.ne.s32.totalorder %s312, %s313
      %p327 = scmp.eq.s32.totalorder %s33, 3
      %p328 = por %p326, %p327
      %p330 = scmp.ne.s32.totalorder %s313, %s329
      %p331 = scmp.eq.s32.totalorder %s33, 0
      %p332 = por %p330, %p331
      %s333 = ssub.s32 %s35, %s42
      %p334 = scmp.eq.s32.totalorder %s333, 0
      %s336 = sadd.s32 %s335, 1
      %s337 = scalar_select %p334, %s335, %s336
      %p340 = pneg %p334
      %p341 = scmp.eq.s32.totalorder %s27, 3
      %p342 = por %p340, %p341
      %p343 = scmp.ne.s32.totalorder %s335, %s338
      %p344 = scmp.eq.s32.totalorder %s27, 0
      %p345 = por %p343, %p344
      %p346 = scmp.ne.s32.totalorder %s335, %s338
      %p347 = scmp.eq.s32.totalorder %s32, 3
      %p348 = por %p346, %p347
      %p349 = scmp.ne.s32.totalorder %s338, %s339
      %p350 = scmp.eq.s32.totalorder %s32, 0
      %p351 = por %p349, %p350
      %p352 = scmp.ne.s32.totalorder %s338, %s339
      %p353 = scmp.eq.s32.totalorder %s33, 3
      %p354 = por %p352, %p353
      %p356 = scmp.ne.s32.totalorder %s339, %s355
      %p357 = scmp.eq.s32.totalorder %s33, 0
      %p358 = por %p356, %p357
      %s359 = ssub.s32 %s35, %s42
      %p360 = scmp.eq.s32.totalorder %s359, 0
      %s362 = sadd.s32 %s361, 1
      %s363 = scalar_select %p360, %s361, %s362
      %p366 = pneg %p360
      %p367 = scmp.eq.s32.totalorder %s27, 3
      %p368 = por %p366, %p367
      %p369 = scmp.ne.s32.totalorder %s361, %s364
      %p370 = scmp.eq.s32.totalorder %s27, 0
      %p371 = por %p369, %p370
      %p372 = scmp.ne.s32.totalorder %s361, %s364
      %p373 = scmp.eq.s32.totalorder %s32, 3
      %p374 = por %p372, %p373
      %p375 = scmp.ne.s32.totalorder %s364, %s365
      %p376 = scmp.eq.s32.totalorder %s32, 0
      %p377 = por %p375, %p376
      %p378 = scmp.ne.s32.totalorder %s364, %s365
      %p379 = scmp.eq.s32.totalorder %s33, 3
      %p380 = por %p378, %p379
      %p382 = scmp.ne.s32.totalorder %s365, %s381
      %p383 = scmp.eq.s32.totalorder %s33, 0
      %p384 = por %p382, %p383
      %s386 = sadd.s32 %s385, 1
      %p389 = scmp.eq.s32.totalorder %s27, 3
      %p390 = scmp.ne.s32.totalorder %s385, %s387
      %p391 = scmp.eq.s32.totalorder %s27, 0
      %p392 = por %p390, %p391
      %p393 = scmp.ne.s32.totalorder %s385, %s387
      %p394 = scmp.eq.s32.totalorder %s32, 3
      %p395 = por %p393, %p394
      %p396 = scmp.ne.s32.totalorder %s387, %s388
      %p397 = scmp.eq.s32.totalorder %s32, 0
      %p398 = por %p396, %p397
      %p399 = scmp.ne.s32.totalorder %s387, %s388
      %p400 = scmp.eq.s32.totalorder %s33, 3
      %p401 = por %p399, %p400
      %p403 = scmp.ne.s32.totalorder %s388, %s402
      %p404 = scmp.eq.s32.totalorder %s33, 0
      %p405 = por %p403, %p404
      %s407 = sadd.s32 %s406, 1
      %p410 = scmp.eq.s32.totalorder %s27, 3
      %p411 = scmp.ne.s32.totalorder %s406, %s408
      %p412 = scmp.eq.s32.totalorder %s27, 0
      %p413 = por %p411, %p412
      %p414 = scmp.ne.s32.totalorder %s406, %s408
      %p415 = scmp.eq.s32.totalorder %s32, 3
      %p416 = por %p414, %p415
      %p417 = scmp.ne.s32.totalorder %s408, %s409
      %p418 = scmp.eq.s32.totalorder %s32, 0
      %p419 = por %p417, %p418
      %p420 = scmp.ne.s32.totalorder %s408, %s409
      %p421 = scmp.eq.s32.totalorder %s33, 3
      %p422 = por %p420, %p421
      %p424 = scmp.ne.s32.totalorder %s409, %s423
      %p425 = scmp.eq.s32.totalorder %s33, 0
      %p426 = por %p424, %p425
      %s427 = ssub.s32 %s34, %s46
      %p428 = scmp.eq.s32.totalorder %s427, 0
      %s430 = sadd.s32 %s429, 1
      %s431 = scalar_select %p428, %s429, %s430
      %p434 = pneg %p428
      %p435 = scmp.eq.s32.totalorder %s27, 3
      %p436 = por %p434, %p435
      %p437 = scmp.ne.s32.totalorder %s429, %s432
      %p438 = scmp.eq.s32.totalorder %s27, 0
      %p439 = por %p437, %p438
      %p440 = scmp.ne.s32.totalorder %s429, %s432
      %p441 = scmp.eq.s32.totalorder %s32, 3
      %p442 = por %p440, %p441
      %p443 = scmp.ne.s32.totalorder %s432, %s433
      %p444 = scmp.eq.s32.totalorder %s32, 0
      %p445 = por %p443, %p444
      %p446 = scmp.ne.s32.totalorder %s432, %s433
      %p447 = scmp.eq.s32.totalorder %s33, 3
      %p448 = por %p446, %p447
      %p450 = scmp.ne.s32.totalorder %s433, %s449
      %p451 = scmp.eq.s32.totalorder %s33, 0
      %p452 = por %p450, %p451
      %p453 = scmp.le.s32.totalorder 1, %s27
      %p454 = scmp.lt.s32.totalorder %s27, 5
      %p455 = pnand %p453, %p454
      %p456 = pneg %p455
      // Predicated region
      $region9: #{_lambda_.2} parent=5 // pred_check
        _
      $region10: #{_lambda_.2} parent=5 // pred_check_branch
        %458 = sbr.rel (%p455) target = $region12
      $region11: #{_lambda_.2} parent=5 // pred_region
        %s459 = ssub.s32 %s27, 1
        // Predicated region
        $region13: #{_lambda_.2} parent=11 // pred_check
          %p460 = pneg %p398
        $region14: #{_lambda_.2} parent=11 // pred_check_branch
          %462 = sbr.rel (%p460) target = $region16
        $region15: #{_lambda_.2} parent=11 // pred_region
          _
        $region16: #{_lambda_.2} parent=11 // pred_fallthru
          _
        // Predicated region
        $region17: #{_lambda_.2} parent=11 // pred_check
          %p463 = pneg %p419
        $region18: #{_lambda_.2} parent=11 // pred_check_branch
          %465 = sbr.rel (%p463) target = $region20
        $region19: #{_lambda_.2} parent=11 // pred_region
          _
        $region20: #{_lambda_.2} parent=11 // pred_fallthru
          _
      $region12: #{_lambda_.2} parent=5 // pred_fallthru
        _
      %p466 = scmp.lt.s32.totalorder %s27, 4
      // Predicated region
      $region21: #{_lambda_.2} parent=5 // pred_check
        %p467 = pneg %p466
      $region22: #{_lambda_.2} parent=5 // pred_check_branch
        %469 = sbr.rel (%p467) target = $region24
      $region23: #{_lambda_.2} parent=5 // pred_region
        // Predicated region
        $region25: #{_lambda_.2} parent=23 // pred_check
          %p470 = pneg %p59
        $region26: #{_lambda_.2} parent=23 // pred_check_branch
          %472 = sbr.rel (%p470) target = $region28
        $region27: #{_lambda_.2} parent=23 // pred_region
          %p473 = scmp.lt.s32.totalorder %s34, 1
          %s474 = scalar_select %p473, %s34, 1
          %s475 = smul.addr %s474, 4
          %s476 = smul.addr %s475, 8
          %s477 = scalar_lea.vmem %s0, %s476
        $region28: #{_lambda_.2} parent=23 // pred_fallthru
          _
        // Predicated region
        $region29: #{_lambda_.2} parent=23 // pred_check
          %p478 = pneg %p85
        $region30: #{_lambda_.2} parent=23 // pred_check_branch
          %480 = sbr.rel (%p478) target = $region32
        $region31: #{_lambda_.2} parent=23 // pred_region
          %p481 = scmp.lt.s32.totalorder %s35, 1
          %s482 = scalar_select %p481, %s35, 1
          %s483 = smul.addr %s482, 2
          %s484 = scalar_lea.vmem %s1, %s483
        $region32: #{_lambda_.2} parent=23 // pred_fallthru
          _
        // Predicated region
        $region33: #{_lambda_.2} parent=23 // pred_check
          %p485 = pneg %p111
        $region34: #{_lambda_.2} parent=23 // pred_check_branch
          %487 = sbr.rel (%p485) target = $region36
        $region35: #{_lambda_.2} parent=23 // pred_region
          %p488 = scmp.lt.s32.totalorder %s35, 1
          %s489 = scalar_select %p488, %s35, 1
          %s490 = smul.addr %s489, 2
          %s491 = scalar_lea.vmem %s2, %s490
        $region36: #{_lambda_.2} parent=23 // pred_fallthru
          _
        // Predicated region
        $region37: #{_lambda_.2} parent=23 // pred_check
          %p492 = pneg %p137
        $region38: #{_lambda_.2} parent=23 // pred_check_branch
          %494 = sbr.rel (%p492) target = $region40
        $region39: #{_lambda_.2} parent=23 // pred_region
          %s495 = sand.u32 %s127, 1
          %s496 = scalar_lea.sflag [#allocation4], %s495
          %s497 = sand.u32 %s127, 1
          %s498 = smul.addr %s497, 768
          %s499 = scalar_lea.vmem [#allocation3], %s498
          %s501 = ssub.s32 12288, 12288
          %502 = vsyncadd %s496, %s501
          %s503 = smul.addr %s35, 192
          %s504 = smul.addr %s503, 64
          %s505 = scalar_lea.hbm %s3, %s504
          %s506 = sshll.u32 %s499, 4
          %s507 = int_to_ptr.vmem [resolvable:$true] %s506
          %512 = dma.hbm_to_vmem [thread:$0]  %s505, 12288, %s507, %s496, 384, 384, 24
        $region40: #{_lambda_.2} parent=23 // pred_fallthru
          _
        // Predicated region
        $region41: #{_lambda_.2} parent=23 // pred_check
          %p513 = pneg %p163
        $region42: #{_lambda_.2} parent=23 // pred_check_branch
          %515 = sbr.rel (%p513) target = $region44
        $region43: #{_lambda_.2} parent=23 // pred_region
          %p516 = scmp.lt.s32.totalorder %s35, 1
          %s517 = scalar_select %p516, %s35, 1
          %s518 = smul.addr %s517, 6
          %s519 = scalar_lea.vmem %s4, %s518
        $region44: #{_lambda_.2} parent=23 // pred_fallthru
          _
        // Predicated region
        $region45: #{_lambda_.2} parent=23 // pred_check
          %p520 = pneg %p189
        $region46: #{_lambda_.2} parent=23 // pred_check_branch
          %522 = sbr.rel (%p520) target = $region48
        $region47: #{_lambda_.2} parent=23 // pred_region
          %p523 = scmp.lt.s32.totalorder %s35, 1
          %s524 = scalar_select %p523, %s35, 1
          %s525 = smul.addr %s524, 64
          %s526 = smul.addr %s525, 4
          %s527 = scalar_lea.vmem %s5, %s526
        $region48: #{_lambda_.2} parent=23 // pred_fallthru
          _
        // Predicated region
        $region49: #{_lambda_.2} parent=23 // pred_check
          %p528 = pneg %p215
        $region50: #{_lambda_.2} parent=23 // pred_check_branch
          %530 = sbr.rel (%p528) target = $region52
        $region51: #{_lambda_.2} parent=23 // pred_region
          %p531 = scmp.lt.s32.totalorder %s35, 1
          %s532 = scalar_select %p531, %s35, 1
          %s533 = smul.addr %s532, 2
          %s534 = scalar_lea.vmem %s6, %s533
        $region52: #{_lambda_.2} parent=23 // pred_fallthru
          _
        // Predicated region
        $region53: #{_lambda_.2} parent=23 // pred_check
          %p535 = pneg %p241
        $region54: #{_lambda_.2} parent=23 // pred_check_branch
          %537 = sbr.rel (%p535) target = $region56
        $region55: #{_lambda_.2} parent=23 // pred_region
          %p538 = scmp.lt.s32.totalorder %s35, 1
          %s539 = scalar_select %p538, %s35, 1
          %s540 = smul.addr %s539, 2
          %s541 = scalar_lea.vmem %s7, %s540
        $region56: #{_lambda_.2} parent=23 // pred_fallthru
          _
        // Predicated region
        $region57: #{_lambda_.2} parent=23 // pred_check
          %p542 = pneg %p267
        $region58: #{_lambda_.2} parent=23 // pred_check_branch
          %544 = sbr.rel (%p542) target = $region60
        $region59: #{_lambda_.2} parent=23 // pred_region
          %p545 = scmp.lt.s32.totalorder %s35, 1
          %s546 = scalar_select %p545, %s35, 1
          %s547 = smul.addr %s546, 2
          %s548 = scalar_lea.vmem %s8, %s547
        $region60: #{_lambda_.2} parent=23 // pred_fallthru
          _
        // Predicated region
        $region61: #{_lambda_.2} parent=23 // pred_check
          %p549 = pneg %p293
        $region62: #{_lambda_.2} parent=23 // pred_check_branch
          %551 = sbr.rel (%p549) target = $region64
        $region63: #{_lambda_.2} parent=23 // pred_region
          %s552 = sand.u32 %s27, 1
          %s553 = scalar_lea.sflag [#allocation6], %s552
          %s554 = sand.u32 %s283, 1
          %s555 = smul.addr %s554, 1024
          %s556 = scalar_lea.vmem [#allocation5], %s555
          %s558 = ssub.s32 16384, 16384
          %559 = vsyncadd %s553, %s558
          %s560 = smul.addr %s35, 256
          %s561 = smul.addr %s560, 64
          %s562 = scalar_lea.hbm %s9, %s561
          %s563 = sshll.u32 %s556, 4
          %s564 = int_to_ptr.vmem [resolvable:$true] %s563
          %569 = dma.hbm_to_vmem [thread:$0]  %s562, 16384, %s564, %s553, 512, 512, 32
        $region64: #{_lambda_.2} parent=23 // pred_fallthru
          _
        // Predicated region
        $region65: #{_lambda_.2} parent=23 // pred_check
          %p570 = pneg %p319
        $region66: #{_lambda_.2} parent=23 // pred_check_branch
          %572 = sbr.rel (%p570) target = $region68
        $region67: #{_lambda_.2} parent=23 // pred_region
          %p573 = scmp.lt.s32.totalorder %s35, 1
          %s574 = scalar_select %p573, %s35, 1
          %s575 = smul.addr %s574, 8
          %s576 = scalar_lea.vmem %s10, %s575
        $region68: #{_lambda_.2} parent=23 // pred_fallthru
          _
        // Predicated region
        $region69: #{_lambda_.2} parent=23 // pred_check
          %p577 = pneg %p345
        $region70: #{_lambda_.2} parent=23 // pred_check_branch
          %579 = sbr.rel (%p577) target = $region72
        $region71: #{_lambda_.2} parent=23 // pred_region
          %s580 = sand.u32 %s27, 1
          %s581 = scalar_lea.sflag [#allocation6], %s580
          %s582 = sand.u32 %s335, 1
          %s583 = smul.addr %s582, 1024
          %s584 = scalar_lea.vmem [#allocation7], %s583
          %s586 = ssub.s32 16384, 16384
          %587 = vsyncadd %s581, %s586
          %s588 = smul.addr %s35, 256
          %s589 = smul.addr %s588, 64
          %s590 = scalar_lea.hbm %s11, %s589
          %s591 = sshll.u32 %s584, 4
          %s592 = int_to_ptr.vmem [resolvable:$true] %s591
          %597 = dma.hbm_to_vmem [thread:$0]  %s590, 16384, %s592, %s581, 128, 128, 8
        $region72: #{_lambda_.2} parent=23 // pred_fallthru
          _
        // Predicated region
        $region73: #{_lambda_.2} parent=23 // pred_check
          %p598 = pneg %p371
        $region74: #{_lambda_.2} parent=23 // pred_check_branch
          %600 = sbr.rel (%p598) target = $region76
        $region75: #{_lambda_.2} parent=23 // pred_region
          %p601 = scmp.lt.s32.totalorder %s35, 1
          %s602 = scalar_select %p601, %s35, 1
          %s603 = smul.addr %s602, 2
          %s604 = scalar_lea.vmem %s12, %s603
        $region76: #{_lambda_.2} parent=23 // pred_fallthru
          _
      $region24: #{_lambda_.2} parent=5 // pred_fallthru
        _
      %p605 = scmp.le.s32.totalorder 1, %s27
      %p606 = scmp.lt.s32.totalorder %s27, 5
      %p607 = pnand %p605, %p606
      %p608 = pneg %p607
      // Predicated region
      $region77: #{_lambda_.2} parent=5 // pred_check
        _
      $region78: #{_lambda_.2} parent=5 // pred_check_branch
        %610 = sbr.rel (%p607) target = $region80
      $region79: #{_lambda_.2} parent=5 // pred_region
        %s611 = ssub.s32 %s27, 1
        %s612 = sand.u32 %s130, 1
        %s613 = scalar_lea.sflag [#allocation4], %s612
        %s614 = sand.u32 %s130, 1
        %s615 = smul.addr %s614, 768
        %s616 = scalar_lea.vmem [#allocation3], %s615
        // Predicated region
        $region81: #{_lambda_.2} parent=79 // pred_check
          %p617 = pneg %p143
        $region82: #{_lambda_.2} parent=79 // pred_check_branch
          %619 = sbr.rel (%p617) target = $region84
        $region83: #{_lambda_.2} parent=79 // pred_region
          %620 = dma.done %s613, 12288
        $region84: #{_lambda_.2} parent=79 // pred_fallthru
          _
        %s621 = sand.u32 %s32, 1
        %s622 = scalar_lea.sflag [#allocation6], %s621
        %s623 = sand.u32 %s286, 1
        %s624 = smul.addr %s623, 1024
        %s625 = scalar_lea.vmem [#allocation5], %s624
        // Predicated region
        $region85: #{_lambda_.2} parent=79 // pred_check
          %p626 = pneg %p299
        $region86: #{_lambda_.2} parent=79 // pred_check_branch
          %628 = sbr.rel (%p626) target = $region88
        $region87: #{_lambda_.2} parent=79 // pred_region
          %629 = dma.done %s622, 16384
        $region88: #{_lambda_.2} parent=79 // pred_fallthru
          _
        %s630 = sand.u32 %s32, 1
        %s631 = scalar_lea.sflag [#allocation6], %s630
        %s632 = sand.u32 %s338, 1
        %s633 = smul.addr %s632, 1024
        %s634 = scalar_lea.vmem [#allocation7], %s633
        // Predicated region
        $region89: #{_lambda_.2} parent=79 // pred_check
          %p635 = pneg %p351
        $region90: #{_lambda_.2} parent=79 // pred_check_branch
          %637 = sbr.rel (%p635) target = $region92
        $region91: #{_lambda_.2} parent=79 // pred_region
          %638 = dma.done %s631, 16384
        $region92: #{_lambda_.2} parent=79 // pred_fallthru
          _
        %p639 = scmp.lt.s32.totalorder %s36, 1
        %s640 = scalar_select %p639, %s36, 1
        %s641 = smul.addr %s640, 4
        %s642 = smul.addr %s641, 8
        %s643 = scalar_lea.vmem %s0, %s642
        %p644 = pneg %p65
        %p645 = pneg %p62
        %p646 = scmp.lt.s32.totalorder %s37, 1
        %s647 = scalar_select %p646, %s37, 1
        %s648 = smul.addr %s647, 2
        %s649 = scalar_lea.vmem %s1, %s648
        %p650 = pneg %p91
        %p651 = pneg %p88
        %p652 = scmp.lt.s32.totalorder %s37, 1
        %s653 = scalar_select %p652, %s37, 1
        %s654 = smul.addr %s653, 2
        %s655 = scalar_lea.vmem %s2, %s654
        %p656 = pneg %p117
        %p657 = pneg %p114
        %s658 = sand.u32 %s130, 1
        %s659 = scalar_lea.sflag [#allocation4], %s658
        %s660 = sand.u32 %s130, 1
        %s661 = smul.addr %s660, 768
        %s662 = scalar_lea.vmem [#allocation3], %s661
        %p663 = pneg %p143
        %p664 = pneg %p140
        %p665 = scmp.lt.s32.totalorder %s37, 1
        %s666 = scalar_select %p665, %s37, 1
        %s667 = smul.addr %s666, 6
        %s668 = scalar_lea.vmem %s4, %s667
        %p669 = pneg %p169
        %p670 = pneg %p166
        %p671 = scmp.lt.s32.totalorder %s37, 1
        %s672 = scalar_select %p671, %s37, 1
        %s673 = smul.addr %s672, 64
        %s674 = smul.addr %s673, 4
        %s675 = scalar_lea.vmem %s5, %s674
        %p676 = pneg %p195
        %p677 = pneg %p192
        %p678 = scmp.lt.s32.totalorder %s37, 1
        %s679 = scalar_select %p678, %s37, 1
        %s680 = smul.addr %s679, 2
        %s681 = scalar_lea.vmem %s6, %s680
        %p682 = pneg %p221
        %p683 = pneg %p218
        %p684 = scmp.lt.s32.totalorder %s37, 1
        %s685 = scalar_select %p684, %s37, 1
        %s686 = smul.addr %s685, 2
        %s687 = scalar_lea.vmem %s7, %s686
        %p688 = pneg %p247
        %p689 = pneg %p244
        %p690 = scmp.lt.s32.totalorder %s37, 1
        %s691 = scalar_select %p690, %s37, 1
        %s692 = smul.addr %s691, 2
        %s693 = scalar_lea.vmem %s8, %s692
        %p694 = pneg %p273
        %p695 = pneg %p270
        %s696 = sand.u32 %s32, 1
        %s697 = scalar_lea.sflag [#allocation6], %s696
        %s698 = sand.u32 %s286, 1
        %s699 = smul.addr %s698, 1024
        %s700 = scalar_lea.vmem [#allocation5], %s699
        %p701 = pneg %p299
        %p702 = pneg %p296
        %p703 = scmp.lt.s32.totalorder %s37, 1
        %s704 = scalar_select %p703, %s37, 1
        %s705 = smul.addr %s704, 8
        %s706 = scalar_lea.vmem %s10, %s705
        %p707 = pneg %p325
        %p708 = pneg %p322
        %s709 = sand.u32 %s32, 1
        %s710 = scalar_lea.sflag [#allocation6], %s709
        %s711 = sand.u32 %s338, 1
        %s712 = smul.addr %s711, 1024
        %s713 = scalar_lea.vmem [#allocation7], %s712
        %p714 = pneg %p351
        %p715 = pneg %p348
        %p716 = scmp.lt.s32.totalorder %s37, 1
        %s717 = scalar_select %p716, %s37, 1
        %s718 = smul.addr %s717, 2
        %s719 = scalar_lea.vmem %s12, %s718
        %p720 = pneg %p377
        %p721 = pneg %p374
        %p722 = pneg %p398
        %p723 = pneg %p395
        %p724 = pneg %p419
        %p725 = pneg %p416
        %p726 = pneg %p445
        %p727 = pneg %p442
        %p728 = scmp.lt.s32.totalorder %s36, 1
        %s729 = scalar_select %p728, %s36, 1
        %s730 = smul.addr %s729, 4
        %s731 = smul.addr %s730, 4
        %s732 = scalar_lea.vmem %s15, %s731
        %p733 = scmp.lt.s32.totalorder %s36, 1
        %s734 = scalar_select %p733, %s36, 1
        %s735 = smul.addr %s734, 4
        %s736 = smul.addr %s735, 8
        %s737 = scalar_lea.vmem %s0, %s736
        %p738 = scmp.lt.s32.totalorder %s37, 1
        %s739 = scalar_select %p738, %s37, 1
        %s740 = smul.addr %s739, 2
        %s741 = scalar_lea.vmem %s1, %s740
        %p742 = scmp.lt.s32.totalorder %s37, 1
        %s743 = scalar_select %p742, %s37, 1
        %s744 = smul.addr %s743, 2
        %s745 = scalar_lea.vmem %s2, %s744
        %p746 = scmp.lt.s32.totalorder %s37, 1
        %s747 = scalar_select %p746, %s37, 1
        %s748 = smul.addr %s747, 6
        %s749 = scalar_lea.vmem %s4, %s748
        %p750 = scmp.lt.s32.totalorder %s37, 1
        %s751 = scalar_select %p750, %s37, 1
        %s752 = smul.addr %s751, 64
        %s753 = smul.addr %s752, 4
        %s754 = scalar_lea.vmem %s5, %s753
        %p755 = scmp.lt.s32.totalorder %s37, 1
        %s756 = scalar_select %p755, %s37, 1
        %s757 = smul.addr %s756, 2
        %s758 = scalar_lea.vmem %s6, %s757
        %p759 = scmp.lt.s32.totalorder %s37, 1
        %s760 = scalar_select %p759, %s37, 1
        %s761 = smul.addr %s760, 2
        %s762 = scalar_lea.vmem %s7, %s761
        %p763 = scmp.lt.s32.totalorder %s37, 1
        %s764 = scalar_select %p763, %s37, 1
        %s765 = smul.addr %s764, 2
        %s766 = scalar_lea.vmem %s8, %s765
        %p767 = scmp.lt.s32.totalorder %s37, 1
        %s768 = scalar_select %p767, %s37, 1
        %s769 = smul.addr %s768, 8
        %s770 = scalar_lea.vmem %s10, %s769
        %p771 = scmp.lt.s32.totalorder %s37, 1
        %s772 = scalar_select %p771, %s37, 1
        %s773 = smul.addr %s772, 2
        %s774 = scalar_lea.vmem %s12, %s773
        %p775 = scmp.lt.s32.totalorder %s36, 1
        %s776 = scalar_select %p775, %s36, 1
        %s777 = smul.addr %s776, 4
        %s778 = smul.addr %s777, 4
        %s779 = scalar_lea.vmem %s15, %s778
        %p781 = scmp.eq.s32.totalorder %s37, 0
        // Predicated region
        $region93: #{_lambda_.2} parent=79 // pred_check
          %p782 = pneg %p781
        $region94: #{_lambda_.2} parent=79 // pred_check_branch
          %784 = sbr.rel (%p782) target = $region96
        $region95: #{_lambda_.2} parent=79 // pred_region
          %v785 = vld [vmem:[%s737] sm:$0xff]
          %v786 = vld [vmem:[%s737 + $0x8] sm:$0xff]
          %v787 = vld [vmem:[%s737 + $0x10] sm:$0xff]
          %v788 = vld [vmem:[%s737 + $0x18] sm:$0xff]
          %789 = vst [vmem:[#allocation2] sm:$0xff] %v785
          %790 = vst [vmem:[#allocation2 + $0x8] sm:$0xff] %v786
          %791 = vst [vmem:[#allocation2 + $0x10] sm:$0xff] %v787
          %792 = vst [vmem:[#allocation2 + $0x18] sm:$0xff] %v788
        $region96: #{_lambda_.2} parent=79 // pred_fallthru
          _
        %v793 = vld [vmem:[#allocation2] sm:$0xff]
        %v794 = vld [vmem:[#allocation2 + $0x8] sm:$0xff]
        %v795 = vld [vmem:[#allocation2 + $0x10] sm:$0xff]
        %v796 = vld [vmem:[#allocation2 + $0x18] sm:$0xff]
        %v797 = vld [vmem:[%s741] sm:$0x3]
        %v798 = vld [vmem:[%s745] sm:$0x3]
        %v799 = vadd.f32 %v793, %v794
        %800 = vadd.xlane.f32.xlu0 %v799
        %v801 = vpop.xlane.xlu0 %800
        %v802 = vadd.f32 %v795, %v796
        %803 = vadd.xlane.f32.xlu0 %v802
        %v804 = vpop.xlane.xlu0 %803
        %v805 = vrcp.pop 256.0
        %v806 = vmul.f32 %v801, %v805
        %v807 = vmul.f32 %v804, %v805
        %v808 = vsub.f32 %v793, %v806
        %v809 = vsub.f32 %v794, %v806
        %v810 = vsub.f32 %v795, %v807
        %v811 = vsub.f32 %v796, %v807
        %v812 = vmul.f32 %v808, %v808
        %v813 = vmul.f32 %v809, %v809
        %v814 = vmul.f32 %v810, %v810
        %v815 = vmul.f32 %v811, %v811
        %v816 = vadd.f32 %v812, %v813
        %817 = vadd.xlane.f32.xlu0 %v816
        %v818 = vpop.xlane.xlu0 %817
        %v819 = vadd.f32 %v814, %v815
        %820 = vadd.xlane.f32.xlu0 %v819
        %v821 = vpop.xlane.xlu0 %820
        %v822 = vmul.f32 %v818, %v805
        %v823 = vmul.f32 %v821, %v805
        %v824 = vadd.f32 %v822, 1e-05
        %v825 = vadd.f32 %v823, 1e-05
        %v826 = vrsqrt.pop %v824
        %v827 = vmul.f32 %v824, %v826
        %vm828 = vcmp.eq.f32.partialorder %v824, inf
        %v829 = vsel %vm828, %v824, %v827
        %vm830 = vcmp.eq.f32.partialorder %v824, 0.0
        %v831 = vand.u32 %v824, 2147483648
        %v832 = vsel %vm830, %v831, %v829
        %v833 = vrsqrt.pop %v825
        %v834 = vmul.f32 %v825, %v833
        %vm835 = vcmp.eq.f32.partialorder %v825, inf
        %v836 = vsel %vm835, %v825, %v834
        %vm837 = vcmp.eq.f32.partialorder %v825, 0.0
        %v838 = vand.u32 %v825, 2147483648
        %v839 = vsel %vm837, %v838, %v836
        %v840 = vrcp.pop %v832
        %v841 = vmul.f32 %v808, %v840
        %v842 = vmul.f32 %v809, %v840
        %v843 = vrcp.pop %v839
        %v844 = vmul.f32 %v810, %v843
        %v845 = vmul.f32 %v811, %v843
        %v847 = vlaneseq
        %v848 = vshrl.u32 %v847, 7
        %v849 = vsub.s32 0, %v848
        %v850 = vrot.slane %v797, %v849
        %v851 = vlaneseq
        %v852 = vshrl.u32 %v851, 7
        %v853 = vsub.s32 1, %v852
        %v854 = vrot.slane %v797, %v853
        %v857 = vmul.f32 %v850, %v841
        %v858 = vmul.f32 %v854, %v842
        %v859 = vmul.f32 %v850, %v844
        %v860 = vmul.f32 %v854, %v845
        %v862 = vlaneseq
        %v863 = vshrl.u32 %v862, 7
        %v864 = vsub.s32 0, %v863
        %v865 = vrot.slane %v798, %v864
        %v866 = vlaneseq
        %v867 = vshrl.u32 %v866, 7
        %v868 = vsub.s32 1, %v867
        %v869 = vrot.slane %v798, %v868
        %v872 = vadd.f32 %v857, %v865
        %v873 = vadd.f32 %v858, %v869
        %v874 = vadd.f32 %v859, %v865
        %v875 = vadd.f32 %v860, %v869
        %v876 = vpack.c.bf16 %v874, %v872
        %v877 = vpack.c.bf16 %v875, %v873
        %v878 = vld [vmem:[%s616] sm:$0xff]
        %v879 = vld [vmem:[%s616 + $0x8] sm:$0xff]
        %v880 = vld [vmem:[%s616 + $0x10] sm:$0xff]
        %v881 = vld [vmem:[%s616 + $0x18] sm:$0xff]
        %v882 = vld [vmem:[%s616 + $0x20] sm:$0xff]
        %v883 = vld [vmem:[%s616 + $0x28] sm:$0xff]
        %v884 = vld [vmem:[%s616 + $0x30] sm:$0xff]
        %v885 = vld [vmem:[%s616 + $0x38] sm:$0xff]
        %v886 = vld [vmem:[%s616 + $0x40] sm:$0xff]
        %v887 = vld [vmem:[%s616 + $0x48] sm:$0xff]
        %v888 = vld [vmem:[%s616 + $0x50] sm:$0xff]
        %v889 = vld [vmem:[%s616 + $0x58] sm:$0xff]
        %v890 = vld [vmem:[%s616 + $0x60] sm:$0xff]
        %v891 = vld [vmem:[%s616 + $0x68] sm:$0xff]
        %v892 = vld [vmem:[%s616 + $0x70] sm:$0xff]
        %v893 = vld [vmem:[%s616 + $0x78] sm:$0xff]
        %v894 = vld [vmem:[%s616 + $0x80] sm:$0xff]
        %v895 = vld [vmem:[%s616 + $0x88] sm:$0xff]
        %v896 = vld [vmem:[%s616 + $0x90] sm:$0xff]
        %v897 = vld [vmem:[%s616 + $0x98] sm:$0xff]
        %v898 = vld [vmem:[%s616 + $0xa0] sm:$0xff]
        %v899 = vld [vmem:[%s616 + $0xa8] sm:$0xff]
        %v900 = vld [vmem:[%s616 + $0xb0] sm:$0xff]
        %v901 = vld [vmem:[%s616 + $0xb8] sm:$0xff]
        %v902 = vld [vmem:[%s616 + $0xc0] sm:$0xff]
        %v903 = vld [vmem:[%s616 + $0xc8] sm:$0xff]
        %v904 = vld [vmem:[%s616 + $0xd0] sm:$0xff]
        %v905 = vld [vmem:[%s616 + $0xd8] sm:$0xff]
        %v906 = vld [vmem:[%s616 + $0xe0] sm:$0xff]
        %v907 = vld [vmem:[%s616 + $0xe8] sm:$0xff]
        %v908 = vld [vmem:[%s616 + $0xf0] sm:$0xff]
        %v909 = vld [vmem:[%s616 + $0xf8] sm:$0xff]
        %v910 = vld [vmem:[%s616 + $0x100] sm:$0xff]
        %v911 = vld [vmem:[%s616 + $0x108] sm:$0xff]
        %v912 = vld [vmem:[%s616 + $0x110] sm:$0xff]
        %v913 = vld [vmem:[%s616 + $0x118] sm:$0xff]
        %v914 = vld [vmem:[%s616 + $0x120] sm:$0xff]
        %v915 = vld [vmem:[%s616 + $0x128] sm:$0xff]
        %v916 = vld [vmem:[%s616 + $0x130] sm:$0xff]
        %v917 = vld [vmem:[%s616 + $0x138] sm:$0xff]
        %v918 = vld [vmem:[%s616 + $0x140] sm:$0xff]
        %v919 = vld [vmem:[%s616 + $0x148] sm:$0xff]
        %v920 = vld [vmem:[%s616 + $0x150] sm:$0xff]
        %v921 = vld [vmem:[%s616 + $0x158] sm:$0xff]
        %v922 = vld [vmem:[%s616 + $0x160] sm:$0xff]
        %v923 = vld [vmem:[%s616 + $0x168] sm:$0xff]
        %v924 = vld [vmem:[%s616 + $0x170] sm:$0xff]
        %v925 = vld [vmem:[%s616 + $0x178] sm:$0xff]
        %v926 = vld [vmem:[%s616 + $0x180] sm:$0xff]
        %v927 = vld [vmem:[%s616 + $0x188] sm:$0xff]
        %v928 = vld [vmem:[%s616 + $0x190] sm:$0xff]
        %v929 = vld [vmem:[%s616 + $0x198] sm:$0xff]
        %v930 = vld [vmem:[%s616 + $0x1a0] sm:$0xff]
        %v931 = vld [vmem:[%s616 + $0x1a8] sm:$0xff]
        %v932 = vld [vmem:[%s616 + $0x1b0] sm:$0xff]
        %v933 = vld [vmem:[%s616 + $0x1b8] sm:$0xff]
        %v934 = vld [vmem:[%s616 + $0x1c0] sm:$0xff]
        %v935 = vld [vmem:[%s616 + $0x1c8] sm:$0xff]
        %v936 = vld [vmem:[%s616 + $0x1d0] sm:$0xff]
        %v937 = vld [vmem:[%s616 + $0x1d8] sm:$0xff]
        %v938 = vld [vmem:[%s616 + $0x1e0] sm:$0xff]
        %v939 = vld [vmem:[%s616 + $0x1e8] sm:$0xff]
        %v940 = vld [vmem:[%s616 + $0x1f0] sm:$0xff]
        %v941 = vld [vmem:[%s616 + $0x1f8] sm:$0xff]
        %v942 = vld [vmem:[%s616 + $0x200] sm:$0xff]
        %v943 = vld [vmem:[%s616 + $0x208] sm:$0xff]
        %v944 = vld [vmem:[%s616 + $0x210] sm:$0xff]
        %v945 = vld [vmem:[%s616 + $0x218] sm:$0xff]
        %v946 = vld [vmem:[%s616 + $0x220] sm:$0xff]
        %v947 = vld [vmem:[%s616 + $0x228] sm:$0xff]
        %v948 = vld [vmem:[%s616 + $0x230] sm:$0xff]
        %v949 = vld [vmem:[%s616 + $0x238] sm:$0xff]
        %v950 = vld [vmem:[%s616 + $0x240] sm:$0xff]
        %v951 = vld [vmem:[%s616 + $0x248] sm:$0xff]
        %v952 = vld [vmem:[%s616 + $0x250] sm:$0xff]
        %v953 = vld [vmem:[%s616 + $0x258] sm:$0xff]
        %v954 = vld [vmem:[%s616 + $0x260] sm:$0xff]
        %v955 = vld [vmem:[%s616 + $0x268] sm:$0xff]
        %v956 = vld [vmem:[%s616 + $0x270] sm:$0xff]
        %v957 = vld [vmem:[%s616 + $0x278] sm:$0xff]
        %v958 = vld [vmem:[%s616 + $0x280] sm:$0xff]
        %v959 = vld [vmem:[%s616 + $0x288] sm:$0xff]
        %v960 = vld [vmem:[%s616 + $0x290] sm:$0xff]
        %v961 = vld [vmem:[%s616 + $0x298] sm:$0xff]
        %v962 = vld [vmem:[%s616 + $0x2a0] sm:$0xff]
        %v963 = vld [vmem:[%s616 + $0x2a8] sm:$0xff]
        %v964 = vld [vmem:[%s616 + $0x2b0] sm:$0xff]
        %v965 = vld [vmem:[%s616 + $0x2b8] sm:$0xff]
        %v966 = vld [vmem:[%s616 + $0x2c0] sm:$0xff]
        %v967 = vld [vmem:[%s616 + $0x2c8] sm:$0xff]
        %v968 = vld [vmem:[%s616 + $0x2d0] sm:$0xff]
        %v969 = vld [vmem:[%s616 + $0x2d8] sm:$0xff]
        %v970 = vld [vmem:[%s616 + $0x2e0] sm:$0xff]
        %v971 = vld [vmem:[%s616 + $0x2e8] sm:$0xff]
        %v972 = vld [vmem:[%s616 + $0x2f0] sm:$0xff]
        %v973 = vld [vmem:[%s616 + $0x2f8] sm:$0xff]
        %v974 = vld [vmem:[%s749] sm:$0x3f]
        %v976 = vlaneseq
        %v977 = vshrl.u32 %v976, 7
        %v978 = vsub.s32 0, %v977
        %v979 = vrot.slane %v974, %v978
        %v980 = vlaneseq
        %v981 = vshrl.u32 %v980, 7
        %v982 = vsub.s32 1, %v981
        %v983 = vrot.slane %v974, %v982
        %v984 = vlaneseq
        %v985 = vshrl.u32 %v984, 7
        %v986 = vsub.s32 2, %v985
        %v987 = vrot.slane %v974, %v986
        %v988 = vlaneseq
        %v989 = vshrl.u32 %v988, 7
        %v990 = vsub.s32 3, %v989
        %v991 = vrot.slane %v974, %v990
        %v992 = vlaneseq
        %v993 = vshrl.u32 %v992, 7
        %v994 = vsub.s32 4, %v993
        %v995 = vrot.slane %v974, %v994
        %v996 = vlaneseq
        %v997 = vshrl.u32 %v996, 7
        %v998 = vsub.s32 5, %v997
        %v999 = vrot.slane %v974, %v998
        %v1102 = vunpack.c.l.b16 %v878
        %v1103 = vunpack.c.h.b16 %v878
        %v1104 = vunpack.c.l.b16 %v879
        %v1105 = vunpack.c.h.b16 %v879
        %v1106 = vunpack.c.l.b16 %v880
        %v1107 = vunpack.c.h.b16 %v880
        %v1108 = vunpack.c.l.b16 %v881
        %v1109 = vunpack.c.h.b16 %v881
        %v1110 = vunpack.c.l.b16 %v882
        %v1111 = vunpack.c.h.b16 %v882
        %v1112 = vunpack.c.l.b16 %v883
        %v1113 = vunpack.c.h.b16 %v883
        %v1114 = vunpack.c.l.b16 %v884
        %v1115 = vunpack.c.h.b16 %v884
        %v1116 = vunpack.c.l.b16 %v885
        %v1117 = vunpack.c.h.b16 %v885
        %v1118 = vunpack.c.l.b16 %v886
        %v1119 = vunpack.c.h.b16 %v886
        %v1120 = vunpack.c.l.b16 %v887
        %v1121 = vunpack.c.h.b16 %v887
        %v1122 = vunpack.c.l.b16 %v888
        %v1123 = vunpack.c.h.b16 %v888
        %v1124 = vunpack.c.l.b16 %v889
        %v1125 = vunpack.c.h.b16 %v889
        %v1126 = vunpack.c.l.b16 %v890
        %v1127 = vunpack.c.h.b16 %v890
        %v1128 = vunpack.c.l.b16 %v891
        %v1129 = vunpack.c.h.b16 %v891
        %v1130 = vunpack.c.l.b16 %v892
        %v1131 = vunpack.c.h.b16 %v892
        %v1132 = vunpack.c.l.b16 %v893
        %v1133 = vunpack.c.h.b16 %v893
        %v1134 = vunpack.c.l.b16 %v894
        %v1135 = vunpack.c.h.b16 %v894
        %v1136 = vunpack.c.l.b16 %v895
        %v1137 = vunpack.c.h.b16 %v895
        %v1138 = vunpack.c.l.b16 %v896
        %v1139 = vunpack.c.h.b16 %v896
        %v1140 = vunpack.c.l.b16 %v897
        %v1141 = vunpack.c.h.b16 %v897
        %v1142 = vunpack.c.l.b16 %v898
        %v1143 = vunpack.c.h.b16 %v898
        %v1144 = vunpack.c.l.b16 %v899
        %v1145 = vunpack.c.h.b16 %v899
        %v1146 = vunpack.c.l.b16 %v900
        %v1147 = vunpack.c.h.b16 %v900
        %v1148 = vunpack.c.l.b16 %v901
        %v1149 = vunpack.c.h.b16 %v901
        %v1150 = vunpack.c.l.b16 %v902
        %v1151 = vunpack.c.h.b16 %v902
        %v1152 = vunpack.c.l.b16 %v903
        %v1153 = vunpack.c.h.b16 %v903
        %v1154 = vunpack.c.l.b16 %v904
        %v1155 = vunpack.c.h.b16 %v904
        %v1156 = vunpack.c.l.b16 %v905
        %v1157 = vunpack.c.h.b16 %v905
        %v1158 = vunpack.c.l.b16 %v906
        %v1159 = vunpack.c.h.b16 %v906
        %v1160 = vunpack.c.l.b16 %v907
        %v1161 = vunpack.c.h.b16 %v907
        %v1162 = vunpack.c.l.b16 %v908
        %v1163 = vunpack.c.h.b16 %v908
        %v1164 = vunpack.c.l.b16 %v909
        %v1165 = vunpack.c.h.b16 %v909
        %v1166 = vunpack.c.l.b16 %v910
        %v1167 = vunpack.c.h.b16 %v910
        %v1168 = vunpack.c.l.b16 %v911
        %v1169 = vunpack.c.h.b16 %v911
        %v1170 = vunpack.c.l.b16 %v912
        %v1171 = vunpack.c.h.b16 %v912
        %v1172 = vunpack.c.l.b16 %v913
        %v1173 = vunpack.c.h.b16 %v913
        %v1174 = vunpack.c.l.b16 %v914
        %v1175 = vunpack.c.h.b16 %v914
        %v1176 = vunpack.c.l.b16 %v915
        %v1177 = vunpack.c.h.b16 %v915
        %v1178 = vunpack.c.l.b16 %v916
        %v1179 = vunpack.c.h.b16 %v916
        %v1180 = vunpack.c.l.b16 %v917
        %v1181 = vunpack.c.h.b16 %v917
        %v1182 = vunpack.c.l.b16 %v918
        %v1183 = vunpack.c.h.b16 %v918
        %v1184 = vunpack.c.l.b16 %v919
        %v1185 = vunpack.c.h.b16 %v919
        %v1186 = vunpack.c.l.b16 %v920
        %v1187 = vunpack.c.h.b16 %v920
        %v1188 = vunpack.c.l.b16 %v921
        %v1189 = vunpack.c.h.b16 %v921
        %v1190 = vunpack.c.l.b16 %v922
        %v1191 = vunpack.c.h.b16 %v922
        %v1192 = vunpack.c.l.b16 %v923
        %v1193 = vunpack.c.h.b16 %v923
        %v1194 = vunpack.c.l.b16 %v924
        %v1195 = vunpack.c.h.b16 %v924
        %v1196 = vunpack.c.l.b16 %v925
        %v1197 = vunpack.c.h.b16 %v925
        %v1198 = vunpack.c.l.b16 %v926
        %v1199 = vunpack.c.h.b16 %v926
        %v1200 = vunpack.c.l.b16 %v927
        %v1201 = vunpack.c.h.b16 %v927
        %v1202 = vunpack.c.l.b16 %v928
        %v1203 = vunpack.c.h.b16 %v928
        %v1204 = vunpack.c.l.b16 %v929
        %v1205 = vunpack.c.h.b16 %v929
        %v1206 = vunpack.c.l.b16 %v930
        %v1207 = vunpack.c.h.b16 %v930
        %v1208 = vunpack.c.l.b16 %v931
        %v1209 = vunpack.c.h.b16 %v931
        %v1210 = vunpack.c.l.b16 %v932
        %v1211 = vunpack.c.h.b16 %v932
        %v1212 = vunpack.c.l.b16 %v933
        %v1213 = vunpack.c.h.b16 %v933
        %v1214 = vunpack.c.l.b16 %v934
        %v1215 = vunpack.c.h.b16 %v934
        %v1216 = vunpack.c.l.b16 %v935
        %v1217 = vunpack.c.h.b16 %v935
        %v1218 = vunpack.c.l.b16 %v936
        %v1219 = vunpack.c.h.b16 %v936
        %v1220 = vunpack.c.l.b16 %v937
        %v1221 = vunpack.c.h.b16 %v937
        %v1222 = vunpack.c.l.b16 %v938
        %v1223 = vunpack.c.h.b16 %v938
        %v1224 = vunpack.c.l.b16 %v939
        %v1225 = vunpack.c.h.b16 %v939
        %v1226 = vunpack.c.l.b16 %v940
        %v1227 = vunpack.c.h.b16 %v940
        %v1228 = vunpack.c.l.b16 %v941
        %v1229 = vunpack.c.h.b16 %v941
        %v1230 = vunpack.c.l.b16 %v942
        %v1231 = vunpack.c.h.b16 %v942
        %v1232 = vunpack.c.l.b16 %v943
        %v1233 = vunpack.c.h.b16 %v943
        %v1234 = vunpack.c.l.b16 %v944
        %v1235 = vunpack.c.h.b16 %v944
        %v1236 = vunpack.c.l.b16 %v945
        %v1237 = vunpack.c.h.b16 %v945
        %v1238 = vunpack.c.l.b16 %v946
        %v1239 = vunpack.c.h.b16 %v946
        %v1240 = vunpack.c.l.b16 %v947
        %v1241 = vunpack.c.h.b16 %v947
        %v1242 = vunpack.c.l.b16 %v948
        %v1243 = vunpack.c.h.b16 %v948
        %v1244 = vunpack.c.l.b16 %v949
        %v1245 = vunpack.c.h.b16 %v949
        %v1246 = vunpack.c.l.b16 %v950
        %v1247 = vunpack.c.h.b16 %v950
        %v1248 = vunpack.c.l.b16 %v951
        %v1249 = vunpack.c.h.b16 %v951
        %v1250 = vunpack.c.l.b16 %v952
        %v1251 = vunpack.c.h.b16 %v952
        %v1252 = vunpack.c.l.b16 %v953
        %v1253 = vunpack.c.h.b16 %v953
        %v1254 = vunpack.c.l.b16 %v954
        %v1255 = vunpack.c.h.b16 %v954
        %v1256 = vunpack.c.l.b16 %v955
        %v1257 = vunpack.c.h.b16 %v955
        %v1258 = vunpack.c.l.b16 %v956
        %v1259 = vunpack.c.h.b16 %v956
        %v1260 = vunpack.c.l.b16 %v957
        %v1261 = vunpack.c.h.b16 %v957
        %v1262 = vunpack.c.l.b16 %v958
        %v1263 = vunpack.c.h.b16 %v958
        %v1264 = vunpack.c.l.b16 %v959
        %v1265 = vunpack.c.h.b16 %v959
        %v1266 = vunpack.c.l.b16 %v960
        %v1267 = vunpack.c.h.b16 %v960
        %v1268 = vunpack.c.l.b16 %v961
        %v1269 = vunpack.c.h.b16 %v961
        %v1270 = vunpack.c.l.b16 %v962
        %v1271 = vunpack.c.h.b16 %v962
        %v1272 = vunpack.c.l.b16 %v963
        %v1273 = vunpack.c.h.b16 %v963
        %v1274 = vunpack.c.l.b16 %v964
        %v1275 = vunpack.c.h.b16 %v964
        %v1276 = vunpack.c.l.b16 %v965
        %v1277 = vunpack.c.h.b16 %v965
        %v1278 = vunpack.c.l.b16 %v966
        %v1279 = vunpack.c.h.b16 %v966
        %v1280 = vunpack.c.l.b16 %v967
        %v1281 = vunpack.c.h.b16 %v967
        %v1282 = vunpack.c.l.b16 %v968
        %v1283 = vunpack.c.h.b16 %v968
        %v1284 = vunpack.c.l.b16 %v969
        %v1285 = vunpack.c.h.b16 %v969
        %v1286 = vunpack.c.l.b16 %v970
        %v1287 = vunpack.c.h.b16 %v970
        %v1288 = vunpack.c.l.b16 %v971
        %v1289 = vunpack.c.h.b16 %v971
        %v1290 = vunpack.c.l.b16 %v972
        %v1291 = vunpack.c.h.b16 %v972
        %v1292 = vunpack.c.l.b16 %v973
        %v1293 = vunpack.c.h.b16 %v973
        %v1294 = vpack.c.b16 %v1108, %v1102
        %v1295 = vpack.c.b16 %v1109, %v1103
        %v1296 = vpack.c.b16 %v1110, %v1104
        %v1297 = vpack.c.b16 %v1111, %v1105
        %v1298 = vpack.c.b16 %v1112, %v1106
        %v1299 = vpack.c.b16 %v1113, %v1107
        %v1300 = vpack.c.b16 %v1120, %v1114
        %v1301 = vpack.c.b16 %v1121, %v1115
        %v1302 = vpack.c.b16 %v1122, %v1116
        %v1303 = vpack.c.b16 %v1123, %v1117
        %v1304 = vpack.c.b16 %v1124, %v1118
        %v1305 = vpack.c.b16 %v1125, %v1119
        %v1306 = vpack.c.b16 %v1132, %v1126
        %v1307 = vpack.c.b16 %v1133, %v1127
        %v1308 = vpack.c.b16 %v1134, %v1128
        %v1309 = vpack.c.b16 %v1135, %v1129
        %v1310 = vpack.c.b16 %v1136, %v1130
        %v1311 = vpack.c.b16 %v1137, %v1131
        %v1312 = vpack.c.b16 %v1144, %v1138
        %v1313 = vpack.c.b16 %v1145, %v1139
        %v1314 = vpack.c.b16 %v1146, %v1140
        %v1315 = vpack.c.b16 %v1147, %v1141
        %v1316 = vpack.c.b16 %v1148, %v1142
        %v1317 = vpack.c.b16 %v1149, %v1143
        %v1318 = vpack.c.b16 %v1156, %v1150
        %v1319 = vpack.c.b16 %v1157, %v1151
        %v1320 = vpack.c.b16 %v1158, %v1152
        %v1321 = vpack.c.b16 %v1159, %v1153
        %v1322 = vpack.c.b16 %v1160, %v1154
        %v1323 = vpack.c.b16 %v1161, %v1155
        %v1324 = vpack.c.b16 %v1168, %v1162
        %v1325 = vpack.c.b16 %v1169, %v1163
        %v1326 = vpack.c.b16 %v1170, %v1164
        %v1327 = vpack.c.b16 %v1171, %v1165
        %v1328 = vpack.c.b16 %v1172, %v1166
        %v1329 = vpack.c.b16 %v1173, %v1167
        %v1330 = vpack.c.b16 %v1180, %v1174
        %v1331 = vpack.c.b16 %v1181, %v1175
        %v1332 = vpack.c.b16 %v1182, %v1176
        %v1333 = vpack.c.b16 %v1183, %v1177
        %v1334 = vpack.c.b16 %v1184, %v1178
        %v1335 = vpack.c.b16 %v1185, %v1179
        %v1336 = vpack.c.b16 %v1192, %v1186
        %v1337 = vpack.c.b16 %v1193, %v1187
        %v1338 = vpack.c.b16 %v1194, %v1188
        %v1339 = vpack.c.b16 %v1195, %v1189
        %v1340 = vpack.c.b16 %v1196, %v1190
        %v1341 = vpack.c.b16 %v1197, %v1191
        %v1342 = vpack.c.b16 %v1204, %v1198
        %v1343 = vpack.c.b16 %v1205, %v1199
        %v1344 = vpack.c.b16 %v1206, %v1200
        %v1345 = vpack.c.b16 %v1207, %v1201
        %v1346 = vpack.c.b16 %v1208, %v1202
        %v1347 = vpack.c.b16 %v1209, %v1203
        %v1348 = vpack.c.b16 %v1216, %v1210
        %v1349 = vpack.c.b16 %v1217, %v1211
        %v1350 = vpack.c.b16 %v1218, %v1212
        %v1351 = vpack.c.b16 %v1219, %v1213
        %v1352 = vpack.c.b16 %v1220, %v1214
        %v1353 = vpack.c.b16 %v1221, %v1215
        %v1354 = vpack.c.b16 %v1228, %v1222
        %v1355 = vpack.c.b16 %v1229, %v1223
        %v1356 = vpack.c.b16 %v1230, %v1224
        %v1357 = vpack.c.b16 %v1231, %v1225
        %v1358 = vpack.c.b16 %v1232, %v1226
        %v1359 = vpack.c.b16 %v1233, %v1227
        %v1360 = vpack.c.b16 %v1240, %v1234
        %v1361 = vpack.c.b16 %v1241, %v1235
        %v1362 = vpack.c.b16 %v1242, %v1236
        %v1363 = vpack.c.b16 %v1243, %v1237
        %v1364 = vpack.c.b16 %v1244, %v1238
        %v1365 = vpack.c.b16 %v1245, %v1239
        %v1366 = vpack.c.b16 %v1252, %v1246
        %v1367 = vpack.c.b16 %v1253, %v1247
        %v1368 = vpack.c.b16 %v1254, %v1248
        %v1369 = vpack.c.b16 %v1255, %v1249
        %v1370 = vpack.c.b16 %v1256, %v1250
        %v1371 = vpack.c.b16 %v1257, %v1251
        %v1372 = vpack.c.b16 %v1264, %v1258
        %v1373 = vpack.c.b16 %v1265, %v1259
        %v1374 = vpack.c.b16 %v1266, %v1260
        %v1375 = vpack.c.b16 %v1267, %v1261
        %v1376 = vpack.c.b16 %v1268, %v1262
        %v1377 = vpack.c.b16 %v1269, %v1263
        %v1378 = vpack.c.b16 %v1276, %v1270
        %v1379 = vpack.c.b16 %v1277, %v1271
        %v1380 = vpack.c.b16 %v1278, %v1272
        %v1381 = vpack.c.b16 %v1279, %v1273
        %v1382 = vpack.c.b16 %v1280, %v1274
        %v1383 = vpack.c.b16 %v1281, %v1275
        %v1384 = vpack.c.b16 %v1288, %v1282
        %v1385 = vpack.c.b16 %v1289, %v1283
        %v1386 = vpack.c.b16 %v1290, %v1284
        %v1387 = vpack.c.b16 %v1291, %v1285
        %v1388 = vpack.c.b16 %v1292, %v1286
        %v1389 = vpack.c.b16 %v1293, %v1287
        %1486 = vmatprep.subr.bf16.mxu0 %v1295
        %1487 = vmatpush1.bf16.msra.mxu0 %v1294
        %1488 = vmatprep.subr.bf16.mxu0 %v1301
        %1489 = vmatpush1.bf16.msra.mxu0 %v1300
        %1490 = vmatprep.subr.bf16.mxu0 %v1307
        %1491 = vmatpush1.bf16.msra.mxu0 %v1306
        %1492 = vmatprep.subr.bf16.mxu0 %v1313
        %1493 = vmatpush1.bf16.msra.mxu0 %v1312
        %1494 = vmatprep.subr.bf16.mxu0 %v1319
        %1495 = vmatpush1.bf16.msra.mxu0 %v1318
        %1496 = vmatprep.subr.bf16.mxu0 %v1325
        %1497 = vmatpush1.bf16.msra.mxu0 %v1324
        %1498 = vmatprep.subr.bf16.mxu0 %v1331
        %1499 = vmatpush1.bf16.msra.mxu0 %v1330
        %1500 = vmatprep.subr.bf16.mxu0 %v1337
        %1501 = vmatpush1.bf16.msra.mxu0 %v1336
        %1502 = vmatprep.subr.bf16.mxu0 %v1343
        %1503 = vmatpush1.bf16.msra.mxu0 %v1342
        %1504 = vmatprep.subr.bf16.mxu0 %v1349
        %1505 = vmatpush1.bf16.msra.mxu0 %v1348
        %1506 = vmatprep.subr.bf16.mxu0 %v1355
        %1507 = vmatpush1.bf16.msra.mxu0 %v1354
        %1508 = vmatprep.subr.bf16.mxu0 %v1361
        %1509 = vmatpush1.bf16.msra.mxu0 %v1360
        %1510 = vmatprep.subr.bf16.mxu0 %v1367
        %1511 = vmatpush1.bf16.msra.mxu0 %v1366
        %1512 = vmatprep.subr.bf16.mxu0 %v1373
        %1513 = vmatpush1.bf16.msra.mxu0 %v1372
        %1514 = vmatprep.subr.bf16.mxu0 %v1379
        %1515 = vmatpush1.bf16.msra.mxu0 %v1378
        %1516 = vmatprep.subr.bf16.mxu0 %v1385
        %1517 = vmatpush1.bf16.msra.mxu0 %v1384
        %1518 = vmatprep.mubr.bf16.mxu0 %v877
        %1519 = vmatmul.mubr.bf16.gmra.mrb[0].mxu0 %v876
        %v1520 = vpop.f32.mrb[0].mxu0
        %v1521 = vadd.f32 %v979, %v1520
        %v1522 = vpop.f32.mrb[0].mxu0
        %v1523 = vadd.f32 %v983, %v1522
        %v1524 = vpop.f32.mrb[0].mxu0
        %v1525 = vadd.f32 %v979, %v1524
        %v1526 = vpop.f32.mrb[0].mxu0
        %v1527 = vadd.f32 %v983, %v1526
        %1528 = vdwg.mxu0
        %1529 = vmatprep.subr.bf16.mxu0 %v1297
        %1530 = vmatpush1.bf16.msra.mxu0 %v1296
        %1531 = vmatprep.subr.bf16.mxu0 %v1303
        %1532 = vmatpush1.bf16.msra.mxu0 %v1302
        %1533 = vmatprep.subr.bf16.mxu0 %v1309
        %1534 = vmatpush1.bf16.msra.mxu0 %v1308
        %1535 = vmatprep.subr.bf16.mxu0 %v1315
        %1536 = vmatpush1.bf16.msra.mxu0 %v1314
        %1537 = vmatprep.subr.bf16.mxu0 %v1321
        %1538 = vmatpush1.bf16.msra.mxu0 %v1320
        %1539 = vmatprep.subr.bf16.mxu0 %v1327
        %1540 = vmatpush1.bf16.msra.mxu0 %v1326
        %1541 = vmatprep.subr.bf16.mxu0 %v1333
        %1542 = vmatpush1.bf16.msra.mxu0 %v1332
        %1543 = vmatprep.subr.bf16.mxu0 %v1339
        %1544 = vmatpush1.bf16.msra.mxu0 %v1338
        %1545 = vmatprep.subr.bf16.mxu0 %v1345
        %1546 = vmatpush1.bf16.msra.mxu0 %v1344
        %1547 = vmatprep.subr.bf16.mxu0 %v1351
        %1548 = vmatpush1.bf16.msra.mxu0 %v1350
        %1549 = vmatprep.subr.bf16.mxu0 %v1357
        %1550 = vmatpush1.bf16.msra.mxu0 %v1356
        %1551 = vmatprep.subr.bf16.mxu0 %v1363
        %1552 = vmatpush1.bf16.msra.mxu0 %v1362
        %1553 = vmatprep.subr.bf16.mxu0 %v1369
        %1554 = vmatpush1.bf16.msra.mxu0 %v1368
        %1555 = vmatprep.subr.bf16.mxu0 %v1375
        %1556 = vmatpush1.bf16.msra.mxu0 %v1374
        %1557 = vmatprep.subr.bf16.mxu0 %v1381
        %1558 = vmatpush1.bf16.msra.mxu0 %v1380
        %1559 = vmatprep.subr.bf16.mxu0 %v1387
        %1560 = vmatpush1.bf16.msra.mxu0 %v1386
        %1561 = vmatprep.mubr.bf16.mxu0 %v877
        %1562 = vmatmul.mubr.bf16.gmra.mrb[0].mxu0 %v876
        %v1563 = vpop.f32.mrb[0].mxu0
        %v1564 = vadd.f32 %v987, %v1563
        %v1565 = vpop.f32.mrb[0].mxu0
        %v1566 = vadd.f32 %v991, %v1565
        %v1567 = vpop.f32.mrb[0].mxu0
        %v1568 = vadd.f32 %v987, %v1567
        %v1569 = vpop.f32.mrb[0].mxu0
        %v1570 = vadd.f32 %v991, %v1569
        %1571 = vdwg.mxu0
        %1572 = vmatprep.subr.bf16.mxu0 %v1299
        %1573 = vmatpush1.bf16.msra.mxu0 %v1298
        %1574 = vmatprep.subr.bf16.mxu0 %v1305
        %1575 = vmatpush1.bf16.msra.mxu0 %v1304
        %1576 = vmatprep.subr.bf16.mxu0 %v1311
        %1577 = vmatpush1.bf16.msra.mxu0 %v1310
        %1578 = vmatprep.subr.bf16.mxu0 %v1317
        %1579 = vmatpush1.bf16.msra.mxu0 %v1316
        %1580 = vmatprep.subr.bf16.mxu0 %v1323
        %1581 = vmatpush1.bf16.msra.mxu0 %v1322
        %1582 = vmatprep.subr.bf16.mxu0 %v1329
        %1583 = vmatpush1.bf16.msra.mxu0 %v1328
        %1584 = vmatprep.subr.bf16.mxu0 %v1335
        %1585 = vmatpush1.bf16.msra.mxu0 %v1334
        %1586 = vmatprep.subr.bf16.mxu0 %v1341
        %1587 = vmatpush1.bf16.msra.mxu0 %v1340
        %1588 = vmatprep.subr.bf16.mxu0 %v1347
        %1589 = vmatpush1.bf16.msra.mxu0 %v1346
        %1590 = vmatprep.subr.bf16.mxu0 %v1353
        %1591 = vmatpush1.bf16.msra.mxu0 %v1352
        %1592 = vmatprep.subr.bf16.mxu0 %v1359
        %1593 = vmatpush1.bf16.msra.mxu0 %v1358
        %1594 = vmatprep.subr.bf16.mxu0 %v1365
        %1595 = vmatpush1.bf16.msra.mxu0 %v1364
        %1596 = vmatprep.subr.bf16.mxu0 %v1371
        %1597 = vmatpush1.bf16.msra.mxu0 %v1370
        %1598 = vmatprep.subr.bf16.mxu0 %v1377
        %1599 = vmatpush1.bf16.msra.mxu0 %v1376
        %1600 = vmatprep.subr.bf16.mxu0 %v1383
        %1601 = vmatpush1.bf16.msra.mxu0 %v1382
        %1602 = vmatprep.subr.bf16.mxu0 %v1389
        %1603 = vmatpush1.bf16.msra.mxu0 %v1388
        %1604 = vmatprep.mubr.bf16.mxu0 %v877
        %1605 = vmatmul.mubr.bf16.gmra.mrb[0].mxu0 %v876
        %v1606 = vpop.f32.mrb[0].mxu0
        %v1607 = vadd.f32 %v995, %v1606
        %v1608 = vpop.f32.mrb[0].mxu0
        %v1609 = vadd.f32 %v999, %v1608
        %v1610 = vpop.f32.mrb[0].mxu0
        %v1611 = vadd.f32 %v995, %v1610
        %v1612 = vpop.f32.mrb[0].mxu0
        %v1613 = vadd.f32 %v999, %v1612
        %1614 = vdwg.mxu0
        %v1615 = vcombine.high %v1521, 0.0
        %v1617 = vunpack.c.l.s4 1983009808
        %v1618 = vunpack.c.0.s8 %v1617
        %v1619 = vlaneseq
        %v1620 = vshrl.u32 %v1619, 7
        %v1621 = vsub.s32 %v1618, %v1620
        %v1622 = vrot.slane %v1521, %v1621
        %v1624 = vunpack.c.l.s4 1983009808
        %v1625 = vunpack.c.0.s8 %v1624
        %v1626 = vlaneseq
        %v1627 = vshrl.u32 %v1626, 7
        %v1628 = vsub.s32 %v1625, %v1627
        %v1629 = vrot.slane %v1615, %v1628
        %v1630 = vcombine.high %v1523, 0.0
        %v1632 = vunpack.c.l.s4 1983009808
        %v1633 = vunpack.c.0.s8 %v1632
        %v1634 = vlaneseq
        %v1635 = vshrl.u32 %v1634, 7
        %v1636 = vsub.s32 %v1633, %v1635
        %v1637 = vrot.slane %v1523, %v1636
        %v1639 = vunpack.c.l.s4 1983009808
        %v1640 = vunpack.c.0.s8 %v1639
        %v1641 = vlaneseq
        %v1642 = vshrl.u32 %v1641, 7
        %v1643 = vsub.s32 %v1640, %v1642
        %v1644 = vrot.slane %v1630, %v1643
        %v1645 = vcombine.low %v1622, %v1637
        %v1646 = vcombine.high %v1622, %v1637
        %v1648 = vunpack.c.l.s4 1934713408
        %v1649 = vunpack.c.0.s8 %v1648
        %v1650 = vlaneseq
        %v1651 = vshrl.u32 %v1650, 7
        %v1652 = vsub.s32 %v1649, %v1651
        %v1653 = vrot.slane %v1645, %v1652
        %v1655 = vunpack.c.l.s4 1934713408
        %v1656 = vunpack.c.0.s8 %v1655
        %v1657 = vlaneseq
        %v1658 = vshrl.u32 %v1657, 7
        %v1659 = vsub.s32 %v1656, %v1658
        %v1660 = vrot.slane %v1646, %v1659
        %v1661 = vcombine.low %v1629, %v1644
        %v1662 = vcombine.high %v1629, %v1644
        %v1664 = vunpack.c.l.s4 1934713408
        %v1665 = vunpack.c.0.s8 %v1664
        %v1666 = vlaneseq
        %v1667 = vshrl.u32 %v1666, 7
        %v1668 = vsub.s32 %v1665, %v1667
        %v1669 = vrot.slane %v1661, %v1668
        %v1671 = vunpack.c.l.s4 1934713408
        %v1672 = vunpack.c.0.s8 %v1671
        %v1673 = vlaneseq
        %v1674 = vshrl.u32 %v1673, 7
        %v1675 = vsub.s32 %v1672, %v1674
        %v1676 = vrot.slane %v1662, %v1675
        %v1677 = vcombine.high %v1653, 0.0
        %v1678 = vcombine.high %v1660, 0.0
        %v1679 = vcombine.high %v1669, 0.0
        %v1680 = vcombine.high %v1676, 0.0
        %v1681 = vcombine.high %v1525, 0.0
        %v1683 = vunpack.c.l.s4 1983009808
        %v1684 = vunpack.c.0.s8 %v1683
        %v1685 = vlaneseq
        %v1686 = vshrl.u32 %v1685, 7
        %v1687 = vsub.s32 %v1684, %v1686
        %v1688 = vrot.slane %v1525, %v1687
        %v1690 = vunpack.c.l.s4 1983009808
        %v1691 = vunpack.c.0.s8 %v1690
        %v1692 = vlaneseq
        %v1693 = vshrl.u32 %v1692, 7
        %v1694 = vsub.s32 %v1691, %v1693
        %v1695 = vrot.slane %v1681, %v1694
        %v1696 = vcombine.high %v1527, 0.0
        %v1698 = vunpack.c.l.s4 1983009808
        %v1699 = vunpack.c.0.s8 %v1698
        %v1700 = vlaneseq
        %v1701 = vshrl.u32 %v1700, 7
        %v1702 = vsub.s32 %v1699, %v1701
        %v1703 = vrot.slane %v1527, %v1702
        %v1705 = vunpack.c.l.s4 1983009808
        %v1706 = vunpack.c.0.s8 %v1705
        %v1707 = vlaneseq
        %v1708 = vshrl.u32 %v1707, 7
        %v1709 = vsub.s32 %v1706, %v1708
        %v1710 = vrot.slane %v1696, %v1709
        %v1711 = vcombine.low %v1688, %v1703
        %v1712 = vcombine.high %v1688, %v1703
        %v1714 = vunpack.c.l.s4 1934713408
        %v1715 = vunpack.c.0.s8 %v1714
        %v1716 = vlaneseq
        %v1717 = vshrl.u32 %v1716, 7
        %v1718 = vsub.s32 %v1715, %v1717
        %v1719 = vrot.slane %v1711, %v1718
        %v1721 = vunpack.c.l.s4 1934713408
        %v1722 = vunpack.c.0.s8 %v1721
        %v1723 = vlaneseq
        %v1724 = vshrl.u32 %v1723, 7
        %v1725 = vsub.s32 %v1722, %v1724
        %v1726 = vrot.slane %v1712, %v1725
        %v1727 = vcombine.low %v1695, %v1710
        %v1728 = vcombine.high %v1695, %v1710
        %v1730 = vunpack.c.l.s4 1934713408
        %v1731 = vunpack.c.0.s8 %v1730
        %v1732 = vlaneseq
        %v1733 = vshrl.u32 %v1732, 7
        %v1734 = vsub.s32 %v1731, %v1733
        %v1735 = vrot.slane %v1727, %v1734
        %v1737 = vunpack.c.l.s4 1934713408
        %v1738 = vunpack.c.0.s8 %v1737
        %v1739 = vlaneseq
        %v1740 = vshrl.u32 %v1739, 7
        %v1741 = vsub.s32 %v1738, %v1740
        %v1742 = vrot.slane %v1728, %v1741
        %v1743 = vcombine.high %v1719, 0.0
        %v1744 = vcombine.high %v1726, 0.0
        %v1745 = vcombine.high %v1735, 0.0
        %v1746 = vcombine.high %v1742, 0.0
        %v1747 = vcombine.low %v1653, %v1660
        %v1749 = vunpack.c.l.s4 1983009808
        %v1750 = vunpack.c.0.s8 %v1749
        %v1751 = vlaneseq
        %v1752 = vshrl.u32 %v1751, 7
        %v1753 = vsub.s32 %v1750, %v1752
        %v1754 = vrot.slane %v1747, %v1753
        %v1755 = vcombine.low %v1677, %v1678
        %v1757 = vunpack.c.l.s4 1983009808
        %v1758 = vunpack.c.0.s8 %v1757
        %v1759 = vlaneseq
        %v1760 = vshrl.u32 %v1759, 7
        %v1761 = vsub.s32 %v1758, %v1760
        %v1762 = vrot.slane %v1755, %v1761
        %v1763 = vcombine.low %v1669, %v1676
        %v1765 = vunpack.c.l.s4 1983009808
        %v1766 = vunpack.c.0.s8 %v1765
        %v1767 = vlaneseq
        %v1768 = vshrl.u32 %v1767, 7
        %v1769 = vsub.s32 %v1766, %v1768
        %v1770 = vrot.slane %v1763, %v1769
        %v1771 = vcombine.low %v1679, %v1680
        %v1773 = vunpack.c.l.s4 1983009808
        %v1774 = vunpack.c.0.s8 %v1773
        %v1775 = vlaneseq
        %v1776 = vshrl.u32 %v1775, 7
        %v1777 = vsub.s32 %v1774, %v1776
        %v1778 = vrot.slane %v1771, %v1777
        %v1779 = vcombine.low %v1754, %v1762
        %v1781 = vunpack.c.l.s4 1934713408
        %v1782 = vunpack.c.0.s8 %v1781
        %v1783 = vlaneseq
        %v1784 = vshrl.u32 %v1783, 7
        %v1785 = vsub.s32 %v1782, %v1784
        %v1786 = vrot.slane %v1779, %v1785
        %v1787 = vcombine.low %v1770, %v1778
        %v1789 = vunpack.c.l.s4 1934713408
        %v1790 = vunpack.c.0.s8 %v1789
        %v1791 = vlaneseq
        %v1792 = vshrl.u32 %v1791, 7
        %v1793 = vsub.s32 %v1790, %v1792
        %v1794 = vrot.slane %v1787, %v1793
        %v1795 = vcombine.low %v1786, %v1794
        %v1796 = vcombine.high %v1786, %v1794
        %v1797 = vcombine.low %v1719, %v1726
        %v1799 = vunpack.c.l.s4 1983009808
        %v1800 = vunpack.c.0.s8 %v1799
        %v1801 = vlaneseq
        %v1802 = vshrl.u32 %v1801, 7
        %v1803 = vsub.s32 %v1800, %v1802
        %v1804 = vrot.slane %v1797, %v1803
        %v1805 = vcombine.low %v1743, %v1744
        %v1807 = vunpack.c.l.s4 1983009808
        %v1808 = vunpack.c.0.s8 %v1807
        %v1809 = vlaneseq
        %v1810 = vshrl.u32 %v1809, 7
        %v1811 = vsub.s32 %v1808, %v1810
        %v1812 = vrot.slane %v1805, %v1811
        %v1813 = vcombine.low %v1735, %v1742
        %v1815 = vunpack.c.l.s4 1983009808
        %v1816 = vunpack.c.0.s8 %v1815
        %v1817 = vlaneseq
        %v1818 = vshrl.u32 %v1817, 7
        %v1819 = vsub.s32 %v1816, %v1818
        %v1820 = vrot.slane %v1813, %v1819
        %v1821 = vcombine.low %v1745, %v1746
        %v1823 = vunpack.c.l.s4 1983009808
        %v1824 = vunpack.c.0.s8 %v1823
        %v1825 = vlaneseq
        %v1826 = vshrl.u32 %v1825, 7
        %v1827 = vsub.s32 %v1824, %v1826
        %v1828 = vrot.slane %v1821, %v1827
        %v1829 = vcombine.low %v1804, %v1812
        %v1831 = vunpack.c.l.s4 1934713408
        %v1832 = vunpack.c.0.s8 %v1831
        %v1833 = vlaneseq
        %v1834 = vshrl.u32 %v1833, 7
        %v1835 = vsub.s32 %v1832, %v1834
        %v1836 = vrot.slane %v1829, %v1835
        %v1837 = vcombine.low %v1820, %v1828
        %v1839 = vunpack.c.l.s4 1934713408
        %v1840 = vunpack.c.0.s8 %v1839
        %v1841 = vlaneseq
        %v1842 = vshrl.u32 %v1841, 7
        %v1843 = vsub.s32 %v1840, %v1842
        %v1844 = vrot.slane %v1837, %v1843
        %v1845 = vcombine.low %v1836, %v1844
        %v1846 = vcombine.high %v1836, %v1844
        %v1847 = vpack.c.bf16 %v1845, %v1795
        %v1848 = vpack.c.bf16 %v1846, %v1796
        %v1849 = vcombine.high %v1564, 0.0
        %v1851 = vunpack.c.l.s4 1983009808
        %v1852 = vunpack.c.0.s8 %v1851
        %v1853 = vlaneseq
        %v1854 = vshrl.u32 %v1853, 7
        %v1855 = vsub.s32 %v1852, %v1854
        %v1856 = vrot.slane %v1564, %v1855
        %v1858 = vunpack.c.l.s4 1983009808
        %v1859 = vunpack.c.0.s8 %v1858
        %v1860 = vlaneseq
        %v1861 = vshrl.u32 %v1860, 7
        %v1862 = vsub.s32 %v1859, %v1861
        %v1863 = vrot.slane %v1849, %v1862
        %v1864 = vcombine.high %v1566, 0.0
        %v1866 = vunpack.c.l.s4 1983009808
        %v1867 = vunpack.c.0.s8 %v1866
        %v1868 = vlaneseq
        %v1869 = vshrl.u32 %v1868, 7
        %v1870 = vsub.s32 %v1867, %v1869
        %v1871 = vrot.slane %v1566, %v1870
        %v1873 = vunpack.c.l.s4 1983009808
        %v1874 = vunpack.c.0.s8 %v1873
        %v1875 = vlaneseq
        %v1876 = vshrl.u32 %v1875, 7
        %v1877 = vsub.s32 %v1874, %v1876
        %v1878 = vrot.slane %v1864, %v1877
        %v1879 = vcombine.low %v1856, %v1871
        %v1880 = vcombine.high %v1856, %v1871
        %v1882 = vunpack.c.l.s4 1934713408
        %v1883 = vunpack.c.0.s8 %v1882
        %v1884 = vlaneseq
        %v1885 = vshrl.u32 %v1884, 7
        %v1886 = vsub.s32 %v1883, %v1885
        %v1887 = vrot.slane %v1879, %v1886
        %v1889 = vunpack.c.l.s4 1934713408
        %v1890 = vunpack.c.0.s8 %v1889
        %v1891 = vlaneseq
        %v1892 = vshrl.u32 %v1891, 7
        %v1893 = vsub.s32 %v1890, %v1892
        %v1894 = vrot.slane %v1880, %v1893
        %v1895 = vcombine.low %v1863, %v1878
        %v1896 = vcombine.high %v1863, %v1878
        %v1898 = vunpack.c.l.s4 1934713408
        %v1899 = vunpack.c.0.s8 %v1898
        %v1900 = vlaneseq
        %v1901 = vshrl.u32 %v1900, 7
        %v1902 = vsub.s32 %v1899, %v1901
        %v1903 = vrot.slane %v1895, %v1902
        %v1905 = vunpack.c.l.s4 1934713408
        %v1906 = vunpack.c.0.s8 %v1905
        %v1907 = vlaneseq
        %v1908 = vshrl.u32 %v1907, 7
        %v1909 = vsub.s32 %v1906, %v1908
        %v1910 = vrot.slane %v1896, %v1909
        %v1911 = vcombine.high %v1887, 0.0
        %v1912 = vcombine.high %v1894, 0.0
        %v1913 = vcombine.high %v1903, 0.0
        %v1914 = vcombine.high %v1910, 0.0
        %v1915 = vcombine.high %v1568, 0.0
        %v1917 = vunpack.c.l.s4 1983009808
        %v1918 = vunpack.c.0.s8 %v1917
        %v1919 = vlaneseq
        %v1920 = vshrl.u32 %v1919, 7
        %v1921 = vsub.s32 %v1918, %v1920
        %v1922 = vrot.slane %v1568, %v1921
        %v1924 = vunpack.c.l.s4 1983009808
        %v1925 = vunpack.c.0.s8 %v1924
        %v1926 = vlaneseq
        %v1927 = vshrl.u32 %v1926, 7
        %v1928 = vsub.s32 %v1925, %v1927
        %v1929 = vrot.slane %v1915, %v1928
        %v1930 = vcombine.high %v1570, 0.0
        %v1932 = vunpack.c.l.s4 1983009808
        %v1933 = vunpack.c.0.s8 %v1932
        %v1934 = vlaneseq
        %v1935 = vshrl.u32 %v1934, 7
        %v1936 = vsub.s32 %v1933, %v1935
        %v1937 = vrot.slane %v1570, %v1936
        %v1939 = vunpack.c.l.s4 1983009808
        %v1940 = vunpack.c.0.s8 %v1939
        %v1941 = vlaneseq
        %v1942 = vshrl.u32 %v1941, 7
        %v1943 = vsub.s32 %v1940, %v1942
        %v1944 = vrot.slane %v1930, %v1943
        %v1945 = vcombine.low %v1922, %v1937
        %v1946 = vcombine.high %v1922, %v1937
        %v1948 = vunpack.c.l.s4 1934713408
        %v1949 = vunpack.c.0.s8 %v1948
        %v1950 = vlaneseq
        %v1951 = vshrl.u32 %v1950, 7
        %v1952 = vsub.s32 %v1949, %v1951
        %v1953 = vrot.slane %v1945, %v1952
        %v1955 = vunpack.c.l.s4 1934713408
        %v1956 = vunpack.c.0.s8 %v1955
        %v1957 = vlaneseq
        %v1958 = vshrl.u32 %v1957, 7
        %v1959 = vsub.s32 %v1956, %v1958
        %v1960 = vrot.slane %v1946, %v1959
        %v1961 = vcombine.low %v1929, %v1944
        %v1962 = vcombine.high %v1929, %v1944
        %v1964 = vunpack.c.l.s4 1934713408
        %v1965 = vunpack.c.0.s8 %v1964
        %v1966 = vlaneseq
        %v1967 = vshrl.u32 %v1966, 7
        %v1968 = vsub.s32 %v1965, %v1967
        %v1969 = vrot.slane %v1961, %v1968
        %v1971 = vunpack.c.l.s4 1934713408
        %v1972 = vunpack.c.0.s8 %v1971
        %v1973 = vlaneseq
        %v1974 = vshrl.u32 %v1973, 7
        %v1975 = vsub.s32 %v1972, %v1974
        %v1976 = vrot.slane %v1962, %v1975
        %v1977 = vcombine.high %v1953, 0.0
        %v1978 = vcombine.high %v1960, 0.0
        %v1979 = vcombine.high %v1969, 0.0
        %v1980 = vcombine.high %v1976, 0.0
        %v1981 = vcombine.low %v1887, %v1894
        %v1983 = vunpack.c.l.s4 1983009808
        %v1984 = vunpack.c.0.s8 %v1983
        %v1985 = vlaneseq
        %v1986 = vshrl.u32 %v1985, 7
        %v1987 = vsub.s32 %v1984, %v1986
        %v1988 = vrot.slane %v1981, %v1987
        %v1989 = vcombine.low %v1911, %v1912
        %v1991 = vunpack.c.l.s4 1983009808
        %v1992 = vunpack.c.0.s8 %v1991
        %v1993 = vlaneseq
        %v1994 = vshrl.u32 %v1993, 7
        %v1995 = vsub.s32 %v1992, %v1994
        %v1996 = vrot.slane %v1989, %v1995
        %v1997 = vcombine.low %v1903, %v1910
        %v1999 = vunpack.c.l.s4 1983009808
        %v2000 = vunpack.c.0.s8 %v1999
        %v2001 = vlaneseq
        %v2002 = vshrl.u32 %v2001, 7
        %v2003 = vsub.s32 %v2000, %v2002
        %v2004 = vrot.slane %v1997, %v2003
        %v2005 = vcombine.low %v1913, %v1914
        %v2007 = vunpack.c.l.s4 1983009808
        %v2008 = vunpack.c.0.s8 %v2007
        %v2009 = vlaneseq
        %v2010 = vshrl.u32 %v2009, 7
        %v2011 = vsub.s32 %v2008, %v2010
        %v2012 = vrot.slane %v2005, %v2011
        %v2013 = vcombine.low %v1988, %v1996
        %v2015 = vunpack.c.l.s4 1934713408
        %v2016 = vunpack.c.0.s8 %v2015
        %v2017 = vlaneseq
        %v2018 = vshrl.u32 %v2017, 7
        %v2019 = vsub.s32 %v2016, %v2018
        %v2020 = vrot.slane %v2013, %v2019
        %v2021 = vcombine.low %v2004, %v2012
        %v2023 = vunpack.c.l.s4 1934713408
        %v2024 = vunpack.c.0.s8 %v2023
        %v2025 = vlaneseq
        %v2026 = vshrl.u32 %v2025, 7
        %v2027 = vsub.s32 %v2024, %v2026
        %v2028 = vrot.slane %v2021, %v2027
        %v2029 = vcombine.low %v2020, %v2028
        %v2030 = vcombine.high %v2020, %v2028
        %v2031 = vcombine.low %v1953, %v1960
        %v2033 = vunpack.c.l.s4 1983009808
        %v2034 = vunpack.c.0.s8 %v2033
        %v2035 = vlaneseq
        %v2036 = vshrl.u32 %v2035, 7
        %v2037 = vsub.s32 %v2034, %v2036
        %v2038 = vrot.slane %v2031, %v2037
        %v2039 = vcombine.low %v1977, %v1978
        %v2041 = vunpack.c.l.s4 1983009808
        %v2042 = vunpack.c.0.s8 %v2041
        %v2043 = vlaneseq
        %v2044 = vshrl.u32 %v2043, 7
        %v2045 = vsub.s32 %v2042, %v2044
        %v2046 = vrot.slane %v2039, %v2045
        %v2047 = vcombine.low %v1969, %v1976
        %v2049 = vunpack.c.l.s4 1983009808
        %v2050 = vunpack.c.0.s8 %v2049
        %v2051 = vlaneseq
        %v2052 = vshrl.u32 %v2051, 7
        %v2053 = vsub.s32 %v2050, %v2052
        %v2054 = vrot.slane %v2047, %v2053
        %v2055 = vcombine.low %v1979, %v1980
        %v2057 = vunpack.c.l.s4 1983009808
        %v2058 = vunpack.c.0.s8 %v2057
        %v2059 = vlaneseq
        %v2060 = vshrl.u32 %v2059, 7
        %v2061 = vsub.s32 %v2058, %v2060
        %v2062 = vrot.slane %v2055, %v2061
        %v2063 = vcombine.low %v2038, %v2046
        %v2065 = vunpack.c.l.s4 1934713408
        %v2066 = vunpack.c.0.s8 %v2065
        %v2067 = vlaneseq
        %v2068 = vshrl.u32 %v2067, 7
        %v2069 = vsub.s32 %v2066, %v2068
        %v2070 = vrot.slane %v2063, %v2069
        %v2071 = vcombine.low %v2054, %v2062
        %v2073 = vunpack.c.l.s4 1934713408
        %v2074 = vunpack.c.0.s8 %v2073
        %v2075 = vlaneseq
        %v2076 = vshrl.u32 %v2075, 7
        %v2077 = vsub.s32 %v2074, %v2076
        %v2078 = vrot.slane %v2071, %v2077
        %v2079 = vcombine.low %v2070, %v2078
        %v2080 = vcombine.high %v2070, %v2078
        %v2081 = vpack.c.bf16 %v2079, %v2029
        %v2082 = vpack.c.bf16 %v2080, %v2030
        %v2083 = vcombine.high %v1607, 0.0
        %v2085 = vunpack.c.l.s4 1983009808
        %v2086 = vunpack.c.0.s8 %v2085
        %v2087 = vlaneseq
        %v2088 = vshrl.u32 %v2087, 7
        %v2089 = vsub.s32 %v2086, %v2088
        %v2090 = vrot.slane %v1607, %v2089
        %v2092 = vunpack.c.l.s4 1983009808
        %v2093 = vunpack.c.0.s8 %v2092
        %v2094 = vlaneseq
        %v2095 = vshrl.u32 %v2094, 7
        %v2096 = vsub.s32 %v2093, %v2095
        %v2097 = vrot.slane %v2083, %v2096
        %v2098 = vcombine.high %v1609, 0.0
        %v2100 = vunpack.c.l.s4 1983009808
        %v2101 = vunpack.c.0.s8 %v2100
        %v2102 = vlaneseq
        %v2103 = vshrl.u32 %v2102, 7
        %v2104 = vsub.s32 %v2101, %v2103
        %v2105 = vrot.slane %v1609, %v2104
        %v2107 = vunpack.c.l.s4 1983009808
        %v2108 = vunpack.c.0.s8 %v2107
        %v2109 = vlaneseq
        %v2110 = vshrl.u32 %v2109, 7
        %v2111 = vsub.s32 %v2108, %v2110
        %v2112 = vrot.slane %v2098, %v2111
        %v2113 = vcombine.low %v2090, %v2105
        %v2114 = vcombine.high %v2090, %v2105
        %v2116 = vunpack.c.l.s4 1934713408
        %v2117 = vunpack.c.0.s8 %v2116
        %v2118 = vlaneseq
        %v2119 = vshrl.u32 %v2118, 7
        %v2120 = vsub.s32 %v2117, %v2119
        %v2121 = vrot.slane %v2113, %v2120
        %v2123 = vunpack.c.l.s4 1934713408
        %v2124 = vunpack.c.0.s8 %v2123
        %v2125 = vlaneseq
        %v2126 = vshrl.u32 %v2125, 7
        %v2127 = vsub.s32 %v2124, %v2126
        %v2128 = vrot.slane %v2114, %v2127
        %v2129 = vcombine.low %v2097, %v2112
        %v2130 = vcombine.high %v2097, %v2112
        %v2132 = vunpack.c.l.s4 1934713408
        %v2133 = vunpack.c.0.s8 %v2132
        %v2134 = vlaneseq
        %v2135 = vshrl.u32 %v2134, 7
        %v2136 = vsub.s32 %v2133, %v2135
        %v2137 = vrot.slane %v2129, %v2136
        %v2139 = vunpack.c.l.s4 1934713408
        %v2140 = vunpack.c.0.s8 %v2139
        %v2141 = vlaneseq
        %v2142 = vshrl.u32 %v2141, 7
        %v2143 = vsub.s32 %v2140, %v2142
        %v2144 = vrot.slane %v2130, %v2143
        %v2145 = vcombine.high %v2121, 0.0
        %v2146 = vcombine.high %v2128, 0.0
        %v2147 = vcombine.high %v2137, 0.0
        %v2148 = vcombine.high %v2144, 0.0
        %v2149 = vcombine.high %v1611, 0.0
        %v2151 = vunpack.c.l.s4 1983009808
        %v2152 = vunpack.c.0.s8 %v2151
        %v2153 = vlaneseq
        %v2154 = vshrl.u32 %v2153, 7
        %v2155 = vsub.s32 %v2152, %v2154
        %v2156 = vrot.slane %v1611, %v2155
        %v2158 = vunpack.c.l.s4 1983009808
        %v2159 = vunpack.c.0.s8 %v2158
        %v2160 = vlaneseq
        %v2161 = vshrl.u32 %v2160, 7
        %v2162 = vsub.s32 %v2159, %v2161
        %v2163 = vrot.slane %v2149, %v2162
        %v2164 = vcombine.high %v1613, 0.0
        %v2166 = vunpack.c.l.s4 1983009808
        %v2167 = vunpack.c.0.s8 %v2166
        %v2168 = vlaneseq
        %v2169 = vshrl.u32 %v2168, 7
        %v2170 = vsub.s32 %v2167, %v2169
        %v2171 = vrot.slane %v1613, %v2170
        %v2173 = vunpack.c.l.s4 1983009808
        %v2174 = vunpack.c.0.s8 %v2173
        %v2175 = vlaneseq
        %v2176 = vshrl.u32 %v2175, 7
        %v2177 = vsub.s32 %v2174, %v2176
        %v2178 = vrot.slane %v2164, %v2177
        %v2179 = vcombine.low %v2156, %v2171
        %v2180 = vcombine.high %v2156, %v2171
        %v2182 = vunpack.c.l.s4 1934713408
        %v2183 = vunpack.c.0.s8 %v2182
        %v2184 = vlaneseq
        %v2185 = vshrl.u32 %v2184, 7
        %v2186 = vsub.s32 %v2183, %v2185
        %v2187 = vrot.slane %v2179, %v2186
        %v2189 = vunpack.c.l.s4 1934713408
        %v2190 = vunpack.c.0.s8 %v2189
        %v2191 = vlaneseq
        %v2192 = vshrl.u32 %v2191, 7
        %v2193 = vsub.s32 %v2190, %v2192
        %v2194 = vrot.slane %v2180, %v2193
        %v2195 = vcombine.low %v2163, %v2178
        %v2196 = vcombine.high %v2163, %v2178
        %v2198 = vunpack.c.l.s4 1934713408
        %v2199 = vunpack.c.0.s8 %v2198
        %v2200 = vlaneseq
        %v2201 = vshrl.u32 %v2200, 7
        %v2202 = vsub.s32 %v2199, %v2201
        %v2203 = vrot.slane %v2195, %v2202
        %v2205 = vunpack.c.l.s4 1934713408
        %v2206 = vunpack.c.0.s8 %v2205
        %v2207 = vlaneseq
        %v2208 = vshrl.u32 %v2207, 7
        %v2209 = vsub.s32 %v2206, %v2208
        %v2210 = vrot.slane %v2196, %v2209
        %v2211 = vcombine.high %v2187, 0.0
        %v2212 = vcombine.high %v2194, 0.0
        %v2213 = vcombine.high %v2203, 0.0
        %v2214 = vcombine.high %v2210, 0.0
        %v2215 = vcombine.low %v2121, %v2128
        %v2217 = vunpack.c.l.s4 1983009808
        %v2218 = vunpack.c.0.s8 %v2217
        %v2219 = vlaneseq
        %v2220 = vshrl.u32 %v2219, 7
        %v2221 = vsub.s32 %v2218, %v2220
        %v2222 = vrot.slane %v2215, %v2221
        %v2223 = vcombine.low %v2145, %v2146
        %v2225 = vunpack.c.l.s4 1983009808
        %v2226 = vunpack.c.0.s8 %v2225
        %v2227 = vlaneseq
        %v2228 = vshrl.u32 %v2227, 7
        %v2229 = vsub.s32 %v2226, %v2228
        %v2230 = vrot.slane %v2223, %v2229
        %v2231 = vcombine.low %v2137, %v2144
        %v2233 = vunpack.c.l.s4 1983009808
        %v2234 = vunpack.c.0.s8 %v2233
        %v2235 = vlaneseq
        %v2236 = vshrl.u32 %v2235, 7
        %v2237 = vsub.s32 %v2234, %v2236
        %v2238 = vrot.slane %v2231, %v2237
        %v2239 = vcombine.low %v2147, %v2148
        %v2241 = vunpack.c.l.s4 1983009808
        %v2242 = vunpack.c.0.s8 %v2241
        %v2243 = vlaneseq
        %v2244 = vshrl.u32 %v2243, 7
        %v2245 = vsub.s32 %v2242, %v2244
        %v2246 = vrot.slane %v2239, %v2245
        %v2247 = vcombine.low %v2222, %v2230
        %v2249 = vunpack.c.l.s4 1934713408
        %v2250 = vunpack.c.0.s8 %v2249
        %v2251 = vlaneseq
        %v2252 = vshrl.u32 %v2251, 7
        %v2253 = vsub.s32 %v2250, %v2252
        %v2254 = vrot.slane %v2247, %v2253
        %v2255 = vcombine.low %v2238, %v2246
        %v2257 = vunpack.c.l.s4 1934713408
        %v2258 = vunpack.c.0.s8 %v2257
        %v2259 = vlaneseq
        %v2260 = vshrl.u32 %v2259, 7
        %v2261 = vsub.s32 %v2258, %v2260
        %v2262 = vrot.slane %v2255, %v2261
        %v2263 = vcombine.low %v2254, %v2262
        %v2264 = vcombine.high %v2254, %v2262
        %v2265 = vcombine.low %v2187, %v2194
        %v2267 = vunpack.c.l.s4 1983009808
        %v2268 = vunpack.c.0.s8 %v2267
        %v2269 = vlaneseq
        %v2270 = vshrl.u32 %v2269, 7
        %v2271 = vsub.s32 %v2268, %v2270
        %v2272 = vrot.slane %v2265, %v2271
        %v2273 = vcombine.low %v2211, %v2212
        %v2275 = vunpack.c.l.s4 1983009808
        %v2276 = vunpack.c.0.s8 %v2275
        %v2277 = vlaneseq
        %v2278 = vshrl.u32 %v2277, 7
        %v2279 = vsub.s32 %v2276, %v2278
        %v2280 = vrot.slane %v2273, %v2279
        %v2281 = vcombine.low %v2203, %v2210
        %v2283 = vunpack.c.l.s4 1983009808
        %v2284 = vunpack.c.0.s8 %v2283
        %v2285 = vlaneseq
        %v2286 = vshrl.u32 %v2285, 7
        %v2287 = vsub.s32 %v2284, %v2286
        %v2288 = vrot.slane %v2281, %v2287
        %v2289 = vcombine.low %v2213, %v2214
        %v2291 = vunpack.c.l.s4 1983009808
        %v2292 = vunpack.c.0.s8 %v2291
        %v2293 = vlaneseq
        %v2294 = vshrl.u32 %v2293, 7
        %v2295 = vsub.s32 %v2292, %v2294
        %v2296 = vrot.slane %v2289, %v2295
        %v2297 = vcombine.low %v2272, %v2280
        %v2299 = vunpack.c.l.s4 1934713408
        %v2300 = vunpack.c.0.s8 %v2299
        %v2301 = vlaneseq
        %v2302 = vshrl.u32 %v2301, 7
        %v2303 = vsub.s32 %v2300, %v2302
        %v2304 = vrot.slane %v2297, %v2303
        %v2305 = vcombine.low %v2288, %v2296
        %v2307 = vunpack.c.l.s4 1934713408
        %v2308 = vunpack.c.0.s8 %v2307
        %v2309 = vlaneseq
        %v2310 = vshrl.u32 %v2309, 7
        %v2311 = vsub.s32 %v2308, %v2310
        %v2312 = vrot.slane %v2305, %v2311
        %v2313 = vcombine.low %v2304, %v2312
        %v2314 = vcombine.high %v2304, %v2312
        %v2315 = vpack.c.bf16 %v2313, %v2263
        %v2316 = vpack.c.bf16 %v2314, %v2264
        %v2317 = vlaneseq
        %v2318 = vshrl.u32 %v2317, 7
        %v2319 = vadd.s32 %v2318, 8
        %v2320 = vlaneseq
        %v2321 = vand.u32 %v2320, 127
        %vm2322 = vcmp.ge.s32.totalorder %v2318, %v2321
        %vm2323 = vcmp.ge.s32.totalorder %v2319, %v2321
        %2324 = vmatprep.subr.bf16.mxu0 0
        %2325 = vmatpush1.bf16.xpose.msra.mxu0 %v2081
        %2326 = vmatprep.subr.bf16.mxu0 0
        %2327 = vmatpush1.bf16.xpose.msra.mxu0 0
        %2328 = vmatprep.subr.bf16.mxu0 0
        %2329 = vmatpush1.bf16.xpose.msra.mxu0 0
        %2330 = vmatprep.subr.bf16.mxu0 0
        %2331 = vmatpush1.bf16.xpose.msra.mxu0 0
        %2332 = vmatprep.subr.bf16.mxu0 0
        %2333 = vmatpush1.bf16.xpose.msra.mxu0 0
        %2334 = vmatprep.subr.bf16.mxu0 0
        %2335 = vmatpush1.bf16.xpose.msra.mxu0 0
        %2336 = vmatprep.subr.bf16.mxu0 0
        %2337 = vmatpush1.bf16.xpose.msra.mxu0 0
        %2338 = vmatprep.subr.bf16.mxu0 0
        %2339 = vmatpush1.bf16.xpose.msra.mxu0 0
        %2340 = vmatprep.subr.bf16.mxu0 0
        %2341 = vmatpush1.bf16.xpose.msra.mxu0 0
        %2342 = vmatprep.subr.bf16.mxu0 0
        %2343 = vmatpush1.bf16.xpose.msra.mxu0 0
        %2344 = vmatprep.subr.bf16.mxu0 0
        %2345 = vmatpush1.bf16.xpose.msra.mxu0 0
        %2346 = vmatprep.subr.bf16.mxu0 0
        %2347 = vmatpush1.bf16.xpose.msra.mxu0 0
        %2348 = vmatprep.subr.bf16.mxu0 0
        %2349 = vmatpush1.bf16.xpose.msra.mxu0 0
        %2350 = vmatprep.subr.bf16.mxu0 0
        %2351 = vmatpush1.bf16.xpose.msra.mxu0 0
        %2352 = vmatprep.subr.bf16.mxu0 0
        %2353 = vmatpush1.bf16.xpose.msra.mxu0 0
        %2354 = vmatprep.subr.bf16.mxu0 0
        %2355 = vmatpush1.bf16.xpose.msra.mxu0 0
        %2356 = vmatprep.mubr.bf16.mxu0 0
        %2357 = vmatmul.mubr.bf16.gmra.mrb[0].mxu0 %v1847
        %v2358 = vpop.f32.mrb[0].mxu0
        %v2359 = vadd.f32 0.0, %v2358
        %v2360 = vpop.f32.mrb[0].mxu0
        %v2361 = vpop.f32.mrb[0].mxu0
        %v2362 = vadd.f32 0.0, %v2361
        %v2363 = vpop.f32.mrb[0].mxu0
        %2364 = vdwg.mxu0
        %2365 = vmatprep.subr.bf16.mxu0 0
        %2366 = vmatpush1.bf16.xpose.msra.mxu0 %v2082
        %2367 = vmatprep.subr.bf16.mxu0 0
        %2368 = vmatpush1.bf16.xpose.msra.mxu0 0
        %2369 = vmatprep.subr.bf16.mxu0 0
        %2370 = vmatpush1.bf16.xpose.msra.mxu0 0
        %2371 = vmatprep.subr.bf16.mxu0 0
        %2372 = vmatpush1.bf16.xpose.msra.mxu0 0
        %2373 = vmatprep.subr.bf16.mxu0 0
        %2374 = vmatpush1.bf16.xpose.msra.mxu0 0
        %2375 = vmatprep.subr.bf16.mxu0 0
        %2376 = vmatpush1.bf16.xpose.msra.mxu0 0
        %2377 = vmatprep.subr.bf16.mxu0 0
        %2378 = vmatpush1.bf16.xpose.msra.mxu0 0
        %2379 = vmatprep.subr.bf16.mxu0 0
        %2380 = vmatpush1.bf16.xpose.msra.mxu0 0
        %2381 = vmatprep.subr.bf16.mxu0 0
        %2382 = vmatpush1.bf16.xpose.msra.mxu0 0
        %2383 = vmatprep.subr.bf16.mxu0 0
        %2384 = vmatpush1.bf16.xpose.msra.mxu0 0
        %2385 = vmatprep.subr.bf16.mxu0 0
        %2386 = vmatpush1.bf16.xpose.msra.mxu0 0
        %2387 = vmatprep.subr.bf16.mxu0 0
        %2388 = vmatpush1.bf16.xpose.msra.mxu0 0
        %2389 = vmatprep.subr.bf16.mxu0 0
        %2390 = vmatpush1.bf16.xpose.msra.mxu0 0
        %2391 = vmatprep.subr.bf16.mxu0 0
        %2392 = vmatpush1.bf16.xpose.msra.mxu0 0
        %2393 = vmatprep.subr.bf16.mxu0 0
        %2394 = vmatpush1.bf16.xpose.msra.mxu0 0
        %2395 = vmatprep.subr.bf16.mxu0 0
        %2396 = vmatpush1.bf16.xpose.msra.mxu0 0
        %2397 = vmatprep.mubr.bf16.mxu0 0
        %2398 = vmatmul.mubr.bf16.gmra.mrb[0].mxu0 %v1848
        %v2399 = vpop.f32.mrb[0].mxu0
        %v2400 = vadd.f32 0.0, %v2399
        %v2401 = vpop.f32.mrb[0].mxu0
        %v2402 = vpop.f32.mrb[0].mxu0
        %v2403 = vadd.f32 0.0, %v2402
        %v2404 = vpop.f32.mrb[0].mxu0
        %2405 = vdwg.mxu0
        %v2406 = vmul.f32 %v2359, 0.088388346
        %v2407 = vmul.f32 %v2362, 0.088388346
        %v2408 = vmul.f32 %v2400, 0.088388346
        %v2409 = vmul.f32 %v2403, 0.088388346
        %v2410 = vsel %vm2322, 1, 0
        %v2411 = vsel %vm2323, 1, 0
        %vm2412 = vcmp.eq.s32.totalorder %v2410, 1
        %vm2413 = vcmp.eq.s32.totalorder %v2411, 1
        %v2414 = vsel %vm2412, %v2406, -1e+30
        %v2415 = vsel %vm2413, %v2407, -1e+30
        %v2416 = vsel %vm2412, %v2408, -1e+30
        %v2417 = vsel %vm2413, %v2409, -1e+30
        %vm2418 = vcmask 130048
        %v2419 = vsel %vm2418, %v2414, -inf
        %2420 = vmax.xlane.f32.xlu0 %v2419
        %v2421 = vpop.xlane.xlu0 %2420
        %v2422 = vsel %vm2418, %v2415, -inf
        %2423 = vmax.xlane.f32.xlu0 %v2422
        %v2424 = vpop.xlane.xlu0 %2423
        %v2425 = vsel %vm2418, %v2416, -inf
        %2426 = vmax.xlane.f32.xlu0 %v2425
        %v2427 = vpop.xlane.xlu0 %2426
        %v2428 = vsel %vm2418, %v2417, -inf
        %2429 = vmax.xlane.f32.xlu0 %v2428
        %v2430 = vpop.xlane.xlu0 %2429
        %v2431 = vsub.f32 %v2414, %v2421
        %v2432 = vsub.f32 %v2415, %v2424
        %v2433 = vsub.f32 %v2416, %v2427
        %v2434 = vsub.f32 %v2417, %v2430
        %v2435 = vmul.f32 %v2431, 1.442695
        %v2436 = vpow.pop %v2435
        %v2437 = vmul.f32 %v2432, 1.442695
        %v2438 = vpow.pop %v2437
        %v2439 = vmul.f32 %v2433, 1.442695
        %v2440 = vpow.pop %v2439
        %v2441 = vmul.f32 %v2434, 1.442695
        %v2442 = vpow.pop %v2441
        %v2443 = vsel %vm2418, %v2436, 0.0
        %2444 = vadd.xlane.f32.xlu0 %v2443
        %v2445 = vpop.xlane.xlu0 %2444
        %v2446 = vsel %vm2418, %v2438, 0.0
        %2447 = vadd.xlane.f32.xlu0 %v2446
        %v2448 = vpop.xlane.xlu0 %2447
        %v2449 = vsel %vm2418, %v2440, 0.0
        %2450 = vadd.xlane.f32.xlu0 %v2449
        %v2451 = vpop.xlane.xlu0 %2450
        %v2452 = vsel %vm2418, %v2442, 0.0
        %2453 = vadd.xlane.f32.xlu0 %v2452
        %v2454 = vpop.xlane.xlu0 %2453
        %v2455 = vrcp.pop %v2445
        %v2456 = vrcp.pop %v2448
        %v2457 = vrcp.pop %v2451
        %v2458 = vrcp.pop %v2454
        %v2459 = vmul.f32 %v2436, %v2455
        %v2460 = vmul.f32 %v2438, %v2456
        %v2461 = vmul.f32 %v2440, %v2457
        %v2462 = vmul.f32 %v2442, %v2458
        %v2463 = vpack.c.bf16 %v2460, %v2459
        %v2464 = vpack.c.bf16 %v2462, %v2461
        %v2466 = vsel %vm2418, %v2463, 0
        %2468 = vmatprep.subr.bf16.mxu0 0
        %2469 = vmatpush1.bf16.msra.mxu0 %v2315
        %2470 = vmatprep.subr.bf16.mxu0 0
        %2471 = vmatpush1.bf16.msra.mxu0 0
        %2472 = vmatprep.subr.bf16.mxu0 0
        %2473 = vmatpush1.bf16.msra.mxu0 0
        %2474 = vmatprep.subr.bf16.mxu0 0
        %2475 = vmatpush1.bf16.msra.mxu0 0
        %2476 = vmatprep.subr.bf16.mxu0 0
        %2477 = vmatpush1.bf16.msra.mxu0 0
        %2478 = vmatprep.subr.bf16.mxu0 0
        %2479 = vmatpush1.bf16.msra.mxu0 0
        %2480 = vmatprep.subr.bf16.mxu0 0
        %2481 = vmatpush1.bf16.msra.mxu0 0
        %2482 = vmatprep.subr.bf16.mxu0 0
        %2483 = vmatpush1.bf16.msra.mxu0 0
        %2484 = vmatprep.subr.bf16.mxu0 0
        %2485 = vmatpush1.bf16.msra.mxu0 0
        %2486 = vmatprep.subr.bf16.mxu0 0
        %2487 = vmatpush1.bf16.msra.mxu0 0
        %2488 = vmatprep.subr.bf16.mxu0 0
        %2489 = vmatpush1.bf16.msra.mxu0 0
        %2490 = vmatprep.subr.bf16.mxu0 0
        %2491 = vmatpush1.bf16.msra.mxu0 0
        %2492 = vmatprep.subr.bf16.mxu0 0
        %2493 = vmatpush1.bf16.msra.mxu0 0
        %2494 = vmatprep.subr.bf16.mxu0 0
        %2495 = vmatpush1.bf16.msra.mxu0 0
        %2496 = vmatprep.subr.bf16.mxu0 0
        %2497 = vmatpush1.bf16.msra.mxu0 0
        %2498 = vmatprep.subr.bf16.mxu0 0
        %2499 = vmatpush1.bf16.msra.mxu0 0
        %2500 = vmatprep.mubr.bf16.mxu0 0
        %2501 = vmatmul.mubr.bf16.gmra.mrb[0].mxu0 %v2466
        %v2502 = vpop.f32.mrb[0].mxu0
        %v2503 = vadd.f32 0.0, %v2502
        %v2504 = vpop.f32.mrb[0].mxu0
        %v2505 = vpop.f32.mrb[0].mxu0
        %v2506 = vadd.f32 0.0, %v2505
        %v2507 = vpop.f32.mrb[0].mxu0
        %2508 = vdwg.mxu0
        %v2510 = vsel %vm2418, %v2464, 0
        %2512 = vmatprep.subr.bf16.mxu0 0
        %2513 = vmatpush1.bf16.msra.mxu0 %v2316
        %2514 = vmatprep.subr.bf16.mxu0 0
        %2515 = vmatpush1.bf16.msra.mxu0 0
        %2516 = vmatprep.subr.bf16.mxu0 0
        %2517 = vmatpush1.bf16.msra.mxu0 0
        %2518 = vmatprep.subr.bf16.mxu0 0
        %2519 = vmatpush1.bf16.msra.mxu0 0
        %2520 = vmatprep.subr.bf16.mxu0 0
        %2521 = vmatpush1.bf16.msra.mxu0 0
        %2522 = vmatprep.subr.bf16.mxu0 0
        %2523 = vmatpush1.bf16.msra.mxu0 0
        %2524 = vmatprep.subr.bf16.mxu0 0
        %2525 = vmatpush1.bf16.msra.mxu0 0
        %2526 = vmatprep.subr.bf16.mxu0 0
        %2527 = vmatpush1.bf16.msra.mxu0 0
        %2528 = vmatprep.subr.bf16.mxu0 0
        %2529 = vmatpush1.bf16.msra.mxu0 0
        %2530 = vmatprep.subr.bf16.mxu0 0
        %2531 = vmatpush1.bf16.msra.mxu0 0
        %2532 = vmatprep.subr.bf16.mxu0 0
        %2533 = vmatpush1.bf16.msra.mxu0 0
        %2534 = vmatprep.subr.bf16.mxu0 0
        %2535 = vmatpush1.bf16.msra.mxu0 0
        %2536 = vmatprep.subr.bf16.mxu0 0
        %2537 = vmatpush1.bf16.msra.mxu0 0
        %2538 = vmatprep.subr.bf16.mxu0 0
        %2539 = vmatpush1.bf16.msra.mxu0 0
        %2540 = vmatprep.subr.bf16.mxu0 0
        %2541 = vmatpush1.bf16.msra.mxu0 0
        %2542 = vmatprep.subr.bf16.mxu0 0
        %2543 = vmatpush1.bf16.msra.mxu0 0
        %2544 = vmatprep.mubr.bf16.mxu0 0
        %2545 = vmatmul.mubr.bf16.gmra.mrb[0].mxu0 %v2510
        %v2546 = vpop.f32.mrb[0].mxu0
        %v2547 = vadd.f32 0.0, %v2546
        %v2548 = vpop.f32.mrb[0].mxu0
        %v2549 = vpop.f32.mrb[0].mxu0
        %v2550 = vadd.f32 0.0, %v2549
        %v2551 = vpop.f32.mrb[0].mxu0
        %2552 = vdwg.mxu0
        %v2553 = vcombine.high %v2503, 0.0
        %v2555 = vunpack.c.l.s4 1983009808
        %v2556 = vunpack.c.0.s8 %v2555
        %v2557 = vlaneseq
        %v2558 = vshrl.u32 %v2557, 7
        %v2559 = vsub.s32 %v2556, %v2558
        %v2560 = vrot.slane %v2503, %v2559
        %v2562 = vunpack.c.l.s4 1983009808
        %v2563 = vunpack.c.0.s8 %v2562
        %v2564 = vlaneseq
        %v2565 = vshrl.u32 %v2564, 7
        %v2566 = vsub.s32 %v2563, %v2565
        %v2567 = vrot.slane %v2553, %v2566
        %v2568 = vcombine.high %v2547, 0.0
        %v2570 = vunpack.c.l.s4 1983009808
        %v2571 = vunpack.c.0.s8 %v2570
        %v2572 = vlaneseq
        %v2573 = vshrl.u32 %v2572, 7
        %v2574 = vsub.s32 %v2571, %v2573
        %v2575 = vrot.slane %v2547, %v2574
        %v2577 = vunpack.c.l.s4 1983009808
        %v2578 = vunpack.c.0.s8 %v2577
        %v2579 = vlaneseq
        %v2580 = vshrl.u32 %v2579, 7
        %v2581 = vsub.s32 %v2578, %v2580
        %v2582 = vrot.slane %v2568, %v2581
        %v2583 = vcombine.low %v2560, %v2575
        %v2584 = vcombine.high %v2560, %v2575
        %v2586 = vunpack.c.l.s4 1934713408
        %v2587 = vunpack.c.0.s8 %v2586
        %v2588 = vlaneseq
        %v2589 = vshrl.u32 %v2588, 7
        %v2590 = vsub.s32 %v2587, %v2589
        %v2591 = vrot.slane %v2583, %v2590
        %v2593 = vunpack.c.l.s4 1934713408
        %v2594 = vunpack.c.0.s8 %v2593
        %v2595 = vlaneseq
        %v2596 = vshrl.u32 %v2595, 7
        %v2597 = vsub.s32 %v2594, %v2596
        %v2598 = vrot.slane %v2584, %v2597
        %v2599 = vcombine.low %v2567, %v2582
        %v2600 = vcombine.high %v2567, %v2582
        %v2602 = vunpack.c.l.s4 1934713408
        %v2603 = vunpack.c.0.s8 %v2602
        %v2604 = vlaneseq
        %v2605 = vshrl.u32 %v2604, 7
        %v2606 = vsub.s32 %v2603, %v2605
        %v2607 = vrot.slane %v2599, %v2606
        %v2609 = vunpack.c.l.s4 1934713408
        %v2610 = vunpack.c.0.s8 %v2609
        %v2611 = vlaneseq
        %v2612 = vshrl.u32 %v2611, 7
        %v2613 = vsub.s32 %v2610, %v2612
        %v2614 = vrot.slane %v2600, %v2613
        %v2615 = vcombine.high %v2591, 0.0
        %v2616 = vcombine.high %v2598, 0.0
        %v2617 = vcombine.high %v2607, 0.0
        %v2618 = vcombine.high %v2614, 0.0
        %v2619 = vcombine.high %v2506, 0.0
        %v2621 = vunpack.c.l.s4 1983009808
        %v2622 = vunpack.c.0.s8 %v2621
        %v2623 = vlaneseq
        %v2624 = vshrl.u32 %v2623, 7
        %v2625 = vsub.s32 %v2622, %v2624
        %v2626 = vrot.slane %v2506, %v2625
        %v2628 = vunpack.c.l.s4 1983009808
        %v2629 = vunpack.c.0.s8 %v2628
        %v2630 = vlaneseq
        %v2631 = vshrl.u32 %v2630, 7
        %v2632 = vsub.s32 %v2629, %v2631
        %v2633 = vrot.slane %v2619, %v2632
        %v2634 = vcombine.high %v2550, 0.0
        %v2636 = vunpack.c.l.s4 1983009808
        %v2637 = vunpack.c.0.s8 %v2636
        %v2638 = vlaneseq
        %v2639 = vshrl.u32 %v2638, 7
        %v2640 = vsub.s32 %v2637, %v2639
        %v2641 = vrot.slane %v2550, %v2640
        %v2643 = vunpack.c.l.s4 1983009808
        %v2644 = vunpack.c.0.s8 %v2643
        %v2645 = vlaneseq
        %v2646 = vshrl.u32 %v2645, 7
        %v2647 = vsub.s32 %v2644, %v2646
        %v2648 = vrot.slane %v2634, %v2647
        %v2649 = vcombine.low %v2626, %v2641
        %v2650 = vcombine.high %v2626, %v2641
        %v2652 = vunpack.c.l.s4 1934713408
        %v2653 = vunpack.c.0.s8 %v2652
        %v2654 = vlaneseq
        %v2655 = vshrl.u32 %v2654, 7
        %v2656 = vsub.s32 %v2653, %v2655
        %v2657 = vrot.slane %v2649, %v2656
        %v2659 = vunpack.c.l.s4 1934713408
        %v2660 = vunpack.c.0.s8 %v2659
        %v2661 = vlaneseq
        %v2662 = vshrl.u32 %v2661, 7
        %v2663 = vsub.s32 %v2660, %v2662
        %v2664 = vrot.slane %v2650, %v2663
        %v2665 = vcombine.low %v2633, %v2648
        %v2666 = vcombine.high %v2633, %v2648
        %v2668 = vunpack.c.l.s4 1934713408
        %v2669 = vunpack.c.0.s8 %v2668
        %v2670 = vlaneseq
        %v2671 = vshrl.u32 %v2670, 7
        %v2672 = vsub.s32 %v2669, %v2671
        %v2673 = vrot.slane %v2665, %v2672
        %v2675 = vunpack.c.l.s4 1934713408
        %v2676 = vunpack.c.0.s8 %v2675
        %v2677 = vlaneseq
        %v2678 = vshrl.u32 %v2677, 7
        %v2679 = vsub.s32 %v2676, %v2678
        %v2680 = vrot.slane %v2666, %v2679
        %v2681 = vcombine.high %v2657, 0.0
        %v2682 = vcombine.high %v2664, 0.0
        %v2683 = vcombine.high %v2673, 0.0
        %v2684 = vcombine.high %v2680, 0.0
        %v2685 = vcombine.low %v2591, %v2598
        %v2687 = vunpack.c.l.s4 1983009808
        %v2688 = vunpack.c.0.s8 %v2687
        %v2689 = vlaneseq
        %v2690 = vshrl.u32 %v2689, 7
        %v2691 = vsub.s32 %v2688, %v2690
        %v2692 = vrot.slane %v2685, %v2691
        %v2693 = vcombine.low %v2615, %v2616
        %v2695 = vunpack.c.l.s4 1983009808
        %v2696 = vunpack.c.0.s8 %v2695
        %v2697 = vlaneseq
        %v2698 = vshrl.u32 %v2697, 7
        %v2699 = vsub.s32 %v2696, %v2698
        %v2700 = vrot.slane %v2693, %v2699
        %v2701 = vcombine.low %v2607, %v2614
        %v2703 = vunpack.c.l.s4 1983009808
        %v2704 = vunpack.c.0.s8 %v2703
        %v2705 = vlaneseq
        %v2706 = vshrl.u32 %v2705, 7
        %v2707 = vsub.s32 %v2704, %v2706
        %v2708 = vrot.slane %v2701, %v2707
        %v2709 = vcombine.low %v2617, %v2618
        %v2711 = vunpack.c.l.s4 1983009808
        %v2712 = vunpack.c.0.s8 %v2711
        %v2713 = vlaneseq
        %v2714 = vshrl.u32 %v2713, 7
        %v2715 = vsub.s32 %v2712, %v2714
        %v2716 = vrot.slane %v2709, %v2715
        %v2717 = vcombine.low %v2692, %v2700
        %v2719 = vunpack.c.l.s4 1934713408
        %v2720 = vunpack.c.0.s8 %v2719
        %v2721 = vlaneseq
        %v2722 = vshrl.u32 %v2721, 7
        %v2723 = vsub.s32 %v2720, %v2722
        %v2724 = vrot.slane %v2717, %v2723
        %v2725 = vcombine.low %v2708, %v2716
        %v2727 = vunpack.c.l.s4 1934713408
        %v2728 = vunpack.c.0.s8 %v2727
        %v2729 = vlaneseq
        %v2730 = vshrl.u32 %v2729, 7
        %v2731 = vsub.s32 %v2728, %v2730
        %v2732 = vrot.slane %v2725, %v2731
        %v2733 = vcombine.low %v2724, %v2732
        %v2734 = vcombine.high %v2724, %v2732
        %v2735 = vcombine.low %v2657, %v2664
        %v2737 = vunpack.c.l.s4 1983009808
        %v2738 = vunpack.c.0.s8 %v2737
        %v2739 = vlaneseq
        %v2740 = vshrl.u32 %v2739, 7
        %v2741 = vsub.s32 %v2738, %v2740
        %v2742 = vrot.slane %v2735, %v2741
        %v2743 = vcombine.low %v2681, %v2682
        %v2745 = vunpack.c.l.s4 1983009808
        %v2746 = vunpack.c.0.s8 %v2745
        %v2747 = vlaneseq
        %v2748 = vshrl.u32 %v2747, 7
        %v2749 = vsub.s32 %v2746, %v2748
        %v2750 = vrot.slane %v2743, %v2749
        %v2751 = vcombine.low %v2673, %v2680
        %v2753 = vunpack.c.l.s4 1983009808
        %v2754 = vunpack.c.0.s8 %v2753
        %v2755 = vlaneseq
        %v2756 = vshrl.u32 %v2755, 7
        %v2757 = vsub.s32 %v2754, %v2756
        %v2758 = vrot.slane %v2751, %v2757
        %v2759 = vcombine.low %v2683, %v2684
        %v2761 = vunpack.c.l.s4 1983009808
        %v2762 = vunpack.c.0.s8 %v2761
        %v2763 = vlaneseq
        %v2764 = vshrl.u32 %v2763, 7
        %v2765 = vsub.s32 %v2762, %v2764
        %v2766 = vrot.slane %v2759, %v2765
        %v2767 = vcombine.low %v2742, %v2750
        %v2769 = vunpack.c.l.s4 1934713408
        %v2770 = vunpack.c.0.s8 %v2769
        %v2771 = vlaneseq
        %v2772 = vshrl.u32 %v2771, 7
        %v2773 = vsub.s32 %v2770, %v2772
        %v2774 = vrot.slane %v2767, %v2773
        %v2775 = vcombine.low %v2758, %v2766
        %v2777 = vunpack.c.l.s4 1934713408
        %v2778 = vunpack.c.0.s8 %v2777
        %v2779 = vlaneseq
        %v2780 = vshrl.u32 %v2779, 7
        %v2781 = vsub.s32 %v2778, %v2780
        %v2782 = vrot.slane %v2775, %v2781
        %v2783 = vcombine.low %v2774, %v2782
        %v2784 = vcombine.high %v2774, %v2782
        %v2785 = vpack.c.bf16 %v2783, %v2733
        %v2786 = vpack.c.bf16 %v2784, %v2734
        %v2787 = vld [vmem:[%s754] sm:$0xff]
        %v2788 = vld [vmem:[%s754 + $0x8] sm:$0xff]
        %v2789 = vld [vmem:[%s754 + $0x10] sm:$0xff]
        %v2790 = vld [vmem:[%s754 + $0x18] sm:$0xff]
        %v2791 = vld [vmem:[%s754 + $0x20] sm:$0xff]
        %v2792 = vld [vmem:[%s754 + $0x28] sm:$0xff]
        %v2793 = vld [vmem:[%s754 + $0x30] sm:$0xff]
        %v2794 = vld [vmem:[%s754 + $0x38] sm:$0xff]
        %v2795 = vld [vmem:[%s754 + $0x40] sm:$0xff]
        %v2796 = vld [vmem:[%s754 + $0x48] sm:$0xff]
        %v2797 = vld [vmem:[%s754 + $0x50] sm:$0xff]
        %v2798 = vld [vmem:[%s754 + $0x58] sm:$0xff]
        %v2799 = vld [vmem:[%s754 + $0x60] sm:$0xff]
        %v2800 = vld [vmem:[%s754 + $0x68] sm:$0xff]
        %v2801 = vld [vmem:[%s754 + $0x70] sm:$0xff]
        %v2802 = vld [vmem:[%s754 + $0x78] sm:$0xff]
        %v2803 = vld [vmem:[%s754 + $0x80] sm:$0xff]
        %v2804 = vld [vmem:[%s754 + $0x88] sm:$0xff]
        %v2805 = vld [vmem:[%s754 + $0x90] sm:$0xff]
        %v2806 = vld [vmem:[%s754 + $0x98] sm:$0xff]
        %v2807 = vld [vmem:[%s754 + $0xa0] sm:$0xff]
        %v2808 = vld [vmem:[%s754 + $0xa8] sm:$0xff]
        %v2809 = vld [vmem:[%s754 + $0xb0] sm:$0xff]
        %v2810 = vld [vmem:[%s754 + $0xb8] sm:$0xff]
        %v2811 = vld [vmem:[%s754 + $0xc0] sm:$0xff]
        %v2812 = vld [vmem:[%s754 + $0xc8] sm:$0xff]
        %v2813 = vld [vmem:[%s754 + $0xd0] sm:$0xff]
        %v2814 = vld [vmem:[%s754 + $0xd8] sm:$0xff]
        %v2815 = vld [vmem:[%s754 + $0xe0] sm:$0xff]
        %v2816 = vld [vmem:[%s754 + $0xe8] sm:$0xff]
        %v2817 = vld [vmem:[%s754 + $0xf0] sm:$0xff]
        %v2818 = vld [vmem:[%s754 + $0xf8] sm:$0xff]
        %v2819 = vld [vmem:[%s758] sm:$0x3]
        %v2821 = vlaneseq
        %v2822 = vshrl.u32 %v2821, 7
        %v2823 = vsub.s32 0, %v2822
        %v2824 = vrot.slane %v2819, %v2823
        %v2825 = vlaneseq
        %v2826 = vshrl.u32 %v2825, 7
        %v2827 = vsub.s32 1, %v2826
        %v2828 = vrot.slane %v2819, %v2827
        %v2863 = vunpack.c.l.b16 %v2787
        %v2864 = vunpack.c.h.b16 %v2787
        %v2865 = vunpack.c.l.b16 %v2788
        %v2866 = vunpack.c.h.b16 %v2788
        %v2867 = vunpack.c.l.b16 %v2789
        %v2868 = vunpack.c.h.b16 %v2789
        %v2869 = vunpack.c.l.b16 %v2790
        %v2870 = vunpack.c.h.b16 %v2790
        %v2871 = vunpack.c.l.b16 %v2791
        %v2872 = vunpack.c.h.b16 %v2791
        %v2873 = vunpack.c.l.b16 %v2792
        %v2874 = vunpack.c.h.b16 %v2792
        %v2875 = vunpack.c.l.b16 %v2793
        %v2876 = vunpack.c.h.b16 %v2793
        %v2877 = vunpack.c.l.b16 %v2794
        %v2878 = vunpack.c.h.b16 %v2794
        %v2879 = vunpack.c.l.b16 %v2795
        %v2880 = vunpack.c.h.b16 %v2795
        %v2881 = vunpack.c.l.b16 %v2796
        %v2882 = vunpack.c.h.b16 %v2796
        %v2883 = vunpack.c.l.b16 %v2797
        %v2884 = vunpack.c.h.b16 %v2797
        %v2885 = vunpack.c.l.b16 %v2798
        %v2886 = vunpack.c.h.b16 %v2798
        %v2887 = vunpack.c.l.b16 %v2799
        %v2888 = vunpack.c.h.b16 %v2799
        %v2889 = vunpack.c.l.b16 %v2800
        %v2890 = vunpack.c.h.b16 %v2800
        %v2891 = vunpack.c.l.b16 %v2801
        %v2892 = vunpack.c.h.b16 %v2801
        %v2893 = vunpack.c.l.b16 %v2802
        %v2894 = vunpack.c.h.b16 %v2802
        %v2895 = vunpack.c.l.b16 %v2803
        %v2896 = vunpack.c.h.b16 %v2803
        %v2897 = vunpack.c.l.b16 %v2804
        %v2898 = vunpack.c.h.b16 %v2804
        %v2899 = vunpack.c.l.b16 %v2805
        %v2900 = vunpack.c.h.b16 %v2805
        %v2901 = vunpack.c.l.b16 %v2806
        %v2902 = vunpack.c.h.b16 %v2806
        %v2903 = vunpack.c.l.b16 %v2807
        %v2904 = vunpack.c.h.b16 %v2807
        %v2905 = vunpack.c.l.b16 %v2808
        %v2906 = vunpack.c.h.b16 %v2808
        %v2907 = vunpack.c.l.b16 %v2809
        %v2908 = vunpack.c.h.b16 %v2809
        %v2909 = vunpack.c.l.b16 %v2810
        %v2910 = vunpack.c.h.b16 %v2810
        %v2911 = vunpack.c.l.b16 %v2811
        %v2912 = vunpack.c.h.b16 %v2811
        %v2913 = vunpack.c.l.b16 %v2812
        %v2914 = vunpack.c.h.b16 %v2812
        %v2915 = vunpack.c.l.b16 %v2813
        %v2916 = vunpack.c.h.b16 %v2813
        %v2917 = vunpack.c.l.b16 %v2814
        %v2918 = vunpack.c.h.b16 %v2814
        %v2919 = vunpack.c.l.b16 %v2815
        %v2920 = vunpack.c.h.b16 %v2815
        %v2921 = vunpack.c.l.b16 %v2816
        %v2922 = vunpack.c.h.b16 %v2816
        %v2923 = vunpack.c.l.b16 %v2817
        %v2924 = vunpack.c.h.b16 %v2817
        %v2925 = vunpack.c.l.b16 %v2818
        %v2926 = vunpack.c.h.b16 %v2818
        %v2927 = vpack.c.b16 %v2865, %v2863
        %v2928 = vpack.c.b16 %v2866, %v2864
        %v2929 = vpack.c.b16 %v2869, %v2867
        %v2930 = vpack.c.b16 %v2870, %v2868
        %v2931 = vpack.c.b16 %v2873, %v2871
        %v2932 = vpack.c.b16 %v2874, %v2872
        %v2933 = vpack.c.b16 %v2877, %v2875
        %v2934 = vpack.c.b16 %v2878, %v2876
        %v2935 = vpack.c.b16 %v2881, %v2879
        %v2936 = vpack.c.b16 %v2882, %v2880
        %v2937 = vpack.c.b16 %v2885, %v2883
        %v2938 = vpack.c.b16 %v2886, %v2884
        %v2939 = vpack.c.b16 %v2889, %v2887
        %v2940 = vpack.c.b16 %v2890, %v2888
        %v2941 = vpack.c.b16 %v2893, %v2891
        %v2942 = vpack.c.b16 %v2894, %v2892
        %v2943 = vpack.c.b16 %v2897, %v2895
        %v2944 = vpack.c.b16 %v2898, %v2896
        %v2945 = vpack.c.b16 %v2901, %v2899
        %v2946 = vpack.c.b16 %v2902, %v2900
        %v2947 = vpack.c.b16 %v2905, %v2903
        %v2948 = vpack.c.b16 %v2906, %v2904
        %v2949 = vpack.c.b16 %v2909, %v2907
        %v2950 = vpack.c.b16 %v2910, %v2908
        %v2951 = vpack.c.b16 %v2913, %v2911
        %v2952 = vpack.c.b16 %v2914, %v2912
        %v2953 = vpack.c.b16 %v2917, %v2915
        %v2954 = vpack.c.b16 %v2918, %v2916
        %v2955 = vpack.c.b16 %v2921, %v2919
        %v2956 = vpack.c.b16 %v2922, %v2920
        %v2957 = vpack.c.b16 %v2925, %v2923
        %v2958 = vpack.c.b16 %v2926, %v2924
        %2991 = vmatprep.subr.bf16.mxu0 %v2928
        %2992 = vmatpush1.bf16.msra.mxu0 %v2927
        %2993 = vmatprep.subr.bf16.mxu0 %v2930
        %2994 = vmatpush1.bf16.msra.mxu0 %v2929
        %2995 = vmatprep.subr.bf16.mxu0 %v2932
        %2996 = vmatpush1.bf16.msra.mxu0 %v2931
        %2997 = vmatprep.subr.bf16.mxu0 %v2934
        %2998 = vmatpush1.bf16.msra.mxu0 %v2933
        %2999 = vmatprep.subr.bf16.mxu0 %v2936
        %3000 = vmatpush1.bf16.msra.mxu0 %v2935
        %3001 = vmatprep.subr.bf16.mxu0 %v2938
        %3002 = vmatpush1.bf16.msra.mxu0 %v2937
        %3003 = vmatprep.subr.bf16.mxu0 %v2940
        %3004 = vmatpush1.bf16.msra.mxu0 %v2939
        %3005 = vmatprep.subr.bf16.mxu0 %v2942
        %3006 = vmatpush1.bf16.msra.mxu0 %v2941
        %3007 = vmatprep.subr.bf16.mxu0 %v2944
        %3008 = vmatpush1.bf16.msra.mxu0 %v2943
        %3009 = vmatprep.subr.bf16.mxu0 %v2946
        %3010 = vmatpush1.bf16.msra.mxu0 %v2945
        %3011 = vmatprep.subr.bf16.mxu0 %v2948
        %3012 = vmatpush1.bf16.msra.mxu0 %v2947
        %3013 = vmatprep.subr.bf16.mxu0 %v2950
        %3014 = vmatpush1.bf16.msra.mxu0 %v2949
        %3015 = vmatprep.subr.bf16.mxu0 %v2952
        %3016 = vmatpush1.bf16.msra.mxu0 %v2951
        %3017 = vmatprep.subr.bf16.mxu0 %v2954
        %3018 = vmatpush1.bf16.msra.mxu0 %v2953
        %3019 = vmatprep.subr.bf16.mxu0 %v2956
        %3020 = vmatpush1.bf16.msra.mxu0 %v2955
        %3021 = vmatprep.subr.bf16.mxu0 %v2958
        %3022 = vmatpush1.bf16.msra.mxu0 %v2957
        %3023 = vmatprep.mubr.bf16.mxu0 %v2786
        %3024 = vmatmul.mubr.bf16.gmra.mrb[0].mxu0 %v2785
        %v3025 = vpop.f32.mrb[0].mxu0
        %v3026 = vadd.f32 %v2824, %v3025
        %v3027 = vpop.f32.mrb[0].mxu0
        %v3028 = vadd.f32 %v2828, %v3027
        %v3029 = vpop.f32.mrb[0].mxu0
        %v3030 = vadd.f32 %v2824, %v3029
        %v3031 = vpop.f32.mrb[0].mxu0
        %v3032 = vadd.f32 %v2828, %v3031
        %3033 = vdwg.mxu0
        %v3034 = vadd.f32 %v3026, %v793
        %v3035 = vadd.f32 %v3028, %v794
        %v3036 = vadd.f32 %v3030, %v795
        %v3037 = vadd.f32 %v3032, %v796
        %v3038 = vld [vmem:[%s762] sm:$0x3]
        %v3039 = vld [vmem:[%s766] sm:$0x3]
        %v3040 = vadd.f32 %v3034, %v3035
        %3041 = vadd.xlane.f32.xlu0 %v3040
        %v3042 = vpop.xlane.xlu0 %3041
        %v3043 = vadd.f32 %v3036, %v3037
        %3044 = vadd.xlane.f32.xlu0 %v3043
        %v3045 = vpop.xlane.xlu0 %3044
        %v3046 = vmul.f32 %v3042, %v805
        %v3047 = vmul.f32 %v3045, %v805
        %v3048 = vsub.f32 %v3034, %v3046
        %v3049 = vsub.f32 %v3035, %v3046
        %v3050 = vsub.f32 %v3036, %v3047
        %v3051 = vsub.f32 %v3037, %v3047
        %v3052 = vmul.f32 %v3048, %v3048
        %v3053 = vmul.f32 %v3049, %v3049
        %v3054 = vmul.f32 %v3050, %v3050
        %v3055 = vmul.f32 %v3051, %v3051
        %v3056 = vadd.f32 %v3052, %v3053
        %3057 = vadd.xlane.f32.xlu0 %v3056
        %v3058 = vpop.xlane.xlu0 %3057
        %v3059 = vadd.f32 %v3054, %v3055
        %3060 = vadd.xlane.f32.xlu0 %v3059
        %v3061 = vpop.xlane.xlu0 %3060
        %v3062 = vmul.f32 %v3058, %v805
        %v3063 = vmul.f32 %v3061, %v805
        %v3064 = vadd.f32 %v3062, 1e-05
        %v3065 = vadd.f32 %v3063, 1e-05
        %v3066 = vrsqrt.pop %v3064
        %v3067 = vmul.f32 %v3064, %v3066
        %vm3068 = vcmp.eq.f32.partialorder %v3064, inf
        %v3069 = vsel %vm3068, %v3064, %v3067
        %vm3070 = vcmp.eq.f32.partialorder %v3064, 0.0
        %v3071 = vand.u32 %v3064, 2147483648
        %v3072 = vsel %vm3070, %v3071, %v3069
        %v3073 = vrsqrt.pop %v3065
        %v3074 = vmul.f32 %v3065, %v3073
        %vm3075 = vcmp.eq.f32.partialorder %v3065, inf
        %v3076 = vsel %vm3075, %v3065, %v3074
        %vm3077 = vcmp.eq.f32.partialorder %v3065, 0.0
        %v3078 = vand.u32 %v3065, 2147483648
        %v3079 = vsel %vm3077, %v3078, %v3076
        %v3080 = vrcp.pop %v3072
        %v3081 = vmul.f32 %v3048, %v3080
        %v3082 = vmul.f32 %v3049, %v3080
        %v3083 = vrcp.pop %v3079
        %v3084 = vmul.f32 %v3050, %v3083
        %v3085 = vmul.f32 %v3051, %v3083
        %v3087 = vlaneseq
        %v3088 = vshrl.u32 %v3087, 7
        %v3089 = vsub.s32 0, %v3088
        %v3090 = vrot.slane %v3038, %v3089
        %v3091 = vlaneseq
        %v3092 = vshrl.u32 %v3091, 7
        %v3093 = vsub.s32 1, %v3092
        %v3094 = vrot.slane %v3038, %v3093
        %v3097 = vmul.f32 %v3090, %v3081
        %v3098 = vmul.f32 %v3094, %v3082
        %v3099 = vmul.f32 %v3090, %v3084
        %v3100 = vmul.f32 %v3094, %v3085
        %v3102 = vlaneseq
        %v3103 = vshrl.u32 %v3102, 7
        %v3104 = vsub.s32 0, %v3103
        %v3105 = vrot.slane %v3039, %v3104
        %v3106 = vlaneseq
        %v3107 = vshrl.u32 %v3106, 7
        %v3108 = vsub.s32 1, %v3107
        %v3109 = vrot.slane %v3039, %v3108
        %v3112 = vadd.f32 %v3097, %v3105
        %v3113 = vadd.f32 %v3098, %v3109
        %v3114 = vadd.f32 %v3099, %v3105
        %v3115 = vadd.f32 %v3100, %v3109
        %v3116 = vpack.c.bf16 %v3114, %v3112
        %v3117 = vpack.c.bf16 %v3115, %v3113
        %v3118 = vld [vmem:[%s625] sm:$0xff]
        %v3119 = vld [vmem:[%s625 + $0x8] sm:$0xff]
        %v3120 = vld [vmem:[%s625 + $0x10] sm:$0xff]
        %v3121 = vld [vmem:[%s625 + $0x18] sm:$0xff]
        %v3122 = vld [vmem:[%s625 + $0x20] sm:$0xff]
        %v3123 = vld [vmem:[%s625 + $0x28] sm:$0xff]
        %v3124 = vld [vmem:[%s625 + $0x30] sm:$0xff]
        %v3125 = vld [vmem:[%s625 + $0x38] sm:$0xff]
        %v3126 = vld [vmem:[%s625 + $0x40] sm:$0xff]
        %v3127 = vld [vmem:[%s625 + $0x48] sm:$0xff]
        %v3128 = vld [vmem:[%s625 + $0x50] sm:$0xff]
        %v3129 = vld [vmem:[%s625 + $0x58] sm:$0xff]
        %v3130 = vld [vmem:[%s625 + $0x60] sm:$0xff]
        %v3131 = vld [vmem:[%s625 + $0x68] sm:$0xff]
        %v3132 = vld [vmem:[%s625 + $0x70] sm:$0xff]
        %v3133 = vld [vmem:[%s625 + $0x78] sm:$0xff]
        %v3134 = vld [vmem:[%s625 + $0x80] sm:$0xff]
        %v3135 = vld [vmem:[%s625 + $0x88] sm:$0xff]
        %v3136 = vld [vmem:[%s625 + $0x90] sm:$0xff]
        %v3137 = vld [vmem:[%s625 + $0x98] sm:$0xff]
        %v3138 = vld [vmem:[%s625 + $0xa0] sm:$0xff]
        %v3139 = vld [vmem:[%s625 + $0xa8] sm:$0xff]
        %v3140 = vld [vmem:[%s625 + $0xb0] sm:$0xff]
        %v3141 = vld [vmem:[%s625 + $0xb8] sm:$0xff]
        %v3142 = vld [vmem:[%s625 + $0xc0] sm:$0xff]
        %v3143 = vld [vmem:[%s625 + $0xc8] sm:$0xff]
        %v3144 = vld [vmem:[%s625 + $0xd0] sm:$0xff]
        %v3145 = vld [vmem:[%s625 + $0xd8] sm:$0xff]
        %v3146 = vld [vmem:[%s625 + $0xe0] sm:$0xff]
        %v3147 = vld [vmem:[%s625 + $0xe8] sm:$0xff]
        %v3148 = vld [vmem:[%s625 + $0xf0] sm:$0xff]
        %v3149 = vld [vmem:[%s625 + $0xf8] sm:$0xff]
        %v3150 = vld [vmem:[%s625 + $0x100] sm:$0xff]
        %v3151 = vld [vmem:[%s625 + $0x108] sm:$0xff]
        %v3152 = vld [vmem:[%s625 + $0x110] sm:$0xff]
        %v3153 = vld [vmem:[%s625 + $0x118] sm:$0xff]
        %v3154 = vld [vmem:[%s625 + $0x120] sm:$0xff]
        %v3155 = vld [vmem:[%s625 + $0x128] sm:$0xff]
        %v3156 = vld [vmem:[%s625 + $0x130] sm:$0xff]
        %v3157 = vld [vmem:[%s625 + $0x138] sm:$0xff]
        %v3158 = vld [vmem:[%s625 + $0x140] sm:$0xff]
        %v3159 = vld [vmem:[%s625 + $0x148] sm:$0xff]
        %v3160 = vld [vmem:[%s625 + $0x150] sm:$0xff]
        %v3161 = vld [vmem:[%s625 + $0x158] sm:$0xff]
        %v3162 = vld [vmem:[%s625 + $0x160] sm:$0xff]
        %v3163 = vld [vmem:[%s625 + $0x168] sm:$0xff]
        %v3164 = vld [vmem:[%s625 + $0x170] sm:$0xff]
        %v3165 = vld [vmem:[%s625 + $0x178] sm:$0xff]
        %v3166 = vld [vmem:[%s625 + $0x180] sm:$0xff]
        %v3167 = vld [vmem:[%s625 + $0x188] sm:$0xff]
        %v3168 = vld [vmem:[%s625 + $0x190] sm:$0xff]
        %v3169 = vld [vmem:[%s625 + $0x198] sm:$0xff]
        %v3170 = vld [vmem:[%s625 + $0x1a0] sm:$0xff]
        %v3171 = vld [vmem:[%s625 + $0x1a8] sm:$0xff]
        %v3172 = vld [vmem:[%s625 + $0x1b0] sm:$0xff]
        %v3173 = vld [vmem:[%s625 + $0x1b8] sm:$0xff]
        %v3174 = vld [vmem:[%s625 + $0x1c0] sm:$0xff]
        %v3175 = vld [vmem:[%s625 + $0x1c8] sm:$0xff]
        %v3176 = vld [vmem:[%s625 + $0x1d0] sm:$0xff]
        %v3177 = vld [vmem:[%s625 + $0x1d8] sm:$0xff]
        %v3178 = vld [vmem:[%s625 + $0x1e0] sm:$0xff]
        %v3179 = vld [vmem:[%s625 + $0x1e8] sm:$0xff]
        %v3180 = vld [vmem:[%s625 + $0x1f0] sm:$0xff]
        %v3181 = vld [vmem:[%s625 + $0x1f8] sm:$0xff]
        %v3182 = vld [vmem:[%s625 + $0x200] sm:$0xff]
        %v3183 = vld [vmem:[%s625 + $0x208] sm:$0xff]
        %v3184 = vld [vmem:[%s625 + $0x210] sm:$0xff]
        %v3185 = vld [vmem:[%s625 + $0x218] sm:$0xff]
        %v3186 = vld [vmem:[%s625 + $0x220] sm:$0xff]
        %v3187 = vld [vmem:[%s625 + $0x228] sm:$0xff]
        %v3188 = vld [vmem:[%s625 + $0x230] sm:$0xff]
        %v3189 = vld [vmem:[%s625 + $0x238] sm:$0xff]
        %v3190 = vld [vmem:[%s625 + $0x240] sm:$0xff]
        %v3191 = vld [vmem:[%s625 + $0x248] sm:$0xff]
        %v3192 = vld [vmem:[%s625 + $0x250] sm:$0xff]
        %v3193 = vld [vmem:[%s625 + $0x258] sm:$0xff]
        %v3194 = vld [vmem:[%s625 + $0x260] sm:$0xff]
        %v3195 = vld [vmem:[%s625 + $0x268] sm:$0xff]
        %v3196 = vld [vmem:[%s625 + $0x270] sm:$0xff]
        %v3197 = vld [vmem:[%s625 + $0x278] sm:$0xff]
        %v3198 = vld [vmem:[%s625 + $0x280] sm:$0xff]
        %v3199 = vld [vmem:[%s625 + $0x288] sm:$0xff]
        %v3200 = vld [vmem:[%s625 + $0x290] sm:$0xff]
        %v3201 = vld [vmem:[%s625 + $0x298] sm:$0xff]
        %v3202 = vld [vmem:[%s625 + $0x2a0] sm:$0xff]
        %v3203 = vld [vmem:[%s625 + $0x2a8] sm:$0xff]
        %v3204 = vld [vmem:[%s625 + $0x2b0] sm:$0xff]
        %v3205 = vld [vmem:[%s625 + $0x2b8] sm:$0xff]
        %v3206 = vld [vmem:[%s625 + $0x2c0] sm:$0xff]
        %v3207 = vld [vmem:[%s625 + $0x2c8] sm:$0xff]
        %v3208 = vld [vmem:[%s625 + $0x2d0] sm:$0xff]
        %v3209 = vld [vmem:[%s625 + $0x2d8] sm:$0xff]
        %v3210 = vld [vmem:[%s625 + $0x2e0] sm:$0xff]
        %v3211 = vld [vmem:[%s625 + $0x2e8] sm:$0xff]
        %v3212 = vld [vmem:[%s625 + $0x2f0] sm:$0xff]
        %v3213 = vld [vmem:[%s625 + $0x2f8] sm:$0xff]
        %v3214 = vld [vmem:[%s625 + $0x300] sm:$0xff]
        %v3215 = vld [vmem:[%s625 + $0x308] sm:$0xff]
        %v3216 = vld [vmem:[%s625 + $0x310] sm:$0xff]
        %v3217 = vld [vmem:[%s625 + $0x318] sm:$0xff]
        %v3218 = vld [vmem:[%s625 + $0x320] sm:$0xff]
        %v3219 = vld [vmem:[%s625 + $0x328] sm:$0xff]
        %v3220 = vld [vmem:[%s625 + $0x330] sm:$0xff]
        %v3221 = vld [vmem:[%s625 + $0x338] sm:$0xff]
        %v3222 = vld [vmem:[%s625 + $0x340] sm:$0xff]
        %v3223 = vld [vmem:[%s625 + $0x348] sm:$0xff]
        %v3224 = vld [vmem:[%s625 + $0x350] sm:$0xff]
        %v3225 = vld [vmem:[%s625 + $0x358] sm:$0xff]
        %v3226 = vld [vmem:[%s625 + $0x360] sm:$0xff]
        %v3227 = vld [vmem:[%s625 + $0x368] sm:$0xff]
        %v3228 = vld [vmem:[%s625 + $0x370] sm:$0xff]
        %v3229 = vld [vmem:[%s625 + $0x378] sm:$0xff]
        %v3230 = vld [vmem:[%s625 + $0x380] sm:$0xff]
        %v3231 = vld [vmem:[%s625 + $0x388] sm:$0xff]
        %v3232 = vld [vmem:[%s625 + $0x390] sm:$0xff]
        %v3233 = vld [vmem:[%s625 + $0x398] sm:$0xff]
        %v3234 = vld [vmem:[%s625 + $0x3a0] sm:$0xff]
        %v3235 = vld [vmem:[%s625 + $0x3a8] sm:$0xff]
        %v3236 = vld [vmem:[%s625 + $0x3b0] sm:$0xff]
        %v3237 = vld [vmem:[%s625 + $0x3b8] sm:$0xff]
        %v3238 = vld [vmem:[%s625 + $0x3c0] sm:$0xff]
        %v3239 = vld [vmem:[%s625 + $0x3c8] sm:$0xff]
        %v3240 = vld [vmem:[%s625 + $0x3d0] sm:$0xff]
        %v3241 = vld [vmem:[%s625 + $0x3d8] sm:$0xff]
        %v3242 = vld [vmem:[%s625 + $0x3e0] sm:$0xff]
        %v3243 = vld [vmem:[%s625 + $0x3e8] sm:$0xff]
        %v3244 = vld [vmem:[%s625 + $0x3f0] sm:$0xff]
        %v3245 = vld [vmem:[%s625 + $0x3f8] sm:$0xff]
        %v3246 = vld [vmem:[%s770] sm:$0xff]
        %v3248 = vlaneseq
        %v3249 = vshrl.u32 %v3248, 7
        %v3250 = vsub.s32 0, %v3249
        %v3251 = vrot.slane %v3246, %v3250
        %v3252 = vlaneseq
        %v3253 = vshrl.u32 %v3252, 7
        %v3254 = vsub.s32 1, %v3253
        %v3255 = vrot.slane %v3246, %v3254
        %v3256 = vlaneseq
        %v3257 = vshrl.u32 %v3256, 7
        %v3258 = vsub.s32 2, %v3257
        %v3259 = vrot.slane %v3246, %v3258
        %v3260 = vlaneseq
        %v3261 = vshrl.u32 %v3260, 7
        %v3262 = vsub.s32 3, %v3261
        %v3263 = vrot.slane %v3246, %v3262
        %v3264 = vlaneseq
        %v3265 = vshrl.u32 %v3264, 7
        %v3266 = vsub.s32 4, %v3265
        %v3267 = vrot.slane %v3246, %v3266
        %v3268 = vlaneseq
        %v3269 = vshrl.u32 %v3268, 7
        %v3270 = vsub.s32 5, %v3269
        %v3271 = vrot.slane %v3246, %v3270
        %v3272 = vlaneseq
        %v3273 = vshrl.u32 %v3272, 7
        %v3274 = vsub.s32 6, %v3273
        %v3275 = vrot.slane %v3246, %v3274
        %v3276 = vlaneseq
        %v3277 = vshrl.u32 %v3276, 7
        %v3278 = vsub.s32 7, %v3277
        %v3279 = vrot.slane %v3246, %v3278
        %v3416 = vunpack.c.l.b16 %v3118
        %v3417 = vunpack.c.h.b16 %v3118
        %v3418 = vunpack.c.l.b16 %v3119
        %v3419 = vunpack.c.h.b16 %v3119
        %v3420 = vunpack.c.l.b16 %v3120
        %v3421 = vunpack.c.h.b16 %v3120
        %v3422 = vunpack.c.l.b16 %v3121
        %v3423 = vunpack.c.h.b16 %v3121
        %v3424 = vunpack.c.l.b16 %v3122
        %v3425 = vunpack.c.h.b16 %v3122
        %v3426 = vunpack.c.l.b16 %v3123
        %v3427 = vunpack.c.h.b16 %v3123
        %v3428 = vunpack.c.l.b16 %v3124
        %v3429 = vunpack.c.h.b16 %v3124
        %v3430 = vunpack.c.l.b16 %v3125
        %v3431 = vunpack.c.h.b16 %v3125
        %v3432 = vunpack.c.l.b16 %v3126
        %v3433 = vunpack.c.h.b16 %v3126
        %v3434 = vunpack.c.l.b16 %v3127
        %v3435 = vunpack.c.h.b16 %v3127
        %v3436 = vunpack.c.l.b16 %v3128
        %v3437 = vunpack.c.h.b16 %v3128
        %v3438 = vunpack.c.l.b16 %v3129
        %v3439 = vunpack.c.h.b16 %v3129
        %v3440 = vunpack.c.l.b16 %v3130
        %v3441 = vunpack.c.h.b16 %v3130
        %v3442 = vunpack.c.l.b16 %v3131
        %v3443 = vunpack.c.h.b16 %v3131
        %v3444 = vunpack.c.l.b16 %v3132
        %v3445 = vunpack.c.h.b16 %v3132
        %v3446 = vunpack.c.l.b16 %v3133
        %v3447 = vunpack.c.h.b16 %v3133
        %v3448 = vunpack.c.l.b16 %v3134
        %v3449 = vunpack.c.h.b16 %v3134
        %v3450 = vunpack.c.l.b16 %v3135
        %v3451 = vunpack.c.h.b16 %v3135
        %v3452 = vunpack.c.l.b16 %v3136
        %v3453 = vunpack.c.h.b16 %v3136
        %v3454 = vunpack.c.l.b16 %v3137
        %v3455 = vunpack.c.h.b16 %v3137
        %v3456 = vunpack.c.l.b16 %v3138
        %v3457 = vunpack.c.h.b16 %v3138
        %v3458 = vunpack.c.l.b16 %v3139
        %v3459 = vunpack.c.h.b16 %v3139
        %v3460 = vunpack.c.l.b16 %v3140
        %v3461 = vunpack.c.h.b16 %v3140
        %v3462 = vunpack.c.l.b16 %v3141
        %v3463 = vunpack.c.h.b16 %v3141
        %v3464 = vunpack.c.l.b16 %v3142
        %v3465 = vunpack.c.h.b16 %v3142
        %v3466 = vunpack.c.l.b16 %v3143
        %v3467 = vunpack.c.h.b16 %v3143
        %v3468 = vunpack.c.l.b16 %v3144
        %v3469 = vunpack.c.h.b16 %v3144
        %v3470 = vunpack.c.l.b16 %v3145
        %v3471 = vunpack.c.h.b16 %v3145
        %v3472 = vunpack.c.l.b16 %v3146
        %v3473 = vunpack.c.h.b16 %v3146
        %v3474 = vunpack.c.l.b16 %v3147
        %v3475 = vunpack.c.h.b16 %v3147
        %v3476 = vunpack.c.l.b16 %v3148
        %v3477 = vunpack.c.h.b16 %v3148
        %v3478 = vunpack.c.l.b16 %v3149
        %v3479 = vunpack.c.h.b16 %v3149
        %v3480 = vunpack.c.l.b16 %v3150
        %v3481 = vunpack.c.h.b16 %v3150
        %v3482 = vunpack.c.l.b16 %v3151
        %v3483 = vunpack.c.h.b16 %v3151
        %v3484 = vunpack.c.l.b16 %v3152
        %v3485 = vunpack.c.h.b16 %v3152
        %v3486 = vunpack.c.l.b16 %v3153
        %v3487 = vunpack.c.h.b16 %v3153
        %v3488 = vunpack.c.l.b16 %v3154
        %v3489 = vunpack.c.h.b16 %v3154
        %v3490 = vunpack.c.l.b16 %v3155
        %v3491 = vunpack.c.h.b16 %v3155
        %v3492 = vunpack.c.l.b16 %v3156
        %v3493 = vunpack.c.h.b16 %v3156
        %v3494 = vunpack.c.l.b16 %v3157
        %v3495 = vunpack.c.h.b16 %v3157
        %v3496 = vunpack.c.l.b16 %v3158
        %v3497 = vunpack.c.h.b16 %v3158
        %v3498 = vunpack.c.l.b16 %v3159
        %v3499 = vunpack.c.h.b16 %v3159
        %v3500 = vunpack.c.l.b16 %v3160
        %v3501 = vunpack.c.h.b16 %v3160
        %v3502 = vunpack.c.l.b16 %v3161
        %v3503 = vunpack.c.h.b16 %v3161
        %v3504 = vunpack.c.l.b16 %v3162
        %v3505 = vunpack.c.h.b16 %v3162
        %v3506 = vunpack.c.l.b16 %v3163
        %v3507 = vunpack.c.h.b16 %v3163
        %v3508 = vunpack.c.l.b16 %v3164
        %v3509 = vunpack.c.h.b16 %v3164
        %v3510 = vunpack.c.l.b16 %v3165
        %v3511 = vunpack.c.h.b16 %v3165
        %v3512 = vunpack.c.l.b16 %v3166
        %v3513 = vunpack.c.h.b16 %v3166
        %v3514 = vunpack.c.l.b16 %v3167
        %v3515 = vunpack.c.h.b16 %v3167
        %v3516 = vunpack.c.l.b16 %v3168
        %v3517 = vunpack.c.h.b16 %v3168
        %v3518 = vunpack.c.l.b16 %v3169
        %v3519 = vunpack.c.h.b16 %v3169
        %v3520 = vunpack.c.l.b16 %v3170
        %v3521 = vunpack.c.h.b16 %v3170
        %v3522 = vunpack.c.l.b16 %v3171
        %v3523 = vunpack.c.h.b16 %v3171
        %v3524 = vunpack.c.l.b16 %v3172
        %v3525 = vunpack.c.h.b16 %v3172
        %v3526 = vunpack.c.l.b16 %v3173
        %v3527 = vunpack.c.h.b16 %v3173
        %v3528 = vunpack.c.l.b16 %v3174
        %v3529 = vunpack.c.h.b16 %v3174
        %v3530 = vunpack.c.l.b16 %v3175
        %v3531 = vunpack.c.h.b16 %v3175
        %v3532 = vunpack.c.l.b16 %v3176
        %v3533 = vunpack.c.h.b16 %v3176
        %v3534 = vunpack.c.l.b16 %v3177
        %v3535 = vunpack.c.h.b16 %v3177
        %v3536 = vunpack.c.l.b16 %v3178
        %v3537 = vunpack.c.h.b16 %v3178
        %v3538 = vunpack.c.l.b16 %v3179
        %v3539 = vunpack.c.h.b16 %v3179
        %v3540 = vunpack.c.l.b16 %v3180
        %v3541 = vunpack.c.h.b16 %v3180
        %v3542 = vunpack.c.l.b16 %v3181
        %v3543 = vunpack.c.h.b16 %v3181
        %v3544 = vunpack.c.l.b16 %v3182
        %v3545 = vunpack.c.h.b16 %v3182
        %v3546 = vunpack.c.l.b16 %v3183
        %v3547 = vunpack.c.h.b16 %v3183
        %v3548 = vunpack.c.l.b16 %v3184
        %v3549 = vunpack.c.h.b16 %v3184
        %v3550 = vunpack.c.l.b16 %v3185
        %v3551 = vunpack.c.h.b16 %v3185
        %v3552 = vunpack.c.l.b16 %v3186
        %v3553 = vunpack.c.h.b16 %v3186
        %v3554 = vunpack.c.l.b16 %v3187
        %v3555 = vunpack.c.h.b16 %v3187
        %v3556 = vunpack.c.l.b16 %v3188
        %v3557 = vunpack.c.h.b16 %v3188
        %v3558 = vunpack.c.l.b16 %v3189
        %v3559 = vunpack.c.h.b16 %v3189
        %v3560 = vunpack.c.l.b16 %v3190
        %v3561 = vunpack.c.h.b16 %v3190
        %v3562 = vunpack.c.l.b16 %v3191
        %v3563 = vunpack.c.h.b16 %v3191
        %v3564 = vunpack.c.l.b16 %v3192
        %v3565 = vunpack.c.h.b16 %v3192
        %v3566 = vunpack.c.l.b16 %v3193
        %v3567 = vunpack.c.h.b16 %v3193
        %v3568 = vunpack.c.l.b16 %v3194
        %v3569 = vunpack.c.h.b16 %v3194
        %v3570 = vunpack.c.l.b16 %v3195
        %v3571 = vunpack.c.h.b16 %v3195
        %v3572 = vunpack.c.l.b16 %v3196
        %v3573 = vunpack.c.h.b16 %v3196
        %v3574 = vunpack.c.l.b16 %v3197
        %v3575 = vunpack.c.h.b16 %v3197
        %v3576 = vunpack.c.l.b16 %v3198
        %v3577 = vunpack.c.h.b16 %v3198
        %v3578 = vunpack.c.l.b16 %v3199
        %v3579 = vunpack.c.h.b16 %v3199
        %v3580 = vunpack.c.l.b16 %v3200
        %v3581 = vunpack.c.h.b16 %v3200
        %v3582 = vunpack.c.l.b16 %v3201
        %v3583 = vunpack.c.h.b16 %v3201
        %v3584 = vunpack.c.l.b16 %v3202
        %v3585 = vunpack.c.h.b16 %v3202
        %v3586 = vunpack.c.l.b16 %v3203
        %v3587 = vunpack.c.h.b16 %v3203
        %v3588 = vunpack.c.l.b16 %v3204
        %v3589 = vunpack.c.h.b16 %v3204
        %v3590 = vunpack.c.l.b16 %v3205
        %v3591 = vunpack.c.h.b16 %v3205
        %v3592 = vunpack.c.l.b16 %v3206
        %v3593 = vunpack.c.h.b16 %v3206
        %v3594 = vunpack.c.l.b16 %v3207
        %v3595 = vunpack.c.h.b16 %v3207
        %v3596 = vunpack.c.l.b16 %v3208
        %v3597 = vunpack.c.h.b16 %v3208
        %v3598 = vunpack.c.l.b16 %v3209
        %v3599 = vunpack.c.h.b16 %v3209
        %v3600 = vunpack.c.l.b16 %v3210
        %v3601 = vunpack.c.h.b16 %v3210
        %v3602 = vunpack.c.l.b16 %v3211
        %v3603 = vunpack.c.h.b16 %v3211
        %v3604 = vunpack.c.l.b16 %v3212
        %v3605 = vunpack.c.h.b16 %v3212
        %v3606 = vunpack.c.l.b16 %v3213
        %v3607 = vunpack.c.h.b16 %v3213
        %v3608 = vunpack.c.l.b16 %v3214
        %v3609 = vunpack.c.h.b16 %v3214
        %v3610 = vunpack.c.l.b16 %v3215
        %v3611 = vunpack.c.h.b16 %v3215
        %v3612 = vunpack.c.l.b16 %v3216
        %v3613 = vunpack.c.h.b16 %v3216
        %v3614 = vunpack.c.l.b16 %v3217
        %v3615 = vunpack.c.h.b16 %v3217
        %v3616 = vunpack.c.l.b16 %v3218
        %v3617 = vunpack.c.h.b16 %v3218
        %v3618 = vunpack.c.l.b16 %v3219
        %v3619 = vunpack.c.h.b16 %v3219
        %v3620 = vunpack.c.l.b16 %v3220
        %v3621 = vunpack.c.h.b16 %v3220
        %v3622 = vunpack.c.l.b16 %v3221
        %v3623 = vunpack.c.h.b16 %v3221
        %v3624 = vunpack.c.l.b16 %v3222
        %v3625 = vunpack.c.h.b16 %v3222
        %v3626 = vunpack.c.l.b16 %v3223
        %v3627 = vunpack.c.h.b16 %v3223
        %v3628 = vunpack.c.l.b16 %v3224
        %v3629 = vunpack.c.h.b16 %v3224
        %v3630 = vunpack.c.l.b16 %v3225
        %v3631 = vunpack.c.h.b16 %v3225
        %v3632 = vunpack.c.l.b16 %v3226
        %v3633 = vunpack.c.h.b16 %v3226
        %v3634 = vunpack.c.l.b16 %v3227
        %v3635 = vunpack.c.h.b16 %v3227
        %v3636 = vunpack.c.l.b16 %v3228
        %v3637 = vunpack.c.h.b16 %v3228
        %v3638 = vunpack.c.l.b16 %v3229
        %v3639 = vunpack.c.h.b16 %v3229
        %v3640 = vunpack.c.l.b16 %v3230
        %v3641 = vunpack.c.h.b16 %v3230
        %v3642 = vunpack.c.l.b16 %v3231
        %v3643 = vunpack.c.h.b16 %v3231
        %v3644 = vunpack.c.l.b16 %v3232
        %v3645 = vunpack.c.h.b16 %v3232
        %v3646 = vunpack.c.l.b16 %v3233
        %v3647 = vunpack.c.h.b16 %v3233
        %v3648 = vunpack.c.l.b16 %v3234
        %v3649 = vunpack.c.h.b16 %v3234
        %v3650 = vunpack.c.l.b16 %v3235
        %v3651 = vunpack.c.h.b16 %v3235
        %v3652 = vunpack.c.l.b16 %v3236
        %v3653 = vunpack.c.h.b16 %v3236
        %v3654 = vunpack.c.l.b16 %v3237
        %v3655 = vunpack.c.h.b16 %v3237
        %v3656 = vunpack.c.l.b16 %v3238
        %v3657 = vunpack.c.h.b16 %v3238
        %v3658 = vunpack.c.l.b16 %v3239
        %v3659 = vunpack.c.h.b16 %v3239
        %v3660 = vunpack.c.l.b16 %v3240
        %v3661 = vunpack.c.h.b16 %v3240
        %v3662 = vunpack.c.l.b16 %v3241
        %v3663 = vunpack.c.h.b16 %v3241
        %v3664 = vunpack.c.l.b16 %v3242
        %v3665 = vunpack.c.h.b16 %v3242
        %v3666 = vunpack.c.l.b16 %v3243
        %v3667 = vunpack.c.h.b16 %v3243
        %v3668 = vunpack.c.l.b16 %v3244
        %v3669 = vunpack.c.h.b16 %v3244
        %v3670 = vunpack.c.l.b16 %v3245
        %v3671 = vunpack.c.h.b16 %v3245
        %v3672 = vpack.c.b16 %v3424, %v3416
        %v3673 = vpack.c.b16 %v3425, %v3417
        %v3674 = vpack.c.b16 %v3426, %v3418
        %v3675 = vpack.c.b16 %v3427, %v3419
        %v3676 = vpack.c.b16 %v3428, %v3420
        %v3677 = vpack.c.b16 %v3429, %v3421
        %v3678 = vpack.c.b16 %v3430, %v3422
        %v3679 = vpack.c.b16 %v3431, %v3423
        %v3680 = vpack.c.b16 %v3440, %v3432
        %v3681 = vpack.c.b16 %v3441, %v3433
        %v3682 = vpack.c.b16 %v3442, %v3434
        %v3683 = vpack.c.b16 %v3443, %v3435
        %v3684 = vpack.c.b16 %v3444, %v3436
        %v3685 = vpack.c.b16 %v3445, %v3437
        %v3686 = vpack.c.b16 %v3446, %v3438
        %v3687 = vpack.c.b16 %v3447, %v3439
        %v3688 = vpack.c.b16 %v3456, %v3448
        %v3689 = vpack.c.b16 %v3457, %v3449
        %v3690 = vpack.c.b16 %v3458, %v3450
        %v3691 = vpack.c.b16 %v3459, %v3451
        %v3692 = vpack.c.b16 %v3460, %v3452
        %v3693 = vpack.c.b16 %v3461, %v3453
        %v3694 = vpack.c.b16 %v3462, %v3454
        %v3695 = vpack.c.b16 %v3463, %v3455
        %v3696 = vpack.c.b16 %v3472, %v3464
        %v3697 = vpack.c.b16 %v3473, %v3465
        %v3698 = vpack.c.b16 %v3474, %v3466
        %v3699 = vpack.c.b16 %v3475, %v3467
        %v3700 = vpack.c.b16 %v3476, %v3468
        %v3701 = vpack.c.b16 %v3477, %v3469
        %v3702 = vpack.c.b16 %v3478, %v3470
        %v3703 = vpack.c.b16 %v3479, %v3471
        %v3704 = vpack.c.b16 %v3488, %v3480
        %v3705 = vpack.c.b16 %v3489, %v3481
        %v3706 = vpack.c.b16 %v3490, %v3482
        %v3707 = vpack.c.b16 %v3491, %v3483
        %v3708 = vpack.c.b16 %v3492, %v3484
        %v3709 = vpack.c.b16 %v3493, %v3485
        %v3710 = vpack.c.b16 %v3494, %v3486
        %v3711 = vpack.c.b16 %v3495, %v3487
        %v3712 = vpack.c.b16 %v3504, %v3496
        %v3713 = vpack.c.b16 %v3505, %v3497
        %v3714 = vpack.c.b16 %v3506, %v3498
        %v3715 = vpack.c.b16 %v3507, %v3499
        %v3716 = vpack.c.b16 %v3508, %v3500
        %v3717 = vpack.c.b16 %v3509, %v3501
        %v3718 = vpack.c.b16 %v3510, %v3502
        %v3719 = vpack.c.b16 %v3511, %v3503
        %v3720 = vpack.c.b16 %v3520, %v3512
        %v3721 = vpack.c.b16 %v3521, %v3513
        %v3722 = vpack.c.b16 %v3522, %v3514
        %v3723 = vpack.c.b16 %v3523, %v3515
        %v3724 = vpack.c.b16 %v3524, %v3516
        %v3725 = vpack.c.b16 %v3525, %v3517
        %v3726 = vpack.c.b16 %v3526, %v3518
        %v3727 = vpack.c.b16 %v3527, %v3519
        %v3728 = vpack.c.b16 %v3536, %v3528
        %v3729 = vpack.c.b16 %v3537, %v3529
        %v3730 = vpack.c.b16 %v3538, %v3530
        %v3731 = vpack.c.b16 %v3539, %v3531
        %v3732 = vpack.c.b16 %v3540, %v3532
        %v3733 = vpack.c.b16 %v3541, %v3533
        %v3734 = vpack.c.b16 %v3542, %v3534
        %v3735 = vpack.c.b16 %v3543, %v3535
        %v3736 = vpack.c.b16 %v3552, %v3544
        %v3737 = vpack.c.b16 %v3553, %v3545
        %v3738 = vpack.c.b16 %v3554, %v3546
        %v3739 = vpack.c.b16 %v3555, %v3547
        %v3740 = vpack.c.b16 %v3556, %v3548
        %v3741 = vpack.c.b16 %v3557, %v3549
        %v3742 = vpack.c.b16 %v3558, %v3550
        %v3743 = vpack.c.b16 %v3559, %v3551
        %v3744 = vpack.c.b16 %v3568, %v3560
        %v3745 = vpack.c.b16 %v3569, %v3561
        %v3746 = vpack.c.b16 %v3570, %v3562
        %v3747 = vpack.c.b16 %v3571, %v3563
        %v3748 = vpack.c.b16 %v3572, %v3564
        %v3749 = vpack.c.b16 %v3573, %v3565
        %v3750 = vpack.c.b16 %v3574, %v3566
        %v3751 = vpack.c.b16 %v3575, %v3567
        %v3752 = vpack.c.b16 %v3584, %v3576
        %v3753 = vpack.c.b16 %v3585, %v3577
        %v3754 = vpack.c.b16 %v3586, %v3578
        %v3755 = vpack.c.b16 %v3587, %v3579
        %v3756 = vpack.c.b16 %v3588, %v3580
        %v3757 = vpack.c.b16 %v3589, %v3581
        %v3758 = vpack.c.b16 %v3590, %v3582
        %v3759 = vpack.c.b16 %v3591, %v3583
        %v3760 = vpack.c.b16 %v3600, %v3592
        %v3761 = vpack.c.b16 %v3601, %v3593
        %v3762 = vpack.c.b16 %v3602, %v3594
        %v3763 = vpack.c.b16 %v3603, %v3595
        %v3764 = vpack.c.b16 %v3604, %v3596
        %v3765 = vpack.c.b16 %v3605, %v3597
        %v3766 = vpack.c.b16 %v3606, %v3598
        %v3767 = vpack.c.b16 %v3607, %v3599
        %v3768 = vpack.c.b16 %v3616, %v3608
        %v3769 = vpack.c.b16 %v3617, %v3609
        %v3770 = vpack.c.b16 %v3618, %v3610
        %v3771 = vpack.c.b16 %v3619, %v3611
        %v3772 = vpack.c.b16 %v3620, %v3612
        %v3773 = vpack.c.b16 %v3621, %v3613
        %v3774 = vpack.c.b16 %v3622, %v3614
        %v3775 = vpack.c.b16 %v3623, %v3615
        %v3776 = vpack.c.b16 %v3632, %v3624
        %v3777 = vpack.c.b16 %v3633, %v3625
        %v3778 = vpack.c.b16 %v3634, %v3626
        %v3779 = vpack.c.b16 %v3635, %v3627
        %v3780 = vpack.c.b16 %v3636, %v3628
        %v3781 = vpack.c.b16 %v3637, %v3629
        %v3782 = vpack.c.b16 %v3638, %v3630
        %v3783 = vpack.c.b16 %v3639, %v3631
        %v3784 = vpack.c.b16 %v3648, %v3640
        %v3785 = vpack.c.b16 %v3649, %v3641
        %v3786 = vpack.c.b16 %v3650, %v3642
        %v3787 = vpack.c.b16 %v3651, %v3643
        %v3788 = vpack.c.b16 %v3652, %v3644
        %v3789 = vpack.c.b16 %v3653, %v3645
        %v3790 = vpack.c.b16 %v3654, %v3646
        %v3791 = vpack.c.b16 %v3655, %v3647
        %v3792 = vpack.c.b16 %v3664, %v3656
        %v3793 = vpack.c.b16 %v3665, %v3657
        %v3794 = vpack.c.b16 %v3666, %v3658
        %v3795 = vpack.c.b16 %v3667, %v3659
        %v3796 = vpack.c.b16 %v3668, %v3660
        %v3797 = vpack.c.b16 %v3669, %v3661
        %v3798 = vpack.c.b16 %v3670, %v3662
        %v3799 = vpack.c.b16 %v3671, %v3663
        %3928 = vmatprep.subr.bf16.mxu0 %v3673
        %3929 = vmatpush1.bf16.msra.mxu0 %v3672
        %3930 = vmatprep.subr.bf16.mxu0 %v3681
        %3931 = vmatpush1.bf16.msra.mxu0 %v3680
        %3932 = vmatprep.subr.bf16.mxu0 %v3689
        %3933 = vmatpush1.bf16.msra.mxu0 %v3688
        %3934 = vmatprep.subr.bf16.mxu0 %v3697
        %3935 = vmatpush1.bf16.msra.mxu0 %v3696
        %3936 = vmatprep.subr.bf16.mxu0 %v3705
        %3937 = vmatpush1.bf16.msra.mxu0 %v3704
        %3938 = vmatprep.subr.bf16.mxu0 %v3713
        %3939 = vmatpush1.bf16.msra.mxu0 %v3712
        %3940 = vmatprep.subr.bf16.mxu0 %v3721
        %3941 = vmatpush1.bf16.msra.mxu0 %v3720
        %3942 = vmatprep.subr.bf16.mxu0 %v3729
        %3943 = vmatpush1.bf16.msra.mxu0 %v3728
        %3944 = vmatprep.subr.bf16.mxu0 %v3737
        %3945 = vmatpush1.bf16.msra.mxu0 %v3736
        %3946 = vmatprep.subr.bf16.mxu0 %v3745
        %3947 = vmatpush1.bf16.msra.mxu0 %v3744
        %3948 = vmatprep.subr.bf16.mxu0 %v3753
        %3949 = vmatpush1.bf16.msra.mxu0 %v3752
        %3950 = vmatprep.subr.bf16.mxu0 %v3761
        %3951 = vmatpush1.bf16.msra.mxu0 %v3760
        %3952 = vmatprep.subr.bf16.mxu0 %v3769
        %3953 = vmatpush1.bf16.msra.mxu0 %v3768
        %3954 = vmatprep.subr.bf16.mxu0 %v3777
        %3955 = vmatpush1.bf16.msra.mxu0 %v3776
        %3956 = vmatprep.subr.bf16.mxu0 %v3785
        %3957 = vmatpush1.bf16.msra.mxu0 %v3784
        %3958 = vmatprep.subr.bf16.mxu0 %v3793
        %3959 = vmatpush1.bf16.msra.mxu0 %v3792
        %3960 = vmatprep.mubr.bf16.mxu0 %v3117
        %3961 = vmatmul.mubr.bf16.gmra.mrb[0].mxu0 %v3116
        %v3962 = vpop.f32.mrb[0].mxu0
        %v3963 = vadd.f32 %v3251, %v3962
        %v3964 = vpop.f32.mrb[0].mxu0
        %v3965 = vadd.f32 %v3255, %v3964
        %v3966 = vpop.f32.mrb[0].mxu0
        %v3967 = vadd.f32 %v3251, %v3966
        %v3968 = vpop.f32.mrb[0].mxu0
        %v3969 = vadd.f32 %v3255, %v3968
        %3970 = vdwg.mxu0
        %3971 = vmatprep.subr.bf16.mxu0 %v3675
        %3972 = vmatpush1.bf16.msra.mxu0 %v3674
        %3973 = vmatprep.subr.bf16.mxu0 %v3683
        %3974 = vmatpush1.bf16.msra.mxu0 %v3682
        %3975 = vmatprep.subr.bf16.mxu0 %v3691
        %3976 = vmatpush1.bf16.msra.mxu0 %v3690
        %3977 = vmatprep.subr.bf16.mxu0 %v3699
        %3978 = vmatpush1.bf16.msra.mxu0 %v3698
        %3979 = vmatprep.subr.bf16.mxu0 %v3707
        %3980 = vmatpush1.bf16.msra.mxu0 %v3706
        %3981 = vmatprep.subr.bf16.mxu0 %v3715
        %3982 = vmatpush1.bf16.msra.mxu0 %v3714
        %3983 = vmatprep.subr.bf16.mxu0 %v3723
        %3984 = vmatpush1.bf16.msra.mxu0 %v3722
        %3985 = vmatprep.subr.bf16.mxu0 %v3731
        %3986 = vmatpush1.bf16.msra.mxu0 %v3730
        %3987 = vmatprep.subr.bf16.mxu0 %v3739
        %3988 = vmatpush1.bf16.msra.mxu0 %v3738
        %3989 = vmatprep.subr.bf16.mxu0 %v3747
        %3990 = vmatpush1.bf16.msra.mxu0 %v3746
        %3991 = vmatprep.subr.bf16.mxu0 %v3755
        %3992 = vmatpush1.bf16.msra.mxu0 %v3754
        %3993 = vmatprep.subr.bf16.mxu0 %v3763
        %3994 = vmatpush1.bf16.msra.mxu0 %v3762
        %3995 = vmatprep.subr.bf16.mxu0 %v3771
        %3996 = vmatpush1.bf16.msra.mxu0 %v3770
        %3997 = vmatprep.subr.bf16.mxu0 %v3779
        %3998 = vmatpush1.bf16.msra.mxu0 %v3778
        %3999 = vmatprep.subr.bf16.mxu0 %v3787
        %4000 = vmatpush1.bf16.msra.mxu0 %v3786
        %4001 = vmatprep.subr.bf16.mxu0 %v3795
        %4002 = vmatpush1.bf16.msra.mxu0 %v3794
        %4003 = vmatprep.mubr.bf16.mxu0 %v3117
        %4004 = vmatmul.mubr.bf16.gmra.mrb[0].mxu0 %v3116
        %v4005 = vpop.f32.mrb[0].mxu0
        %v4006 = vadd.f32 %v3259, %v4005
        %v4007 = vpop.f32.mrb[0].mxu0
        %v4008 = vadd.f32 %v3263, %v4007
        %v4009 = vpop.f32.mrb[0].mxu0
        %v4010 = vadd.f32 %v3259, %v4009
        %v4011 = vpop.f32.mrb[0].mxu0
        %v4012 = vadd.f32 %v3263, %v4011
        %4013 = vdwg.mxu0
        %4014 = vmatprep.subr.bf16.mxu0 %v3677
        %4015 = vmatpush1.bf16.msra.mxu0 %v3676
        %4016 = vmatprep.subr.bf16.mxu0 %v3685
        %4017 = vmatpush1.bf16.msra.mxu0 %v3684
        %4018 = vmatprep.subr.bf16.mxu0 %v3693
        %4019 = vmatpush1.bf16.msra.mxu0 %v3692
        %4020 = vmatprep.subr.bf16.mxu0 %v3701
        %4021 = vmatpush1.bf16.msra.mxu0 %v3700
        %4022 = vmatprep.subr.bf16.mxu0 %v3709
        %4023 = vmatpush1.bf16.msra.mxu0 %v3708
        %4024 = vmatprep.subr.bf16.mxu0 %v3717
        %4025 = vmatpush1.bf16.msra.mxu0 %v3716
        %4026 = vmatprep.subr.bf16.mxu0 %v3725
        %4027 = vmatpush1.bf16.msra.mxu0 %v3724
        %4028 = vmatprep.subr.bf16.mxu0 %v3733
        %4029 = vmatpush1.bf16.msra.mxu0 %v3732
        %4030 = vmatprep.subr.bf16.mxu0 %v3741
        %4031 = vmatpush1.bf16.msra.mxu0 %v3740
        %4032 = vmatprep.subr.bf16.mxu0 %v3749
        %4033 = vmatpush1.bf16.msra.mxu0 %v3748
        %4034 = vmatprep.subr.bf16.mxu0 %v3757
        %4035 = vmatpush1.bf16.msra.mxu0 %v3756
        %4036 = vmatprep.subr.bf16.mxu0 %v3765
        %4037 = vmatpush1.bf16.msra.mxu0 %v3764
        %4038 = vmatprep.subr.bf16.mxu0 %v3773
        %4039 = vmatpush1.bf16.msra.mxu0 %v3772
        %4040 = vmatprep.subr.bf16.mxu0 %v3781
        %4041 = vmatpush1.bf16.msra.mxu0 %v3780
        %4042 = vmatprep.subr.bf16.mxu0 %v3789
        %4043 = vmatpush1.bf16.msra.mxu0 %v3788
        %4044 = vmatprep.subr.bf16.mxu0 %v3797
        %4045 = vmatpush1.bf16.msra.mxu0 %v3796
        %4046 = vmatprep.mubr.bf16.mxu0 %v3117
        %4047 = vmatmul.mubr.bf16.gmra.mrb[0].mxu0 %v3116
        %v4048 = vpop.f32.mrb[0].mxu0
        %v4049 = vadd.f32 %v3267, %v4048
        %v4050 = vpop.f32.mrb[0].mxu0
        %v4051 = vadd.f32 %v3271, %v4050
        %v4052 = vpop.f32.mrb[0].mxu0
        %v4053 = vadd.f32 %v3267, %v4052
        %v4054 = vpop.f32.mrb[0].mxu0
        %v4055 = vadd.f32 %v3271, %v4054
        %4056 = vdwg.mxu0
        %4057 = vmatprep.subr.bf16.mxu0 %v3679
        %4058 = vmatpush1.bf16.msra.mxu0 %v3678
        %4059 = vmatprep.subr.bf16.mxu0 %v3687
        %4060 = vmatpush1.bf16.msra.mxu0 %v3686
        %4061 = vmatprep.subr.bf16.mxu0 %v3695
        %4062 = vmatpush1.bf16.msra.mxu0 %v3694
        %4063 = vmatprep.subr.bf16.mxu0 %v3703
        %4064 = vmatpush1.bf16.msra.mxu0 %v3702
        %4065 = vmatprep.subr.bf16.mxu0 %v3711
        %4066 = vmatpush1.bf16.msra.mxu0 %v3710
        %4067 = vmatprep.subr.bf16.mxu0 %v3719
        %4068 = vmatpush1.bf16.msra.mxu0 %v3718
        %4069 = vmatprep.subr.bf16.mxu0 %v3727
        %4070 = vmatpush1.bf16.msra.mxu0 %v3726
        %4071 = vmatprep.subr.bf16.mxu0 %v3735
        %4072 = vmatpush1.bf16.msra.mxu0 %v3734
        %4073 = vmatprep.subr.bf16.mxu0 %v3743
        %4074 = vmatpush1.bf16.msra.mxu0 %v3742
        %4075 = vmatprep.subr.bf16.mxu0 %v3751
        %4076 = vmatpush1.bf16.msra.mxu0 %v3750
        %4077 = vmatprep.subr.bf16.mxu0 %v3759
        %4078 = vmatpush1.bf16.msra.mxu0 %v3758
        %4079 = vmatprep.subr.bf16.mxu0 %v3767
        %4080 = vmatpush1.bf16.msra.mxu0 %v3766
        %4081 = vmatprep.subr.bf16.mxu0 %v3775
        %4082 = vmatpush1.bf16.msra.mxu0 %v3774
        %4083 = vmatprep.subr.bf16.mxu0 %v3783
        %4084 = vmatpush1.bf16.msra.mxu0 %v3782
        %4085 = vmatprep.subr.bf16.mxu0 %v3791
        %4086 = vmatpush1.bf16.msra.mxu0 %v3790
        %4087 = vmatprep.subr.bf16.mxu0 %v3799
        %4088 = vmatpush1.bf16.msra.mxu0 %v3798
        %4089 = vmatprep.mubr.bf16.mxu0 %v3117
        %4090 = vmatmul.mubr.bf16.gmra.mrb[0].mxu0 %v3116
        %v4091 = vpop.f32.mrb[0].mxu0
        %v4092 = vadd.f32 %v3275, %v4091
        %v4093 = vpop.f32.mrb[0].mxu0
        %v4094 = vadd.f32 %v3279, %v4093
        %v4095 = vpop.f32.mrb[0].mxu0
        %v4096 = vadd.f32 %v3275, %v4095
        %v4097 = vpop.f32.mrb[0].mxu0
        %v4098 = vadd.f32 %v3279, %v4097
        %4099 = vdwg.mxu0
        %v4100 = vmul.f32 %v3963, 0.5
        %v4101 = vmul.f32 %v3965, 0.5
        %v4102 = vmul.f32 %v4006, 0.5
        %v4103 = vmul.f32 %v4008, 0.5
        %v4104 = vmul.f32 %v4049, 0.5
        %v4105 = vmul.f32 %v4051, 0.5
        %v4106 = vmul.f32 %v4092, 0.5
        %v4107 = vmul.f32 %v4094, 0.5
        %v4108 = vmul.f32 %v3967, 0.5
        %v4109 = vmul.f32 %v3969, 0.5
        %v4110 = vmul.f32 %v4010, 0.5
        %v4111 = vmul.f32 %v4012, 0.5
        %v4112 = vmul.f32 %v4053, 0.5
        %v4113 = vmul.f32 %v4055, 0.5
        %v4114 = vmul.f32 %v4096, 0.5
        %v4115 = vmul.f32 %v4098, 0.5
        %v4116 = vmul.f32 %v3963, %v3963
        %v4117 = vmul.f32 %v3965, %v3965
        %v4118 = vmul.f32 %v4006, %v4006
        %v4119 = vmul.f32 %v4008, %v4008
        %v4120 = vmul.f32 %v4049, %v4049
        %v4121 = vmul.f32 %v4051, %v4051
        %v4122 = vmul.f32 %v4092, %v4092
        %v4123 = vmul.f32 %v4094, %v4094
        %v4124 = vmul.f32 %v3967, %v3967
        %v4125 = vmul.f32 %v3969, %v3969
        %v4126 = vmul.f32 %v4010, %v4010
        %v4127 = vmul.f32 %v4012, %v4012
        %v4128 = vmul.f32 %v4053, %v4053
        %v4129 = vmul.f32 %v4055, %v4055
        %v4130 = vmul.f32 %v4096, %v4096
        %v4131 = vmul.f32 %v4098, %v4098
        %v4132 = vmul.f32 %v3963, %v4116
        %v4133 = vmul.f32 %v3965, %v4117
        %v4134 = vmul.f32 %v4006, %v4118
        %v4135 = vmul.f32 %v4008, %v4119
        %v4136 = vmul.f32 %v4049, %v4120
        %v4137 = vmul.f32 %v4051, %v4121
        %v4138 = vmul.f32 %v4092, %v4122
        %v4139 = vmul.f32 %v4094, %v4123
        %v4140 = vmul.f32 %v3967, %v4124
        %v4141 = vmul.f32 %v3969, %v4125
        %v4142 = vmul.f32 %v4010, %v4126
        %v4143 = vmul.f32 %v4012, %v4127
        %v4144 = vmul.f32 %v4053, %v4128
        %v4145 = vmul.f32 %v4055, %v4129
        %v4146 = vmul.f32 %v4096, %v4130
        %v4147 = vmul.f32 %v4098, %v4131
        %v4148 = vmul.f32 %v4132, 0.44715
        %v4149 = vmul.f32 %v4133, 0.44715
        %v4150 = vmul.f32 %v4134, 0.44715
        %v4151 = vmul.f32 %v4135, 0.44715
        %v4152 = vmul.f32 %v4136, 0.44715
        %v4153 = vmul.f32 %v4137, 0.44715
        %v4154 = vmul.f32 %v4138, 0.44715
        %v4155 = vmul.f32 %v4139, 0.44715
        %v4156 = vmul.f32 %v4140, 0.44715
        %v4157 = vmul.f32 %v4141, 0.44715
        %v4158 = vmul.f32 %v4142, 0.44715
        %v4159 = vmul.f32 %v4143, 0.44715
        %v4160 = vmul.f32 %v4144, 0.44715
        %v4161 = vmul.f32 %v4145, 0.44715
        %v4162 = vmul.f32 %v4146, 0.44715
        %v4163 = vmul.f32 %v4147, 0.44715
        %v4164 = vadd.f32 %v3963, %v4148
        %v4165 = vadd.f32 %v3965, %v4149
        %v4166 = vadd.f32 %v4006, %v4150
        %v4167 = vadd.f32 %v4008, %v4151
        %v4168 = vadd.f32 %v4049, %v4152
        %v4169 = vadd.f32 %v4051, %v4153
        %v4170 = vadd.f32 %v4092, %v4154
        %v4171 = vadd.f32 %v4094, %v4155
        %v4172 = vadd.f32 %v3967, %v4156
        %v4173 = vadd.f32 %v3969, %v4157
        %v4174 = vadd.f32 %v4010, %v4158
        %v4175 = vadd.f32 %v4012, %v4159
        %v4176 = vadd.f32 %v4053, %v4160
        %v4177 = vadd.f32 %v4055, %v4161
        %v4178 = vadd.f32 %v4096, %v4162
        %v4179 = vadd.f32 %v4098, %v4163
        %v4180 = vmul.f32 %v4164, 0.7978846
        %v4181 = vmul.f32 %v4165, 0.7978846
        %v4182 = vmul.f32 %v4166, 0.7978846
        %v4183 = vmul.f32 %v4167, 0.7978846
        %v4184 = vmul.f32 %v4168, 0.7978846
        %v4185 = vmul.f32 %v4169, 0.7978846
        %v4186 = vmul.f32 %v4170, 0.7978846
        %v4187 = vmul.f32 %v4171, 0.7978846
        %v4188 = vmul.f32 %v4172, 0.7978846
        %v4189 = vmul.f32 %v4173, 0.7978846
        %v4190 = vmul.f32 %v4174, 0.7978846
        %v4191 = vmul.f32 %v4175, 0.7978846
        %v4192 = vmul.f32 %v4176, 0.7978846
        %v4193 = vmul.f32 %v4177, 0.7978846
        %v4194 = vmul.f32 %v4178, 0.7978846
        %v4195 = vmul.f32 %v4179, 0.7978846
        %v4196 = vtanh.pop %v4180
        %v4197 = vtanh.pop %v4181
        %v4198 = vtanh.pop %v4182
        %v4199 = vtanh.pop %v4183
        %v4200 = vtanh.pop %v4184
        %v4201 = vtanh.pop %v4185
        %v4202 = vtanh.pop %v4186
        %v4203 = vtanh.pop %v4187
        %v4204 = vtanh.pop %v4188
        %v4205 = vtanh.pop %v4189
        %v4206 = vtanh.pop %v4190
        %v4207 = vtanh.pop %v4191
        %v4208 = vtanh.pop %v4192
        %v4209 = vtanh.pop %v4193
        %v4210 = vtanh.pop %v4194
        %v4211 = vtanh.pop %v4195
        %v4212 = vadd.f32 %v4196, 1.0
        %v4213 = vadd.f32 %v4197, 1.0
        %v4214 = vadd.f32 %v4198, 1.0
        %v4215 = vadd.f32 %v4199, 1.0
        %v4216 = vadd.f32 %v4200, 1.0
        %v4217 = vadd.f32 %v4201, 1.0
        %v4218 = vadd.f32 %v4202, 1.0
        %v4219 = vadd.f32 %v4203, 1.0
        %v4220 = vadd.f32 %v4204, 1.0
        %v4221 = vadd.f32 %v4205, 1.0
        %v4222 = vadd.f32 %v4206, 1.0
        %v4223 = vadd.f32 %v4207, 1.0
        %v4224 = vadd.f32 %v4208, 1.0
        %v4225 = vadd.f32 %v4209, 1.0
        %v4226 = vadd.f32 %v4210, 1.0
        %v4227 = vadd.f32 %v4211, 1.0
        %v4228 = vmul.f32 %v4100, %v4212
        %v4229 = vmul.f32 %v4101, %v4213
        %v4230 = vmul.f32 %v4102, %v4214
        %v4231 = vmul.f32 %v4103, %v4215
        %v4232 = vmul.f32 %v4104, %v4216
        %v4233 = vmul.f32 %v4105, %v4217
        %v4234 = vmul.f32 %v4106, %v4218
        %v4235 = vmul.f32 %v4107, %v4219
        %v4236 = vmul.f32 %v4108, %v4220
        %v4237 = vmul.f32 %v4109, %v4221
        %v4238 = vmul.f32 %v4110, %v4222
        %v4239 = vmul.f32 %v4111, %v4223
        %v4240 = vmul.f32 %v4112, %v4224
        %v4241 = vmul.f32 %v4113, %v4225
        %v4242 = vmul.f32 %v4114, %v4226
        %v4243 = vmul.f32 %v4115, %v4227
        %v4244 = vpack.c.bf16 %v4236, %v4228
        %v4245 = vpack.c.bf16 %v4237, %v4229
        %v4246 = vpack.c.bf16 %v4238, %v4230
        %v4247 = vpack.c.bf16 %v4239, %v4231
        %v4248 = vpack.c.bf16 %v4240, %v4232
        %v4249 = vpack.c.bf16 %v4241, %v4233
        %v4250 = vpack.c.bf16 %v4242, %v4234
        %v4251 = vpack.c.bf16 %v4243, %v4235
        %v4252 = vld [vmem:[%s634] sm:$0xff]
        %v4253 = vld [vmem:[%s634 + $0x8] sm:$0xff]
        %v4254 = vld [vmem:[%s634 + $0x10] sm:$0xff]
        %v4255 = vld [vmem:[%s634 + $0x18] sm:$0xff]
        %v4256 = vld [vmem:[%s634 + $0x20] sm:$0xff]
        %v4257 = vld [vmem:[%s634 + $0x28] sm:$0xff]
        %v4258 = vld [vmem:[%s634 + $0x30] sm:$0xff]
        %v4259 = vld [vmem:[%s634 + $0x38] sm:$0xff]
        %v4260 = vld [vmem:[%s634 + $0x40] sm:$0xff]
        %v4261 = vld [vmem:[%s634 + $0x48] sm:$0xff]
        %v4262 = vld [vmem:[%s634 + $0x50] sm:$0xff]
        %v4263 = vld [vmem:[%s634 + $0x58] sm:$0xff]
        %v4264 = vld [vmem:[%s634 + $0x60] sm:$0xff]
        %v4265 = vld [vmem:[%s634 + $0x68] sm:$0xff]
        %v4266 = vld [vmem:[%s634 + $0x70] sm:$0xff]
        %v4267 = vld [vmem:[%s634 + $0x78] sm:$0xff]
        %v4268 = vld [vmem:[%s634 + $0x80] sm:$0xff]
        %v4269 = vld [vmem:[%s634 + $0x88] sm:$0xff]
        %v4270 = vld [vmem:[%s634 + $0x90] sm:$0xff]
        %v4271 = vld [vmem:[%s634 + $0x98] sm:$0xff]
        %v4272 = vld [vmem:[%s634 + $0xa0] sm:$0xff]
        %v4273 = vld [vmem:[%s634 + $0xa8] sm:$0xff]
        %v4274 = vld [vmem:[%s634 + $0xb0] sm:$0xff]
        %v4275 = vld [vmem:[%s634 + $0xb8] sm:$0xff]
        %v4276 = vld [vmem:[%s634 + $0xc0] sm:$0xff]
        %v4277 = vld [vmem:[%s634 + $0xc8] sm:$0xff]
        %v4278 = vld [vmem:[%s634 + $0xd0] sm:$0xff]
        %v4279 = vld [vmem:[%s634 + $0xd8] sm:$0xff]
        %v4280 = vld [vmem:[%s634 + $0xe0] sm:$0xff]
        %v4281 = vld [vmem:[%s634 + $0xe8] sm:$0xff]
        %v4282 = vld [vmem:[%s634 + $0xf0] sm:$0xff]
        %v4283 = vld [vmem:[%s634 + $0xf8] sm:$0xff]
        %v4284 = vld [vmem:[%s634 + $0x100] sm:$0xff]
        %v4285 = vld [vmem:[%s634 + $0x108] sm:$0xff]
        %v4286 = vld [vmem:[%s634 + $0x110] sm:$0xff]
        %v4287 = vld [vmem:[%s634 + $0x118] sm:$0xff]
        %v4288 = vld [vmem:[%s634 + $0x120] sm:$0xff]
        %v4289 = vld [vmem:[%s634 + $0x128] sm:$0xff]
        %v4290 = vld [vmem:[%s634 + $0x130] sm:$0xff]
        %v4291 = vld [vmem:[%s634 + $0x138] sm:$0xff]
        %v4292 = vld [vmem:[%s634 + $0x140] sm:$0xff]
        %v4293 = vld [vmem:[%s634 + $0x148] sm:$0xff]
        %v4294 = vld [vmem:[%s634 + $0x150] sm:$0xff]
        %v4295 = vld [vmem:[%s634 + $0x158] sm:$0xff]
        %v4296 = vld [vmem:[%s634 + $0x160] sm:$0xff]
        %v4297 = vld [vmem:[%s634 + $0x168] sm:$0xff]
        %v4298 = vld [vmem:[%s634 + $0x170] sm:$0xff]
        %v4299 = vld [vmem:[%s634 + $0x178] sm:$0xff]
        %v4300 = vld [vmem:[%s634 + $0x180] sm:$0xff]
        %v4301 = vld [vmem:[%s634 + $0x188] sm:$0xff]
        %v4302 = vld [vmem:[%s634 + $0x190] sm:$0xff]
        %v4303 = vld [vmem:[%s634 + $0x198] sm:$0xff]
        %v4304 = vld [vmem:[%s634 + $0x1a0] sm:$0xff]
        %v4305 = vld [vmem:[%s634 + $0x1a8] sm:$0xff]
        %v4306 = vld [vmem:[%s634 + $0x1b0] sm:$0xff]
        %v4307 = vld [vmem:[%s634 + $0x1b8] sm:$0xff]
        %v4308 = vld [vmem:[%s634 + $0x1c0] sm:$0xff]
        %v4309 = vld [vmem:[%s634 + $0x1c8] sm:$0xff]
        %v4310 = vld [vmem:[%s634 + $0x1d0] sm:$0xff]
        %v4311 = vld [vmem:[%s634 + $0x1d8] sm:$0xff]
        %v4312 = vld [vmem:[%s634 + $0x1e0] sm:$0xff]
        %v4313 = vld [vmem:[%s634 + $0x1e8] sm:$0xff]
        %v4314 = vld [vmem:[%s634 + $0x1f0] sm:$0xff]
        %v4315 = vld [vmem:[%s634 + $0x1f8] sm:$0xff]
        %v4316 = vld [vmem:[%s634 + $0x200] sm:$0xff]
        %v4317 = vld [vmem:[%s634 + $0x208] sm:$0xff]
        %v4318 = vld [vmem:[%s634 + $0x210] sm:$0xff]
        %v4319 = vld [vmem:[%s634 + $0x218] sm:$0xff]
        %v4320 = vld [vmem:[%s634 + $0x220] sm:$0xff]
        %v4321 = vld [vmem:[%s634 + $0x228] sm:$0xff]
        %v4322 = vld [vmem:[%s634 + $0x230] sm:$0xff]
        %v4323 = vld [vmem:[%s634 + $0x238] sm:$0xff]
        %v4324 = vld [vmem:[%s634 + $0x240] sm:$0xff]
        %v4325 = vld [vmem:[%s634 + $0x248] sm:$0xff]
        %v4326 = vld [vmem:[%s634 + $0x250] sm:$0xff]
        %v4327 = vld [vmem:[%s634 + $0x258] sm:$0xff]
        %v4328 = vld [vmem:[%s634 + $0x260] sm:$0xff]
        %v4329 = vld [vmem:[%s634 + $0x268] sm:$0xff]
        %v4330 = vld [vmem:[%s634 + $0x270] sm:$0xff]
        %v4331 = vld [vmem:[%s634 + $0x278] sm:$0xff]
        %v4332 = vld [vmem:[%s634 + $0x280] sm:$0xff]
        %v4333 = vld [vmem:[%s634 + $0x288] sm:$0xff]
        %v4334 = vld [vmem:[%s634 + $0x290] sm:$0xff]
        %v4335 = vld [vmem:[%s634 + $0x298] sm:$0xff]
        %v4336 = vld [vmem:[%s634 + $0x2a0] sm:$0xff]
        %v4337 = vld [vmem:[%s634 + $0x2a8] sm:$0xff]
        %v4338 = vld [vmem:[%s634 + $0x2b0] sm:$0xff]
        %v4339 = vld [vmem:[%s634 + $0x2b8] sm:$0xff]
        %v4340 = vld [vmem:[%s634 + $0x2c0] sm:$0xff]
        %v4341 = vld [vmem:[%s634 + $0x2c8] sm:$0xff]
        %v4342 = vld [vmem:[%s634 + $0x2d0] sm:$0xff]
        %v4343 = vld [vmem:[%s634 + $0x2d8] sm:$0xff]
        %v4344 = vld [vmem:[%s634 + $0x2e0] sm:$0xff]
        %v4345 = vld [vmem:[%s634 + $0x2e8] sm:$0xff]
        %v4346 = vld [vmem:[%s634 + $0x2f0] sm:$0xff]
        %v4347 = vld [vmem:[%s634 + $0x2f8] sm:$0xff]
        %v4348 = vld [vmem:[%s634 + $0x300] sm:$0xff]
        %v4349 = vld [vmem:[%s634 + $0x308] sm:$0xff]
        %v4350 = vld [vmem:[%s634 + $0x310] sm:$0xff]
        %v4351 = vld [vmem:[%s634 + $0x318] sm:$0xff]
        %v4352 = vld [vmem:[%s634 + $0x320] sm:$0xff]
        %v4353 = vld [vmem:[%s634 + $0x328] sm:$0xff]
        %v4354 = vld [vmem:[%s634 + $0x330] sm:$0xff]
        %v4355 = vld [vmem:[%s634 + $0x338] sm:$0xff]
        %v4356 = vld [vmem:[%s634 + $0x340] sm:$0xff]
        %v4357 = vld [vmem:[%s634 + $0x348] sm:$0xff]
        %v4358 = vld [vmem:[%s634 + $0x350] sm:$0xff]
        %v4359 = vld [vmem:[%s634 + $0x358] sm:$0xff]
        %v4360 = vld [vmem:[%s634 + $0x360] sm:$0xff]
        %v4361 = vld [vmem:[%s634 + $0x368] sm:$0xff]
        %v4362 = vld [vmem:[%s634 + $0x370] sm:$0xff]
        %v4363 = vld [vmem:[%s634 + $0x378] sm:$0xff]
        %v4364 = vld [vmem:[%s634 + $0x380] sm:$0xff]
        %v4365 = vld [vmem:[%s634 + $0x388] sm:$0xff]
        %v4366 = vld [vmem:[%s634 + $0x390] sm:$0xff]
        %v4367 = vld [vmem:[%s634 + $0x398] sm:$0xff]
        %v4368 = vld [vmem:[%s634 + $0x3a0] sm:$0xff]
        %v4369 = vld [vmem:[%s634 + $0x3a8] sm:$0xff]
        %v4370 = vld [vmem:[%s634 + $0x3b0] sm:$0xff]
        %v4371 = vld [vmem:[%s634 + $0x3b8] sm:$0xff]
        %v4372 = vld [vmem:[%s634 + $0x3c0] sm:$0xff]
        %v4373 = vld [vmem:[%s634 + $0x3c8] sm:$0xff]
        %v4374 = vld [vmem:[%s634 + $0x3d0] sm:$0xff]
        %v4375 = vld [vmem:[%s634 + $0x3d8] sm:$0xff]
        %v4376 = vld [vmem:[%s634 + $0x3e0] sm:$0xff]
        %v4377 = vld [vmem:[%s634 + $0x3e8] sm:$0xff]
        %v4378 = vld [vmem:[%s634 + $0x3f0] sm:$0xff]
        %v4379 = vld [vmem:[%s634 + $0x3f8] sm:$0xff]
        %v4380 = vld [vmem:[%s774] sm:$0x3]
        %v4382 = vlaneseq
        %v4383 = vshrl.u32 %v4382, 7
        %v4384 = vsub.s32 0, %v4383
        %v4385 = vrot.slane %v4380, %v4384
        %v4386 = vlaneseq
        %v4387 = vshrl.u32 %v4386, 7
        %v4388 = vsub.s32 1, %v4387
        %v4389 = vrot.slane %v4380, %v4388
        %v4520 = vunpack.c.l.b16 %v4252
        %v4521 = vunpack.c.h.b16 %v4252
        %v4522 = vunpack.c.l.b16 %v4253
        %v4523 = vunpack.c.h.b16 %v4253
        %v4524 = vunpack.c.l.b16 %v4254
        %v4525 = vunpack.c.h.b16 %v4254
        %v4526 = vunpack.c.l.b16 %v4255
        %v4527 = vunpack.c.h.b16 %v4255
        %v4528 = vunpack.c.l.b16 %v4256
        %v4529 = vunpack.c.h.b16 %v4256
        %v4530 = vunpack.c.l.b16 %v4257
        %v4531 = vunpack.c.h.b16 %v4257
        %v4532 = vunpack.c.l.b16 %v4258
        %v4533 = vunpack.c.h.b16 %v4258
        %v4534 = vunpack.c.l.b16 %v4259
        %v4535 = vunpack.c.h.b16 %v4259
        %v4536 = vunpack.c.l.b16 %v4260
        %v4537 = vunpack.c.h.b16 %v4260
        %v4538 = vunpack.c.l.b16 %v4261
        %v4539 = vunpack.c.h.b16 %v4261
        %v4540 = vunpack.c.l.b16 %v4262
        %v4541 = vunpack.c.h.b16 %v4262
        %v4542 = vunpack.c.l.b16 %v4263
        %v4543 = vunpack.c.h.b16 %v4263
        %v4544 = vunpack.c.l.b16 %v4264
        %v4545 = vunpack.c.h.b16 %v4264
        %v4546 = vunpack.c.l.b16 %v4265
        %v4547 = vunpack.c.h.b16 %v4265
        %v4548 = vunpack.c.l.b16 %v4266
        %v4549 = vunpack.c.h.b16 %v4266
        %v4550 = vunpack.c.l.b16 %v4267
        %v4551 = vunpack.c.h.b16 %v4267
        %v4552 = vunpack.c.l.b16 %v4268
        %v4553 = vunpack.c.h.b16 %v4268
        %v4554 = vunpack.c.l.b16 %v4269
        %v4555 = vunpack.c.h.b16 %v4269
        %v4556 = vunpack.c.l.b16 %v4270
        %v4557 = vunpack.c.h.b16 %v4270
        %v4558 = vunpack.c.l.b16 %v4271
        %v4559 = vunpack.c.h.b16 %v4271
        %v4560 = vunpack.c.l.b16 %v4272
        %v4561 = vunpack.c.h.b16 %v4272
        %v4562 = vunpack.c.l.b16 %v4273
        %v4563 = vunpack.c.h.b16 %v4273
        %v4564 = vunpack.c.l.b16 %v4274
        %v4565 = vunpack.c.h.b16 %v4274
        %v4566 = vunpack.c.l.b16 %v4275
        %v4567 = vunpack.c.h.b16 %v4275
        %v4568 = vunpack.c.l.b16 %v4276
        %v4569 = vunpack.c.h.b16 %v4276
        %v4570 = vunpack.c.l.b16 %v4277
        %v4571 = vunpack.c.h.b16 %v4277
        %v4572 = vunpack.c.l.b16 %v4278
        %v4573 = vunpack.c.h.b16 %v4278
        %v4574 = vunpack.c.l.b16 %v4279
        %v4575 = vunpack.c.h.b16 %v4279
        %v4576 = vunpack.c.l.b16 %v4280
        %v4577 = vunpack.c.h.b16 %v4280
        %v4578 = vunpack.c.l.b16 %v4281
        %v4579 = vunpack.c.h.b16 %v4281
        %v4580 = vunpack.c.l.b16 %v4282
        %v4581 = vunpack.c.h.b16 %v4282
        %v4582 = vunpack.c.l.b16 %v4283
        %v4583 = vunpack.c.h.b16 %v4283
        %v4584 = vunpack.c.l.b16 %v4284
        %v4585 = vunpack.c.h.b16 %v4284
        %v4586 = vunpack.c.l.b16 %v4285
        %v4587 = vunpack.c.h.b16 %v4285
        %v4588 = vunpack.c.l.b16 %v4286
        %v4589 = vunpack.c.h.b16 %v4286
        %v4590 = vunpack.c.l.b16 %v4287
        %v4591 = vunpack.c.h.b16 %v4287
        %v4592 = vunpack.c.l.b16 %v4288
        %v4593 = vunpack.c.h.b16 %v4288
        %v4594 = vunpack.c.l.b16 %v4289
        %v4595 = vunpack.c.h.b16 %v4289
        %v4596 = vunpack.c.l.b16 %v4290
        %v4597 = vunpack.c.h.b16 %v4290
        %v4598 = vunpack.c.l.b16 %v4291
        %v4599 = vunpack.c.h.b16 %v4291
        %v4600 = vunpack.c.l.b16 %v4292
        %v4601 = vunpack.c.h.b16 %v4292
        %v4602 = vunpack.c.l.b16 %v4293
        %v4603 = vunpack.c.h.b16 %v4293
        %v4604 = vunpack.c.l.b16 %v4294
        %v4605 = vunpack.c.h.b16 %v4294
        %v4606 = vunpack.c.l.b16 %v4295
        %v4607 = vunpack.c.h.b16 %v4295
        %v4608 = vunpack.c.l.b16 %v4296
        %v4609 = vunpack.c.h.b16 %v4296
        %v4610 = vunpack.c.l.b16 %v4297
        %v4611 = vunpack.c.h.b16 %v4297
        %v4612 = vunpack.c.l.b16 %v4298
        %v4613 = vunpack.c.h.b16 %v4298
        %v4614 = vunpack.c.l.b16 %v4299
        %v4615 = vunpack.c.h.b16 %v4299
        %v4616 = vunpack.c.l.b16 %v4300
        %v4617 = vunpack.c.h.b16 %v4300
        %v4618 = vunpack.c.l.b16 %v4301
        %v4619 = vunpack.c.h.b16 %v4301
        %v4620 = vunpack.c.l.b16 %v4302
        %v4621 = vunpack.c.h.b16 %v4302
        %v4622 = vunpack.c.l.b16 %v4303
        %v4623 = vunpack.c.h.b16 %v4303
        %v4624 = vunpack.c.l.b16 %v4304
        %v4625 = vunpack.c.h.b16 %v4304
        %v4626 = vunpack.c.l.b16 %v4305
        %v4627 = vunpack.c.h.b16 %v4305
        %v4628 = vunpack.c.l.b16 %v4306
        %v4629 = vunpack.c.h.b16 %v4306
        %v4630 = vunpack.c.l.b16 %v4307
        %v4631 = vunpack.c.h.b16 %v4307
        %v4632 = vunpack.c.l.b16 %v4308
        %v4633 = vunpack.c.h.b16 %v4308
        %v4634 = vunpack.c.l.b16 %v4309
        %v4635 = vunpack.c.h.b16 %v4309
        %v4636 = vunpack.c.l.b16 %v4310
        %v4637 = vunpack.c.h.b16 %v4310
        %v4638 = vunpack.c.l.b16 %v4311
        %v4639 = vunpack.c.h.b16 %v4311
        %v4640 = vunpack.c.l.b16 %v4312
        %v4641 = vunpack.c.h.b16 %v4312
        %v4642 = vunpack.c.l.b16 %v4313
        %v4643 = vunpack.c.h.b16 %v4313
        %v4644 = vunpack.c.l.b16 %v4314
        %v4645 = vunpack.c.h.b16 %v4314
        %v4646 = vunpack.c.l.b16 %v4315
        %v4647 = vunpack.c.h.b16 %v4315
        %v4648 = vunpack.c.l.b16 %v4316
        %v4649 = vunpack.c.h.b16 %v4316
        %v4650 = vunpack.c.l.b16 %v4317
        %v4651 = vunpack.c.h.b16 %v4317
        %v4652 = vunpack.c.l.b16 %v4318
        %v4653 = vunpack.c.h.b16 %v4318
        %v4654 = vunpack.c.l.b16 %v4319
        %v4655 = vunpack.c.h.b16 %v4319
        %v4656 = vunpack.c.l.b16 %v4320
        %v4657 = vunpack.c.h.b16 %v4320
        %v4658 = vunpack.c.l.b16 %v4321
        %v4659 = vunpack.c.h.b16 %v4321
        %v4660 = vunpack.c.l.b16 %v4322
        %v4661 = vunpack.c.h.b16 %v4322
        %v4662 = vunpack.c.l.b16 %v4323
        %v4663 = vunpack.c.h.b16 %v4323
        %v4664 = vunpack.c.l.b16 %v4324
        %v4665 = vunpack.c.h.b16 %v4324
        %v4666 = vunpack.c.l.b16 %v4325
        %v4667 = vunpack.c.h.b16 %v4325
        %v4668 = vunpack.c.l.b16 %v4326
        %v4669 = vunpack.c.h.b16 %v4326
        %v4670 = vunpack.c.l.b16 %v4327
        %v4671 = vunpack.c.h.b16 %v4327
        %v4672 = vunpack.c.l.b16 %v4328
        %v4673 = vunpack.c.h.b16 %v4328
        %v4674 = vunpack.c.l.b16 %v4329
        %v4675 = vunpack.c.h.b16 %v4329
        %v4676 = vunpack.c.l.b16 %v4330
        %v4677 = vunpack.c.h.b16 %v4330
        %v4678 = vunpack.c.l.b16 %v4331
        %v4679 = vunpack.c.h.b16 %v4331
        %v4680 = vunpack.c.l.b16 %v4332
        %v4681 = vunpack.c.h.b16 %v4332
        %v4682 = vunpack.c.l.b16 %v4333
        %v4683 = vunpack.c.h.b16 %v4333
        %v4684 = vunpack.c.l.b16 %v4334
        %v4685 = vunpack.c.h.b16 %v4334
        %v4686 = vunpack.c.l.b16 %v4335
        %v4687 = vunpack.c.h.b16 %v4335
        %v4688 = vunpack.c.l.b16 %v4336
        %v4689 = vunpack.c.h.b16 %v4336
        %v4690 = vunpack.c.l.b16 %v4337
        %v4691 = vunpack.c.h.b16 %v4337
        %v4692 = vunpack.c.l.b16 %v4338
        %v4693 = vunpack.c.h.b16 %v4338
        %v4694 = vunpack.c.l.b16 %v4339
        %v4695 = vunpack.c.h.b16 %v4339
        %v4696 = vunpack.c.l.b16 %v4340
        %v4697 = vunpack.c.h.b16 %v4340
        %v4698 = vunpack.c.l.b16 %v4341
        %v4699 = vunpack.c.h.b16 %v4341
        %v4700 = vunpack.c.l.b16 %v4342
        %v4701 = vunpack.c.h.b16 %v4342
        %v4702 = vunpack.c.l.b16 %v4343
        %v4703 = vunpack.c.h.b16 %v4343
        %v4704 = vunpack.c.l.b16 %v4344
        %v4705 = vunpack.c.h.b16 %v4344
        %v4706 = vunpack.c.l.b16 %v4345
        %v4707 = vunpack.c.h.b16 %v4345
        %v4708 = vunpack.c.l.b16 %v4346
        %v4709 = vunpack.c.h.b16 %v4346
        %v4710 = vunpack.c.l.b16 %v4347
        %v4711 = vunpack.c.h.b16 %v4347
        %v4712 = vunpack.c.l.b16 %v4348
        %v4713 = vunpack.c.h.b16 %v4348
        %v4714 = vunpack.c.l.b16 %v4349
        %v4715 = vunpack.c.h.b16 %v4349
        %v4716 = vunpack.c.l.b16 %v4350
        %v4717 = vunpack.c.h.b16 %v4350
        %v4718 = vunpack.c.l.b16 %v4351
        %v4719 = vunpack.c.h.b16 %v4351
        %v4720 = vunpack.c.l.b16 %v4352
        %v4721 = vunpack.c.h.b16 %v4352
        %v4722 = vunpack.c.l.b16 %v4353
        %v4723 = vunpack.c.h.b16 %v4353
        %v4724 = vunpack.c.l.b16 %v4354
        %v4725 = vunpack.c.h.b16 %v4354
        %v4726 = vunpack.c.l.b16 %v4355
        %v4727 = vunpack.c.h.b16 %v4355
        %v4728 = vunpack.c.l.b16 %v4356
        %v4729 = vunpack.c.h.b16 %v4356
        %v4730 = vunpack.c.l.b16 %v4357
        %v4731 = vunpack.c.h.b16 %v4357
        %v4732 = vunpack.c.l.b16 %v4358
        %v4733 = vunpack.c.h.b16 %v4358
        %v4734 = vunpack.c.l.b16 %v4359
        %v4735 = vunpack.c.h.b16 %v4359
        %v4736 = vunpack.c.l.b16 %v4360
        %v4737 = vunpack.c.h.b16 %v4360
        %v4738 = vunpack.c.l.b16 %v4361
        %v4739 = vunpack.c.h.b16 %v4361
        %v4740 = vunpack.c.l.b16 %v4362
        %v4741 = vunpack.c.h.b16 %v4362
        %v4742 = vunpack.c.l.b16 %v4363
        %v4743 = vunpack.c.h.b16 %v4363
        %v4744 = vunpack.c.l.b16 %v4364
        %v4745 = vunpack.c.h.b16 %v4364
        %v4746 = vunpack.c.l.b16 %v4365
        %v4747 = vunpack.c.h.b16 %v4365
        %v4748 = vunpack.c.l.b16 %v4366
        %v4749 = vunpack.c.h.b16 %v4366
        %v4750 = vunpack.c.l.b16 %v4367
        %v4751 = vunpack.c.h.b16 %v4367
        %v4752 = vunpack.c.l.b16 %v4368
        %v4753 = vunpack.c.h.b16 %v4368
        %v4754 = vunpack.c.l.b16 %v4369
        %v4755 = vunpack.c.h.b16 %v4369
        %v4756 = vunpack.c.l.b16 %v4370
        %v4757 = vunpack.c.h.b16 %v4370
        %v4758 = vunpack.c.l.b16 %v4371
        %v4759 = vunpack.c.h.b16 %v4371
        %v4760 = vunpack.c.l.b16 %v4372
        %v4761 = vunpack.c.h.b16 %v4372
        %v4762 = vunpack.c.l.b16 %v4373
        %v4763 = vunpack.c.h.b16 %v4373
        %v4764 = vunpack.c.l.b16 %v4374
        %v4765 = vunpack.c.h.b16 %v4374
        %v4766 = vunpack.c.l.b16 %v4375
        %v4767 = vunpack.c.h.b16 %v4375
        %v4768 = vunpack.c.l.b16 %v4376
        %v4769 = vunpack.c.h.b16 %v4376
        %v4770 = vunpack.c.l.b16 %v4377
        %v4771 = vunpack.c.h.b16 %v4377
        %v4772 = vunpack.c.l.b16 %v4378
        %v4773 = vunpack.c.h.b16 %v4378
        %v4774 = vunpack.c.l.b16 %v4379
        %v4775 = vunpack.c.h.b16 %v4379
        %v4776 = vpack.c.b16 %v4522, %v4520
        %v4777 = vpack.c.b16 %v4523, %v4521
        %v4778 = vpack.c.b16 %v4526, %v4524
        %v4779 = vpack.c.b16 %v4527, %v4525
        %v4780 = vpack.c.b16 %v4530, %v4528
        %v4781 = vpack.c.b16 %v4531, %v4529
        %v4782 = vpack.c.b16 %v4534, %v4532
        %v4783 = vpack.c.b16 %v4535, %v4533
        %v4784 = vpack.c.b16 %v4538, %v4536
        %v4785 = vpack.c.b16 %v4539, %v4537
        %v4786 = vpack.c.b16 %v4542, %v4540
        %v4787 = vpack.c.b16 %v4543, %v4541
        %v4788 = vpack.c.b16 %v4546, %v4544
        %v4789 = vpack.c.b16 %v4547, %v4545
        %v4790 = vpack.c.b16 %v4550, %v4548
        %v4791 = vpack.c.b16 %v4551, %v4549
        %v4792 = vpack.c.b16 %v4554, %v4552
        %v4793 = vpack.c.b16 %v4555, %v4553
        %v4794 = vpack.c.b16 %v4558, %v4556
        %v4795 = vpack.c.b16 %v4559, %v4557
        %v4796 = vpack.c.b16 %v4562, %v4560
        %v4797 = vpack.c.b16 %v4563, %v4561
        %v4798 = vpack.c.b16 %v4566, %v4564
        %v4799 = vpack.c.b16 %v4567, %v4565
        %v4800 = vpack.c.b16 %v4570, %v4568
        %v4801 = vpack.c.b16 %v4571, %v4569
        %v4802 = vpack.c.b16 %v4574, %v4572
        %v4803 = vpack.c.b16 %v4575, %v4573
        %v4804 = vpack.c.b16 %v4578, %v4576
        %v4805 = vpack.c.b16 %v4579, %v4577
        %v4806 = vpack.c.b16 %v4582, %v4580
        %v4807 = vpack.c.b16 %v4583, %v4581
        %v4808 = vpack.c.b16 %v4586, %v4584
        %v4809 = vpack.c.b16 %v4587, %v4585
        %v4810 = vpack.c.b16 %v4590, %v4588
        %v4811 = vpack.c.b16 %v4591, %v4589
        %v4812 = vpack.c.b16 %v4594, %v4592
        %v4813 = vpack.c.b16 %v4595, %v4593
        %v4814 = vpack.c.b16 %v4598, %v4596
        %v4815 = vpack.c.b16 %v4599, %v4597
        %v4816 = vpack.c.b16 %v4602, %v4600
        %v4817 = vpack.c.b16 %v4603, %v4601
        %v4818 = vpack.c.b16 %v4606, %v4604
        %v4819 = vpack.c.b16 %v4607, %v4605
        %v4820 = vpack.c.b16 %v4610, %v4608
        %v4821 = vpack.c.b16 %v4611, %v4609
        %v4822 = vpack.c.b16 %v4614, %v4612
        %v4823 = vpack.c.b16 %v4615, %v4613
        %v4824 = vpack.c.b16 %v4618, %v4616
        %v4825 = vpack.c.b16 %v4619, %v4617
        %v4826 = vpack.c.b16 %v4622, %v4620
        %v4827 = vpack.c.b16 %v4623, %v4621
        %v4828 = vpack.c.b16 %v4626, %v4624
        %v4829 = vpack.c.b16 %v4627, %v4625
        %v4830 = vpack.c.b16 %v4630, %v4628
        %v4831 = vpack.c.b16 %v4631, %v4629
        %v4832 = vpack.c.b16 %v4634, %v4632
        %v4833 = vpack.c.b16 %v4635, %v4633
        %v4834 = vpack.c.b16 %v4638, %v4636
        %v4835 = vpack.c.b16 %v4639, %v4637
        %v4836 = vpack.c.b16 %v4642, %v4640
        %v4837 = vpack.c.b16 %v4643, %v4641
        %v4838 = vpack.c.b16 %v4646, %v4644
        %v4839 = vpack.c.b16 %v4647, %v4645
        %v4840 = vpack.c.b16 %v4650, %v4648
        %v4841 = vpack.c.b16 %v4651, %v4649
        %v4842 = vpack.c.b16 %v4654, %v4652
        %v4843 = vpack.c.b16 %v4655, %v4653
        %v4844 = vpack.c.b16 %v4658, %v4656
        %v4845 = vpack.c.b16 %v4659, %v4657
        %v4846 = vpack.c.b16 %v4662, %v4660
        %v4847 = vpack.c.b16 %v4663, %v4661
        %v4848 = vpack.c.b16 %v4666, %v4664
        %v4849 = vpack.c.b16 %v4667, %v4665
        %v4850 = vpack.c.b16 %v4670, %v4668
        %v4851 = vpack.c.b16 %v4671, %v4669
        %v4852 = vpack.c.b16 %v4674, %v4672
        %v4853 = vpack.c.b16 %v4675, %v4673
        %v4854 = vpack.c.b16 %v4678, %v4676
        %v4855 = vpack.c.b16 %v4679, %v4677
        %v4856 = vpack.c.b16 %v4682, %v4680
        %v4857 = vpack.c.b16 %v4683, %v4681
        %v4858 = vpack.c.b16 %v4686, %v4684
        %v4859 = vpack.c.b16 %v4687, %v4685
        %v4860 = vpack.c.b16 %v4690, %v4688
        %v4861 = vpack.c.b16 %v4691, %v4689
        %v4862 = vpack.c.b16 %v4694, %v4692
        %v4863 = vpack.c.b16 %v4695, %v4693
        %v4864 = vpack.c.b16 %v4698, %v4696
        %v4865 = vpack.c.b16 %v4699, %v4697
        %v4866 = vpack.c.b16 %v4702, %v4700
        %v4867 = vpack.c.b16 %v4703, %v4701
        %v4868 = vpack.c.b16 %v4706, %v4704
        %v4869 = vpack.c.b16 %v4707, %v4705
        %v4870 = vpack.c.b16 %v4710, %v4708
        %v4871 = vpack.c.b16 %v4711, %v4709
        %v4872 = vpack.c.b16 %v4714, %v4712
        %v4873 = vpack.c.b16 %v4715, %v4713
        %v4874 = vpack.c.b16 %v4718, %v4716
        %v4875 = vpack.c.b16 %v4719, %v4717
        %v4876 = vpack.c.b16 %v4722, %v4720
        %v4877 = vpack.c.b16 %v4723, %v4721
        %v4878 = vpack.c.b16 %v4726, %v4724
        %v4879 = vpack.c.b16 %v4727, %v4725
        %v4880 = vpack.c.b16 %v4730, %v4728
        %v4881 = vpack.c.b16 %v4731, %v4729
        %v4882 = vpack.c.b16 %v4734, %v4732
        %v4883 = vpack.c.b16 %v4735, %v4733
        %v4884 = vpack.c.b16 %v4738, %v4736
        %v4885 = vpack.c.b16 %v4739, %v4737
        %v4886 = vpack.c.b16 %v4742, %v4740
        %v4887 = vpack.c.b16 %v4743, %v4741
        %v4888 = vpack.c.b16 %v4746, %v4744
        %v4889 = vpack.c.b16 %v4747, %v4745
        %v4890 = vpack.c.b16 %v4750, %v4748
        %v4891 = vpack.c.b16 %v4751, %v4749
        %v4892 = vpack.c.b16 %v4754, %v4752
        %v4893 = vpack.c.b16 %v4755, %v4753
        %v4894 = vpack.c.b16 %v4758, %v4756
        %v4895 = vpack.c.b16 %v4759, %v4757
        %v4896 = vpack.c.b16 %v4762, %v4760
        %v4897 = vpack.c.b16 %v4763, %v4761
        %v4898 = vpack.c.b16 %v4766, %v4764
        %v4899 = vpack.c.b16 %v4767, %v4765
        %v4900 = vpack.c.b16 %v4770, %v4768
        %v4901 = vpack.c.b16 %v4771, %v4769
        %v4902 = vpack.c.b16 %v4774, %v4772
        %v4903 = vpack.c.b16 %v4775, %v4773
        %5032 = vmatprep.subr.bf16.mxu0 %v4777
        %5033 = vmatpush1.bf16.msra.mxu0 %v4776
        %5034 = vmatprep.subr.bf16.mxu0 %v4779
        %5035 = vmatpush1.bf16.msra.mxu0 %v4778
        %5036 = vmatprep.subr.bf16.mxu0 %v4781
        %5037 = vmatpush1.bf16.msra.mxu0 %v4780
        %5038 = vmatprep.subr.bf16.mxu0 %v4783
        %5039 = vmatpush1.bf16.msra.mxu0 %v4782
        %5040 = vmatprep.subr.bf16.mxu0 %v4785
        %5041 = vmatpush1.bf16.msra.mxu0 %v4784
        %5042 = vmatprep.subr.bf16.mxu0 %v4787
        %5043 = vmatpush1.bf16.msra.mxu0 %v4786
        %5044 = vmatprep.subr.bf16.mxu0 %v4789
        %5045 = vmatpush1.bf16.msra.mxu0 %v4788
        %5046 = vmatprep.subr.bf16.mxu0 %v4791
        %5047 = vmatpush1.bf16.msra.mxu0 %v4790
        %5048 = vmatprep.subr.bf16.mxu0 %v4793
        %5049 = vmatpush1.bf16.msra.mxu0 %v4792
        %5050 = vmatprep.subr.bf16.mxu0 %v4795
        %5051 = vmatpush1.bf16.msra.mxu0 %v4794
        %5052 = vmatprep.subr.bf16.mxu0 %v4797
        %5053 = vmatpush1.bf16.msra.mxu0 %v4796
        %5054 = vmatprep.subr.bf16.mxu0 %v4799
        %5055 = vmatpush1.bf16.msra.mxu0 %v4798
        %5056 = vmatprep.subr.bf16.mxu0 %v4801
        %5057 = vmatpush1.bf16.msra.mxu0 %v4800
        %5058 = vmatprep.subr.bf16.mxu0 %v4803
        %5059 = vmatpush1.bf16.msra.mxu0 %v4802
        %5060 = vmatprep.subr.bf16.mxu0 %v4805
        %5061 = vmatpush1.bf16.msra.mxu0 %v4804
        %5062 = vmatprep.subr.bf16.mxu0 %v4807
        %5063 = vmatpush1.bf16.msra.mxu0 %v4806
        %5064 = vmatprep.mubr.bf16.mxu0 %v4245
        %5065 = vmatmul.mubr.bf16.gmra.mrb[0].mxu0 %v4244
        %v5066 = vpop.f32.mrb[0].mxu0
        %v5067 = vadd.f32 %v4385, %v5066
        %v5068 = vpop.f32.mrb[0].mxu0
        %v5069 = vadd.f32 %v4389, %v5068
        %v5070 = vpop.f32.mrb[0].mxu0
        %v5071 = vadd.f32 %v4385, %v5070
        %v5072 = vpop.f32.mrb[0].mxu0
        %v5073 = vadd.f32 %v4389, %v5072
        %5074 = vdwg.mxu0
        %5075 = vmatprep.subr.bf16.mxu0 %v4809
        %5076 = vmatpush1.bf16.msra.mxu0 %v4808
        %5077 = vmatprep.subr.bf16.mxu0 %v4811
        %5078 = vmatpush1.bf16.msra.mxu0 %v4810
        %5079 = vmatprep.subr.bf16.mxu0 %v4813
        %5080 = vmatpush1.bf16.msra.mxu0 %v4812
        %5081 = vmatprep.subr.bf16.mxu0 %v4815
        %5082 = vmatpush1.bf16.msra.mxu0 %v4814
        %5083 = vmatprep.subr.bf16.mxu0 %v4817
        %5084 = vmatpush1.bf16.msra.mxu0 %v4816
        %5085 = vmatprep.subr.bf16.mxu0 %v4819
        %5086 = vmatpush1.bf16.msra.mxu0 %v4818
        %5087 = vmatprep.subr.bf16.mxu0 %v4821
        %5088 = vmatpush1.bf16.msra.mxu0 %v4820
        %5089 = vmatprep.subr.bf16.mxu0 %v4823
        %5090 = vmatpush1.bf16.msra.mxu0 %v4822
        %5091 = vmatprep.subr.bf16.mxu0 %v4825
        %5092 = vmatpush1.bf16.msra.mxu0 %v4824
        %5093 = vmatprep.subr.bf16.mxu0 %v4827
        %5094 = vmatpush1.bf16.msra.mxu0 %v4826
        %5095 = vmatprep.subr.bf16.mxu0 %v4829
        %5096 = vmatpush1.bf16.msra.mxu0 %v4828
        %5097 = vmatprep.subr.bf16.mxu0 %v4831
        %5098 = vmatpush1.bf16.msra.mxu0 %v4830
        %5099 = vmatprep.subr.bf16.mxu0 %v4833
        %5100 = vmatpush1.bf16.msra.mxu0 %v4832
        %5101 = vmatprep.subr.bf16.mxu0 %v4835
        %5102 = vmatpush1.bf16.msra.mxu0 %v4834
        %5103 = vmatprep.subr.bf16.mxu0 %v4837
        %5104 = vmatpush1.bf16.msra.mxu0 %v4836
        %5105 = vmatprep.subr.bf16.mxu0 %v4839
        %5106 = vmatpush1.bf16.msra.mxu0 %v4838
        %5107 = vmatprep.mubr.bf16.mxu0 %v4247
        %5108 = vmatmul.mubr.bf16.gmra.mrb[0].mxu0 %v4246
        %v5109 = vpop.f32.mrb[0].mxu0
        %v5110 = vadd.f32 %v5067, %v5109
        %v5111 = vpop.f32.mrb[0].mxu0
        %v5112 = vadd.f32 %v5069, %v5111
        %v5113 = vpop.f32.mrb[0].mxu0
        %v5114 = vadd.f32 %v5071, %v5113
        %v5115 = vpop.f32.mrb[0].mxu0
        %v5116 = vadd.f32 %v5073, %v5115
        %5117 = vdwg.mxu0
        %5118 = vmatprep.subr.bf16.mxu0 %v4841
        %5119 = vmatpush1.bf16.msra.mxu0 %v4840
        %5120 = vmatprep.subr.bf16.mxu0 %v4843
        %5121 = vmatpush1.bf16.msra.mxu0 %v4842
        %5122 = vmatprep.subr.bf16.mxu0 %v4845
        %5123 = vmatpush1.bf16.msra.mxu0 %v4844
        %5124 = vmatprep.subr.bf16.mxu0 %v4847
        %5125 = vmatpush1.bf16.msra.mxu0 %v4846
        %5126 = vmatprep.subr.bf16.mxu0 %v4849
        %5127 = vmatpush1.bf16.msra.mxu0 %v4848
        %5128 = vmatprep.subr.bf16.mxu0 %v4851
        %5129 = vmatpush1.bf16.msra.mxu0 %v4850
        %5130 = vmatprep.subr.bf16.mxu0 %v4853
        %5131 = vmatpush1.bf16.msra.mxu0 %v4852
        %5132 = vmatprep.subr.bf16.mxu0 %v4855
        %5133 = vmatpush1.bf16.msra.mxu0 %v4854
        %5134 = vmatprep.subr.bf16.mxu0 %v4857
        %5135 = vmatpush1.bf16.msra.mxu0 %v4856
        %5136 = vmatprep.subr.bf16.mxu0 %v4859
        %5137 = vmatpush1.bf16.msra.mxu0 %v4858
        %5138 = vmatprep.subr.bf16.mxu0 %v4861
        %5139 = vmatpush1.bf16.msra.mxu0 %v4860
        %5140 = vmatprep.subr.bf16.mxu0 %v4863
        %5141 = vmatpush1.bf16.msra.mxu0 %v4862
        %5142 = vmatprep.subr.bf16.mxu0 %v4865
        %5143 = vmatpush1.bf16.msra.mxu0 %v4864
        %5144 = vmatprep.subr.bf16.mxu0 %v4867
        %5145 = vmatpush1.bf16.msra.mxu0 %v4866
        %5146 = vmatprep.subr.bf16.mxu0 %v4869
        %5147 = vmatpush1.bf16.msra.mxu0 %v4868
        %5148 = vmatprep.subr.bf16.mxu0 %v4871
        %5149 = vmatpush1.bf16.msra.mxu0 %v4870
        %5150 = vmatprep.mubr.bf16.mxu0 %v4249
        %5151 = vmatmul.mubr.bf16.gmra.mrb[0].mxu0 %v4248
        %v5152 = vpop.f32.mrb[0].mxu0
        %v5153 = vadd.f32 %v5110, %v5152
        %v5154 = vpop.f32.mrb[0].mxu0
        %v5155 = vadd.f32 %v5112, %v5154
        %v5156 = vpop.f32.mrb[0].mxu0
        %v5157 = vadd.f32 %v5114, %v5156
        %v5158 = vpop.f32.mrb[0].mxu0
        %v5159 = vadd.f32 %v5116, %v5158
        %5160 = vdwg.mxu0
        %5161 = vmatprep.subr.bf16.mxu0 %v4873
        %5162 = vmatpush1.bf16.msra.mxu0 %v4872
        %5163 = vmatprep.subr.bf16.mxu0 %v4875
        %5164 = vmatpush1.bf16.msra.mxu0 %v4874
        %5165 = vmatprep.subr.bf16.mxu0 %v4877
        %5166 = vmatpush1.bf16.msra.mxu0 %v4876
        %5167 = vmatprep.subr.bf16.mxu0 %v4879
        %5168 = vmatpush1.bf16.msra.mxu0 %v4878
        %5169 = vmatprep.subr.bf16.mxu0 %v4881
        %5170 = vmatpush1.bf16.msra.mxu0 %v4880
        %5171 = vmatprep.subr.bf16.mxu0 %v4883
        %5172 = vmatpush1.bf16.msra.mxu0 %v4882
        %5173 = vmatprep.subr.bf16.mxu0 %v4885
        %5174 = vmatpush1.bf16.msra.mxu0 %v4884
        %5175 = vmatprep.subr.bf16.mxu0 %v4887
        %5176 = vmatpush1.bf16.msra.mxu0 %v4886
        %5177 = vmatprep.subr.bf16.mxu0 %v4889
        %5178 = vmatpush1.bf16.msra.mxu0 %v4888
        %5179 = vmatprep.subr.bf16.mxu0 %v4891
        %5180 = vmatpush1.bf16.msra.mxu0 %v4890
        %5181 = vmatprep.subr.bf16.mxu0 %v4893
        %5182 = vmatpush1.bf16.msra.mxu0 %v4892
        %5183 = vmatprep.subr.bf16.mxu0 %v4895
        %5184 = vmatpush1.bf16.msra.mxu0 %v4894
        %5185 = vmatprep.subr.bf16.mxu0 %v4897
        %5186 = vmatpush1.bf16.msra.mxu0 %v4896
        %5187 = vmatprep.subr.bf16.mxu0 %v4899
        %5188 = vmatpush1.bf16.msra.mxu0 %v4898
        %5189 = vmatprep.subr.bf16.mxu0 %v4901
        %5190 = vmatpush1.bf16.msra.mxu0 %v4900
        %5191 = vmatprep.subr.bf16.mxu0 %v4903
        %5192 = vmatpush1.bf16.msra.mxu0 %v4902
        %5193 = vmatprep.mubr.bf16.mxu0 %v4251
        %5194 = vmatmul.mubr.bf16.gmra.mrb[0].mxu0 %v4250
        %v5195 = vpop.f32.mrb[0].mxu0
        %v5196 = vadd.f32 %v5153, %v5195
        %v5197 = vpop.f32.mrb[0].mxu0
        %v5198 = vadd.f32 %v5155, %v5197
        %v5199 = vpop.f32.mrb[0].mxu0
        %v5200 = vadd.f32 %v5157, %v5199
        %v5201 = vpop.f32.mrb[0].mxu0
        %v5202 = vadd.f32 %v5159, %v5201
        %5203 = vdwg.mxu0
        %v5204 = vadd.f32 %v5196, %v3034
        %v5205 = vadd.f32 %v5198, %v3035
        %v5206 = vadd.f32 %v5200, %v3036
        %v5207 = vadd.f32 %v5202, %v3037
        %5208 = vst [vmem:[#allocation2] sm:$0xff] %v5204
        %5209 = vst [vmem:[#allocation2 + $0x8] sm:$0xff] %v5205
        %5210 = vst [vmem:[#allocation2 + $0x10] sm:$0xff] %v5206
        %5211 = vst [vmem:[#allocation2 + $0x18] sm:$0xff] %v5207
        %p5212 = scmp.eq.s32.totalorder %s37, 1
        // Predicated region
        $region97: #{_lambda_.2} parent=79 // pred_check
          %p5213 = pneg %p5212
        $region98: #{_lambda_.2} parent=79 // pred_check_branch
          %5215 = sbr.rel (%p5213) target = $region100
        $region99: #{_lambda_.2} parent=79 // pred_region
          %v5216 = vld [vmem:[%s13] sm:$0x3]
          %v5217 = vld [vmem:[%s14] sm:$0x3]
          %v5218 = vadd.f32 %v5204, %v5205
          %5219 = vadd.xlane.f32.xlu0 %v5218
          %v5220 = vpop.xlane.xlu0 %5219
          %v5221 = vadd.f32 %v5206, %v5207
          %5222 = vadd.xlane.f32.xlu0 %v5221
          %v5223 = vpop.xlane.xlu0 %5222
          %v5224 = vmul.f32 %v5220, %v805
          %v5225 = vmul.f32 %v5223, %v805
          %v5226 = vsub.f32 %v5204, %v5224
          %v5227 = vsub.f32 %v5205, %v5224
          %v5228 = vsub.f32 %v5206, %v5225
          %v5229 = vsub.f32 %v5207, %v5225
          %v5230 = vmul.f32 %v5226, %v5226
          %v5231 = vmul.f32 %v5227, %v5227
          %v5232 = vmul.f32 %v5228, %v5228
          %v5233 = vmul.f32 %v5229, %v5229
          %v5234 = vadd.f32 %v5230, %v5231
          %5235 = vadd.xlane.f32.xlu0 %v5234
          %v5236 = vpop.xlane.xlu0 %5235
          %v5237 = vadd.f32 %v5232, %v5233
          %5238 = vadd.xlane.f32.xlu0 %v5237
          %v5239 = vpop.xlane.xlu0 %5238
          %v5240 = vmul.f32 %v5236, %v805
          %v5241 = vmul.f32 %v5239, %v805
          %v5242 = vadd.f32 %v5240, 1e-05
          %v5243 = vadd.f32 %v5241, 1e-05
          %v5244 = vrsqrt.pop %v5242
          %v5245 = vmul.f32 %v5242, %v5244
          %vm5246 = vcmp.eq.f32.partialorder %v5242, inf
          %v5247 = vsel %vm5246, %v5242, %v5245
          %vm5248 = vcmp.eq.f32.partialorder %v5242, 0.0
          %v5249 = vand.u32 %v5242, 2147483648
          %v5250 = vsel %vm5248, %v5249, %v5247
          %v5251 = vrsqrt.pop %v5243
          %v5252 = vmul.f32 %v5243, %v5251
          %vm5253 = vcmp.eq.f32.partialorder %v5243, inf
          %v5254 = vsel %vm5253, %v5243, %v5252
          %vm5255 = vcmp.eq.f32.partialorder %v5243, 0.0
          %v5256 = vand.u32 %v5243, 2147483648
          %v5257 = vsel %vm5255, %v5256, %v5254
          %v5258 = vrcp.pop %v5250
          %v5259 = vmul.f32 %v5226, %v5258
          %v5260 = vmul.f32 %v5227, %v5258
          %v5261 = vrcp.pop %v5257
          %v5262 = vmul.f32 %v5228, %v5261
          %v5263 = vmul.f32 %v5229, %v5261
          %v5265 = vlaneseq
          %v5266 = vshrl.u32 %v5265, 7
          %v5267 = vsub.s32 0, %v5266
          %v5268 = vrot.slane %v5216, %v5267
          %v5269 = vlaneseq
          %v5270 = vshrl.u32 %v5269, 7
          %v5271 = vsub.s32 1, %v5270
          %v5272 = vrot.slane %v5216, %v5271
          %v5275 = vmul.f32 %v5268, %v5259
          %v5276 = vmul.f32 %v5272, %v5260
          %v5277 = vmul.f32 %v5268, %v5262
          %v5278 = vmul.f32 %v5272, %v5263
          %v5280 = vlaneseq
          %v5281 = vshrl.u32 %v5280, 7
          %v5282 = vsub.s32 0, %v5281
          %v5283 = vrot.slane %v5217, %v5282
          %v5284 = vlaneseq
          %v5285 = vshrl.u32 %v5284, 7
          %v5286 = vsub.s32 1, %v5285
          %v5287 = vrot.slane %v5217, %v5286
          %v5290 = vadd.f32 %v5275, %v5283
          %v5291 = vadd.f32 %v5276, %v5287
          %v5292 = vadd.f32 %v5277, %v5283
          %v5293 = vadd.f32 %v5278, %v5287
          %v5294 = vpack.c.bf16 %v5292, %v5290
          %v5295 = vpack.c.bf16 %v5293, %v5291
          %v5298 = vunpack.c.l.b16 %v5294
          %v5299 = vunpack.c.l.b16 %v5295
          %v5300 = vunpack.c.h.b16 %v5294
          %v5301 = vunpack.c.h.b16 %v5295
          %v5302 = vpack.c.b16 %v5299, %v5298
          %v5303 = vpack.c.b16 %v5301, %v5300
          %5306 = vst [vmem:[%s779] sm:$0xff] %v5302
          %5307 = vst [vmem:[%s779 + $0x8] sm:$0xff] %v5303
        $region100: #{_lambda_.2} parent=79 // pred_fallthru
          _
        %p5308 = scmp.lt.s32.totalorder %s36, 1
        %s5309 = scalar_select %p5308, %s36, 1
        %s5310 = smul.addr %s5309, 4
        %s5311 = smul.addr %s5310, 4
        %s5312 = scalar_lea.vmem %s15, %s5311
        // Predicated region
        $region101: #{_lambda_.2} parent=79 // pred_check
          %p5313 = pneg %p442
        $region102: #{_lambda_.2} parent=79 // pred_check_branch
          %5315 = sbr.rel (%p5313) target = $region104
        $region103: #{_lambda_.2} parent=79 // pred_region
          _
        $region104: #{_lambda_.2} parent=79 // pred_fallthru
          _
      $region80: #{_lambda_.2} parent=5 // pred_fallthru
        _
      %p5316 = scmp.le.s32.totalorder 2, %s27
      // Predicated region
      $region105: #{_lambda_.2} parent=5 // pred_check
        %p5317 = pneg %p5316
      $region106: #{_lambda_.2} parent=5 // pred_check_branch
        %5319 = sbr.rel (%p5317) target = $region108
      $region107: #{_lambda_.2} parent=5 // pred_region
        %s5320 = ssub.s32 %s27, 2
        // Predicated region
        $region109: #{_lambda_.2} parent=107 // pred_check
          %p5321 = pneg %p448
        $region110: #{_lambda_.2} parent=107 // pred_check_branch
          %5323 = sbr.rel (%p5321) target = $region112
        $region111: #{_lambda_.2} parent=107 // pred_region
          %p5324 = scmp.lt.s32.totalorder %s38, 1
          %s5325 = scalar_select %p5324, %s38, 1
          %s5326 = smul.addr %s5325, 4
          %s5327 = smul.addr %s5326, 4
          %s5328 = scalar_lea.vmem %s15, %s5327
        $region112: #{_lambda_.2} parent=107 // pred_fallthru
          _
      $region108: #{_lambda_.2} parent=5 // pred_fallthru
        _
    $region6: #{_lambda_.2} parent=1 // loop_footer
      %s31 = sadd.s32 1, %s27
    $region7: #{_lambda_.2} parent=1 // loop_footer_branch
      %26 = sbr.rel target = $region3
    $region8: #{_lambda_.2} parent=1 // loop_exit
      _
    %5329 = vsyncpa [#allocation4], 1
    %s5330 = scalar_lea.sflag [#allocation4], 1
    %5331 = vsyncpa %s5330, 1
    %5332 = vsyncpa [#allocation6], 1
    %s5333 = scalar_lea.sflag [#allocation6], 1
    %5334 = vsyncpa %s5333, 1

</llo_original>
